<compile_context>
chip_gen: v7x
topology: tpu7x:2x2x1
jax: 0.10.0
libtpu: 0.0.40
codegen_flags: <defaults>
</compile_context>

<pallas_src>
import math

import jax
import jax.numpy as jnp
from jax.experimental import pallas as pl
from jax.experimental.pallas import tpu as pltpu


def linear_gelu_kernel(z_ref, w_ref, b_ref, o_ref):
    # z_ref: (B, L)  bf16 latent (resident across grid steps)
    # w_ref: (L, tn) bf16 weight column tile
    # b_ref: (1, tn) f32 bias tile
    # o_ref: (B, tn) f32 output tile
    x = jnp.dot(z_ref[...], w_ref[...], preferred_element_type=jnp.float32)
    x = x + b_ref[...]
    # exact (erf-based) GELU, matching torch.nn.GELU() default, in f32
    o_ref[...] = 0.5 * x * (1.0 + jax.lax.erf(x * (1.0 / math.sqrt(2.0))))


def decoder_forward(z, w_t_bf16, b_f32, *, num_n_tiles=1):
    """Decoder.forward (linear + GELU + reshape).

    z:        (B, latent_dim) any float dtype (cast to bf16 for streaming; tiny).
    w_t_bf16: (latent_dim, 6144) bf16, PRE-transposed + pre-cast ONCE at init.
    b_f32:    (1, 6144) f32 bias.
    num_n_tiles: 1 (default; optimal on 1-TC v5e/v6e and safe on v7x) or
                 2 (v7x: explicit CORE_PARALLEL split across the 2 TensorCores).
    """
    B, L = z.shape
    N = w_t_bf16.shape[1]
    assert N % num_n_tiles == 0
    tn = N // num_n_tiles

    z_bf16 = z.astype(jnp.bfloat16)  # 2 KiB — negligible, keep wrapper simple

    cost = pl.CostEstimate(
        flops=2 * B * L * N,
        transcendentals=B * N,
        bytes_accessed=B * L * 2 + L * N * 2 + N * 4 + B * N * 4,
    )

    if num_n_tiles == 1:
        dim_sem = ("arbitrary",)  # single step; parallel vs arbitrary is moot
    else:
        # v7x only: actually shard the N split across the 2 TensorCores.
        dim_sem = (pltpu.CORE_PARALLEL,)

    out = pl.pallas_call(
        linear_gelu_kernel,
        out_shape=jax.ShapeDtypeStruct((B, N), jnp.float32),
        grid_spec=pl.GridSpec(
            grid=(num_n_tiles,),
            in_specs=[
                pl.BlockSpec((B, L), lambda j: (0, 0)),    # latent, resident
                pl.BlockSpec((L, tn), lambda j: (0, j)),   # weight column tile
                pl.BlockSpec((1, tn), lambda j: (0, j)),   # bias tile
            ],
            out_specs=pl.BlockSpec((B, tn), lambda j: (0, j)),
        ),
        compiler_params=pltpu.CompilerParams(dimension_semantics=dim_sem),
        cost_estimate=cost,
    )(z_bf16, w_t_bf16, b_f32)

    # reshape exactly as the PyTorch forward: (B, 256, 3, 8), NCHW
    out = out.reshape(B, 256, 3, 8)
    # TODO(synk): the reference forward then executes `z = self.net; return z`,
    # returning the nn.Sequential module object itself without applying it —
    # the conv stack performs no tensor compute on z, so nothing to translate.
    return out


if __name__ == "__main__":
    # Module hyperparameters implied by the forward's hard-coded reshape:
    #   2 * 16 * c_hid == 256 * 3 * 8  ->  c_hid = 192
    c_hid = 192
    latent_dim = 128
    batch = 8
    out_features = 2 * 16 * c_hid  # 6144

    key = jax.random.PRNGKey(0)
    kz, kw, kb = jax.random.split(key, 3)

    # Deterministic PyTorch-Linear-style init: U(-1/sqrt(in), 1/sqrt(in))
    bound = 1.0 / math.sqrt(latent_dim)
    w = jax.random.uniform(kw, (out_features, latent_dim), jnp.float32, -bound, bound)
    b = jax.random.uniform(kb, (1, out_features), jnp.float32, -bound, bound)
    z = jax.random.normal(kz, (batch, latent_dim), jnp.float32)

    # One-time parameter preparation (hoisted out of the per-call path):
    w_t_bf16 = jnp.transpose(w).astype(jnp.bfloat16)   # (latent_dim, 6144) bf16
    b_f32 = b.astype(jnp.float32)                      # (1, 6144) f32
    w_t_bf16, b_f32 = jax.block_until_ready((w_t_bf16, b_f32))

    out = decoder_forward(z, w_t_bf16, b_f32)
    out = jax.block_until_ready(out)
    assert out.shape == (batch, 256, 3, 8)

    # Check against the TRUE (unrounded, f32) PyTorch-equivalent reference.
    # bf16 streaming of z/W bounds the per-element drift well under 3e-2 here.
    ref_f32 = jax.nn.gelu(z @ jnp.transpose(w) + b, approximate=False)
    ref_f32 = ref_f32.reshape(batch, 256, 3, 8)
    assert jnp.allclose(out, ref_f32, atol=3e-2, rtol=3e-2)

    # Tight check against a reference using the same bf16-rounded operands
    # (isolates kernel math from the documented bf16-streaming tradeoff).
    z_b = z.astype(jnp.bfloat16).astype(jnp.float32)
    w_b = jnp.transpose(w).astype(jnp.bfloat16).astype(jnp.float32)
    ref_b = jax.nn.gelu(z_b @ w_b + b, approximate=False).reshape(batch, 256, 3, 8)
    assert jnp.allclose(out, ref_b, atol=1e-3, rtol=1e-3)

    print("KERNEL_OK")
</pallas_src>

<mosaic_0001>
module attributes {stable_mosaic.version = 11 : i64} {
  func.func @linear_gelu_kernel(%arg0: i32, %arg1: memref<8x128xbf16, #tpu.memory_space<vmem>>, %arg2: memref<128x6144xbf16, #tpu.memory_space<vmem>>, %arg3: memref<1x6144xf32, #tpu.memory_space<vmem>>, %arg4: memref<8x6144xf32, #tpu.memory_space<vmem>>) attributes {dimension_semantics = [#tpu.dimension_semantics<arbitrary>], iteration_bounds = array<i64: 1>, scalar_prefetch = 0 : i64, scratch_operands = 0 : i64, tpu.core_type = #tpu.core_type<tc>, window_params = [{pipeline_mode = #tpu.pipeline_mode<synchronous>, transform_indices = @transform_0, window_bounds = array<i64: 8, 128>}, {transform_indices = @transform_1, window_bounds = array<i64: 128, 6144>}, {transform_indices = @transform_2, window_bounds = array<i64: 1, 6144>}, {transform_indices = @transform_3, window_bounds = array<i64: 8, 6144>}]} {
    %c0 = arith.constant 0 : index
    %c0_0 = arith.constant 0 : index
    %0 = vector.load %arg1[%c0, %c0_0] : memref<8x128xbf16, #tpu.memory_space<vmem>>, vector<8x128xbf16>
    %c0_1 = arith.constant 0 : index
    %c0_2 = arith.constant 0 : index
    %1 = vector.load %arg2[%c0_1, %c0_2] : memref<128x6144xbf16, #tpu.memory_space<vmem>>, vector<128x6144xbf16>
    %cst = arith.constant dense<0.000000e+00> : vector<8x6144xf32>
    %2 = tpu.matmul %0, %1, %cst {dimension_numbers = #tpu.dot_dimension_numbers<[1], [0], [0], [1], [0, 0, 1, 1], [], []>} : vector<8x128xbf16>, vector<128x6144xbf16>, vector<8x6144xf32> -> vector<8x6144xf32>
    %c0_3 = arith.constant 0 : index
    %c0_4 = arith.constant 0 : index
    %3 = vector.load %arg3[%c0_3, %c0_4] : memref<1x6144xf32, #tpu.memory_space<vmem>>, vector<1x6144xf32>
    %4 = vector.broadcast %3 : vector<1x6144xf32> to vector<8x6144xf32>
    %5 = arith.addf %2, %4 : vector<8x6144xf32>
    %cst_5 = arith.constant 5.000000e-01 : f32
    %6 = vector.broadcast %cst_5 : f32 to vector<8x6144xf32>
    %7 = arith.mulf %6, %5 : vector<8x6144xf32>
    %cst_6 = arith.constant 0.707106769 : f32
    %8 = vector.broadcast %cst_6 : f32 to vector<8x6144xf32>
    %9 = arith.mulf %5, %8 : vector<8x6144xf32>
    %10 = math.erf %9 : vector<8x6144xf32>
    %cst_7 = arith.constant 1.000000e+00 : f32
    %11 = vector.broadcast %cst_7 : f32 to vector<8x6144xf32>
    %12 = arith.addf %11, %10 : vector<8x6144xf32>
    %13 = arith.mulf %7, %12 : vector<8x6144xf32>
    %c0_8 = arith.constant 0 : index
    %c0_9 = arith.constant 0 : index
    %14 = vector.load %arg4[%c0_8, %c0_9] : memref<8x6144xf32, #tpu.memory_space<vmem>>, vector<8x6144xf32>
    tpu.vector_store %arg4[%c0_8, %c0_9], %13 {strides = array<i32>} : memref<8x6144xf32, #tpu.memory_space<vmem>>, vector<8x6144xf32>,
    return
  }
  func.func @transform_0(%arg0: i32) -> (i32, i32) {
    %c0_i32 = arith.constant 0 : i32
    %c0_i32_0 = arith.constant 0 : i32
    %c0_i32_1 = arith.constant 0 : i32
    return %c0_i32, %c0_i32_0 : i32, i32
  }
  func.func @transform_1(%arg0: i32) -> (i32, i32) {
    %c0_i32 = arith.constant 0 : i32
    %c0_i32_0 = arith.constant 0 : i32
    return %c0_i32, %arg0 : i32, i32
  }
  func.func @transform_2(%arg0: i32) -> (i32, i32) {
    %c0_i32 = arith.constant 0 : i32
    %c0_i32_0 = arith.constant 0 : i32
    return %c0_i32, %arg0 : i32, i32
  }
  func.func @transform_3(%arg0: i32) -> (i32, i32) {
    %c0_i32 = arith.constant 0 : i32
    %c0_i32_0 = arith.constant 0 : i32
    return %c0_i32, %arg0 : i32, i32
  }
}

</mosaic_0001>

<llo_original>
// kernel: tpu_custom_call.1
$region0: #{tpu_custom_call.1}
  #allocation0 [shape = 'u32[]', space=smem, size = 0x4, offset = 0x4, fixed_abs, tag = 'smem constant byte address 0x4 - core index']
  #allocation1 [shape = 'u32[144,128]{1,0:T(1,128)}', space=vmem, size = 0x12000, scoped, tag = 'internal scratch']
  %s0 = inlined_call_operand.hbm [shape: bf16[8,128], index: 0, kind: input, shape index: {}]
  %s1 = inlined_call_operand.hbm [shape: bf16[128,6144], index: 1, kind: input, shape index: {}]
  %s2 = inlined_call_operand.hbm [shape: f32[1,6144], index: 2, kind: input, shape index: {}]
  %s3 = inlined_call_operand.hbm [shape: f32[8,6144], index: 3, kind: output, shape index: {}]
  %s4 = sld [smem:[#allocation0]]
  $region34: #{tpu_custom_call.1} parent=0
    _
  %s6 = ssub.s32 1, %s4
  %s7 = scalar_select 0, %s6, %s4
  $region1: #{tpu_custom_call.1} parent=0
    #allocation2 [shape = 'u8[2048]{0}', space=vmem, size = 0x800, scoped, tag = 'input window, operand 0, single buffered']
    #allocation3 [shape = 's32[1]{0}', space=sflag, size = 0x4, scoped, tag = 'scoped memory for tpu_custom_call.1']
    #allocation4 [shape = 's32[1]{0}', space=sflag, size = 0x4, scoped, tag = 'scoped memory for tpu_custom_call.1']
    #allocation5 [shape = 'u8[1572864]{0}', space=vmem, size = 0x180000, scoped, tag = 'input window, operand 1, single buffered']
    #allocation6 [shape = 's32[1]{0}', space=sflag, size = 0x4, scoped, tag = 'scoped memory for tpu_custom_call.1']
    #allocation7 [shape = 'u8[24576]{0}', space=vmem, size = 0x6000, scoped, tag = 'input window, operand 2, single buffered']
    #allocation8 [shape = 'u8[196608]{0}', space=vmem, size = 0x30000, scoped, tag = 'output window, operand 0, single buffered']
    %8 = vsyncpa [#allocation3], 0
    %9 = vsyncpa [#allocation6], 0
    %10 = vsyncpa [#allocation4], 0
    // Predicated region
    $region2: #{tpu_custom_call.1} parent=1 // pred_check
      _
    $region3: #{tpu_custom_call.1} parent=1 // pred_check_branch
      %12 = sbr.rel (0) target = $region5
    $region4: #{tpu_custom_call.1} parent=1 // pred_region
      %s14 = ssub.s32 64, 64
      %15 = vsyncadd [#allocation3], %s14
      %s17 = sshll.u32 [#allocation2], 4
      %s18 = int_to_ptr.vmem [resolvable:$true] %s17
      %20 = dma.hbm_to_vmem [thread:$0]  %s0, 64, %s18, [#allocation3]
    $region5: #{tpu_custom_call.1} parent=1 // pred_fallthru
      _
    // Predicated region
    $region6: #{tpu_custom_call.1} parent=1 // pred_check
      _
    $region7: #{tpu_custom_call.1} parent=1 // pred_check_branch
      %22 = sbr.rel (0) target = $region9
    $region8: #{tpu_custom_call.1} parent=1 // pred_region
      %s24 = ssub.s32 49152, 49152
      %25 = vsyncadd [#allocation6], %s24
      %s26 = sshll.u32 [#allocation5], 4
      %s27 = int_to_ptr.vmem [resolvable:$true] %s26
      %32 = dma.hbm_to_vmem [thread:$0]  %s1, 49152, %s27, [#allocation6], 3072, 3072, 192
    $region9: #{tpu_custom_call.1} parent=1 // pred_fallthru
      _
    // Predicated region
    $region10: #{tpu_custom_call.1} parent=1 // pred_check
      _
    $region11: #{tpu_custom_call.1} parent=1 // pred_check_branch
      %34 = sbr.rel (0) target = $region13
    $region12: #{tpu_custom_call.1} parent=1 // pred_region
      %s36 = ssub.s32 768, 768
      %37 = vsyncadd [#allocation6], %s36
      %s39 = sshll.u32 [#allocation7], 4
      %s40 = int_to_ptr.vmem [resolvable:$true] %s39
      %42 = dma.hbm_to_vmem [thread:$0]  %s2, 768, %s40, [#allocation6]
    $region13: #{tpu_custom_call.1} parent=1 // pred_fallthru
      _
    // Predicated region
    $region14: #{tpu_custom_call.1} parent=1 // pred_check
      _
    $region15: #{tpu_custom_call.1} parent=1 // pred_check_branch
      %44 = sbr.rel (0) target = $region17
    $region16: #{tpu_custom_call.1} parent=1 // pred_region
      %45 = dma.done [#allocation3], 64
    $region17: #{tpu_custom_call.1} parent=1 // pred_fallthru
      _
    // Predicated region
    $region18: #{tpu_custom_call.1} parent=1 // pred_check
      _
    $region19: #{tpu_custom_call.1} parent=1 // pred_check_branch
      %47 = sbr.rel (0) target = $region21
    $region20: #{tpu_custom_call.1} parent=1 // pred_region
      %48 = dma.done [#allocation6], 49152
    $region21: #{tpu_custom_call.1} parent=1 // pred_fallthru
      _
    // Predicated region
    $region22: #{tpu_custom_call.1} parent=1 // pred_check
      _
    $region23: #{tpu_custom_call.1} parent=1 // pred_check_branch
      %50 = sbr.rel (0) target = $region25
    $region24: #{tpu_custom_call.1} parent=1 // pred_region
      %51 = dma.done [#allocation6], 768
    $region25: #{tpu_custom_call.1} parent=1 // pred_fallthru
      _
    %v53 = vld [vmem:[#allocation2] sm:$0xf]
    %v54 = vld [vmem:[#allocation5] sm:$0xff]
    %v55 = vld [vmem:[#allocation5 + $0x8] sm:$0xff]
    %v56 = vld [vmem:[#allocation5 + $0x10] sm:$0xff]
    %v57 = vld [vmem:[#allocation5 + $0x18] sm:$0xff]
    %v58 = vld [vmem:[#allocation5 + $0x20] sm:$0xff]
    %v59 = vld [vmem:[#allocation5 + $0x28] sm:$0xff]
    %v60 = vld [vmem:[#allocation5 + $0x30] sm:$0xff]
    %v61 = vld [vmem:[#allocation5 + $0x38] sm:$0xff]
    %v62 = vld [vmem:[#allocation5 + $0x40] sm:$0xff]
    %v63 = vld [vmem:[#allocation5 + $0x48] sm:$0xff]
    %v64 = vld [vmem:[#allocation5 + $0x50] sm:$0xff]
    %v65 = vld [vmem:[#allocation5 + $0x58] sm:$0xff]
    %v66 = vld [vmem:[#allocation5 + $0x60] sm:$0xff]
    %v67 = vld [vmem:[#allocation5 + $0x68] sm:$0xff]
    %v68 = vld [vmem:[#allocation5 + $0x70] sm:$0xff]
    %v69 = vld [vmem:[#allocation5 + $0x78] sm:$0xff]
    %v70 = vld [vmem:[#allocation5 + $0x80] sm:$0xff]
    %v71 = vld [vmem:[#allocation5 + $0x88] sm:$0xff]
    %v72 = vld [vmem:[#allocation5 + $0x90] sm:$0xff]
    %v73 = vld [vmem:[#allocation5 + $0x98] sm:$0xff]
    %v74 = vld [vmem:[#allocation5 + $0xa0] sm:$0xff]
    %v75 = vld [vmem:[#allocation5 + $0xa8] sm:$0xff]
    %v76 = vld [vmem:[#allocation5 + $0xb0] sm:$0xff]
    %v77 = vld [vmem:[#allocation5 + $0xb8] sm:$0xff]
    %v78 = vld [vmem:[#allocation5 + $0xc0] sm:$0xff]
    %v79 = vld [vmem:[#allocation5 + $0xc8] sm:$0xff]
    %v80 = vld [vmem:[#allocation5 + $0xd0] sm:$0xff]
    %v81 = vld [vmem:[#allocation5 + $0xd8] sm:$0xff]
    %v82 = vld [vmem:[#allocation5 + $0xe0] sm:$0xff]
    %v83 = vld [vmem:[#allocation5 + $0xe8] sm:$0xff]
    %v84 = vld [vmem:[#allocation5 + $0xf0] sm:$0xff]
    %v85 = vld [vmem:[#allocation5 + $0xf8] sm:$0xff]
    %v86 = vld [vmem:[#allocation5 + $0x100] sm:$0xff]
    %v87 = vld [vmem:[#allocation5 + $0x108] sm:$0xff]
    %v88 = vld [vmem:[#allocation5 + $0x110] sm:$0xff]
    %v89 = vld [vmem:[#allocation5 + $0x118] sm:$0xff]
    %v90 = vld [vmem:[#allocation5 + $0x120] sm:$0xff]
    %v91 = vld [vmem:[#allocation5 + $0x128] sm:$0xff]
    %v92 = vld [vmem:[#allocation5 + $0x130] sm:$0xff]
    %v93 = vld [vmem:[#allocation5 + $0x138] sm:$0xff]
    %v94 = vld [vmem:[#allocation5 + $0x140] sm:$0xff]
    %v95 = vld [vmem:[#allocation5 + $0x148] sm:$0xff]
    %v96 = vld [vmem:[#allocation5 + $0x150] sm:$0xff]
    %v97 = vld [vmem:[#allocation5 + $0x158] sm:$0xff]
    %v98 = vld [vmem:[#allocation5 + $0x160] sm:$0xff]
    %v99 = vld [vmem:[#allocation5 + $0x168] sm:$0xff]
    %v100 = vld [vmem:[#allocation5 + $0x170] sm:$0xff]
    %v101 = vld [vmem:[#allocation5 + $0x178] sm:$0xff]
    %v102 = vld [vmem:[#allocation5 + $0x180] sm:$0xff]
    %v103 = vld [vmem:[#allocation5 + $0x188] sm:$0xff]
    %v104 = vld [vmem:[#allocation5 + $0x190] sm:$0xff]
    %v105 = vld [vmem:[#allocation5 + $0x198] sm:$0xff]
    %v106 = vld [vmem:[#allocation5 + $0x1a0] sm:$0xff]
    %v107 = vld [vmem:[#allocation5 + $0x1a8] sm:$0xff]
    %v108 = vld [vmem:[#allocation5 + $0x1b0] sm:$0xff]
    %v109 = vld [vmem:[#allocation5 + $0x1b8] sm:$0xff]
    %v110 = vld [vmem:[#allocation5 + $0x1c0] sm:$0xff]
    %v111 = vld [vmem:[#allocation5 + $0x1c8] sm:$0xff]
    %v112 = vld [vmem:[#allocation5 + $0x1d0] sm:$0xff]
    %v113 = vld [vmem:[#allocation5 + $0x1d8] sm:$0xff]
    %v114 = vld [vmem:[#allocation5 + $0x1e0] sm:$0xff]
    %v115 = vld [vmem:[#allocation5 + $0x1e8] sm:$0xff]
    %v116 = vld [vmem:[#allocation5 + $0x1f0] sm:$0xff]
    %v117 = vld [vmem:[#allocation5 + $0x1f8] sm:$0xff]
    %v118 = vld [vmem:[#allocation5 + $0x200] sm:$0xff]
    %v119 = vld [vmem:[#allocation5 + $0x208] sm:$0xff]
    %v120 = vld [vmem:[#allocation5 + $0x210] sm:$0xff]
    %v121 = vld [vmem:[#allocation5 + $0x218] sm:$0xff]
    %v122 = vld [vmem:[#allocation5 + $0x220] sm:$0xff]
    %v123 = vld [vmem:[#allocation5 + $0x228] sm:$0xff]
    %v124 = vld [vmem:[#allocation5 + $0x230] sm:$0xff]
    %v125 = vld [vmem:[#allocation5 + $0x238] sm:$0xff]
    %v126 = vld [vmem:[#allocation5 + $0x240] sm:$0xff]
    %v127 = vld [vmem:[#allocation5 + $0x248] sm:$0xff]
    %v128 = vld [vmem:[#allocation5 + $0x250] sm:$0xff]
    %v129 = vld [vmem:[#allocation5 + $0x258] sm:$0xff]
    %v130 = vld [vmem:[#allocation5 + $0x260] sm:$0xff]
    %v131 = vld [vmem:[#allocation5 + $0x268] sm:$0xff]
    %v132 = vld [vmem:[#allocation5 + $0x270] sm:$0xff]
    %v133 = vld [vmem:[#allocation5 + $0x278] sm:$0xff]
    %v134 = vld [vmem:[#allocation5 + $0x280] sm:$0xff]
    %v135 = vld [vmem:[#allocation5 + $0x288] sm:$0xff]
    %v136 = vld [vmem:[#allocation5 + $0x290] sm:$0xff]
    %v137 = vld [vmem:[#allocation5 + $0x298] sm:$0xff]
    %v138 = vld [vmem:[#allocation5 + $0x2a0] sm:$0xff]
    %v139 = vld [vmem:[#allocation5 + $0x2a8] sm:$0xff]
    %v140 = vld [vmem:[#allocation5 + $0x2b0] sm:$0xff]
    %v141 = vld [vmem:[#allocation5 + $0x2b8] sm:$0xff]
    %v142 = vld [vmem:[#allocation5 + $0x2c0] sm:$0xff]
    %v143 = vld [vmem:[#allocation5 + $0x2c8] sm:$0xff]
    %v144 = vld [vmem:[#allocation5 + $0x2d0] sm:$0xff]
    %v145 = vld [vmem:[#allocation5 + $0x2d8] sm:$0xff]
    %v146 = vld [vmem:[#allocation5 + $0x2e0] sm:$0xff]
    %v147 = vld [vmem:[#allocation5 + $0x2e8] sm:$0xff]
    %v148 = vld [vmem:[#allocation5 + $0x2f0] sm:$0xff]
    %v149 = vld [vmem:[#allocation5 + $0x2f8] sm:$0xff]
    %v150 = vld [vmem:[#allocation5 + $0x300] sm:$0xff]
    %v151 = vld [vmem:[#allocation5 + $0x308] sm:$0xff]
    %v152 = vld [vmem:[#allocation5 + $0x310] sm:$0xff]
    %v153 = vld [vmem:[#allocation5 + $0x318] sm:$0xff]
    %v154 = vld [vmem:[#allocation5 + $0x320] sm:$0xff]
    %v155 = vld [vmem:[#allocation5 + $0x328] sm:$0xff]
    %v156 = vld [vmem:[#allocation5 + $0x330] sm:$0xff]
    %v157 = vld [vmem:[#allocation5 + $0x338] sm:$0xff]
    %v158 = vld [vmem:[#allocation5 + $0x340] sm:$0xff]
    %v159 = vld [vmem:[#allocation5 + $0x348] sm:$0xff]
    %v160 = vld [vmem:[#allocation5 + $0x350] sm:$0xff]
    %v161 = vld [vmem:[#allocation5 + $0x358] sm:$0xff]
    %v162 = vld [vmem:[#allocation5 + $0x360] sm:$0xff]
    %v163 = vld [vmem:[#allocation5 + $0x368] sm:$0xff]
    %v164 = vld [vmem:[#allocation5 + $0x370] sm:$0xff]
    %v165 = vld [vmem:[#allocation5 + $0x378] sm:$0xff]
    %v166 = vld [vmem:[#allocation5 + $0x380] sm:$0xff]
    %v167 = vld [vmem:[#allocation5 + $0x388] sm:$0xff]
    %v168 = vld [vmem:[#allocation5 + $0x390] sm:$0xff]
    %v169 = vld [vmem:[#allocation5 + $0x398] sm:$0xff]
    %v170 = vld [vmem:[#allocation5 + $0x3a0] sm:$0xff]
    %v171 = vld [vmem:[#allocation5 + $0x3a8] sm:$0xff]
    %v172 = vld [vmem:[#allocation5 + $0x3b0] sm:$0xff]
    %v173 = vld [vmem:[#allocation5 + $0x3b8] sm:$0xff]
    %v174 = vld [vmem:[#allocation5 + $0x3c0] sm:$0xff]
    %v175 = vld [vmem:[#allocation5 + $0x3c8] sm:$0xff]
    %v176 = vld [vmem:[#allocation5 + $0x3d0] sm:$0xff]
    %v177 = vld [vmem:[#allocation5 + $0x3d8] sm:$0xff]
    %v178 = vld [vmem:[#allocation5 + $0x3e0] sm:$0xff]
    %v179 = vld [vmem:[#allocation5 + $0x3e8] sm:$0xff]
    %v180 = vld [vmem:[#allocation5 + $0x3f0] sm:$0xff]
    %v181 = vld [vmem:[#allocation5 + $0x3f8] sm:$0xff]
    %v182 = vld [vmem:[#allocation5 + $0x400] sm:$0xff]
    %v183 = vld [vmem:[#allocation5 + $0x408] sm:$0xff]
    %v184 = vld [vmem:[#allocation5 + $0x410] sm:$0xff]
    %v185 = vld [vmem:[#allocation5 + $0x418] sm:$0xff]
    %v186 = vld [vmem:[#allocation5 + $0x420] sm:$0xff]
    %v187 = vld [vmem:[#allocation5 + $0x428] sm:$0xff]
    %v188 = vld [vmem:[#allocation5 + $0x430] sm:$0xff]
    %v189 = vld [vmem:[#allocation5 + $0x438] sm:$0xff]
    %v190 = vld [vmem:[#allocation5 + $0x440] sm:$0xff]
    %v191 = vld [vmem:[#allocation5 + $0x448] sm:$0xff]
    %v192 = vld [vmem:[#allocation5 + $0x450] sm:$0xff]
    %v193 = vld [vmem:[#allocation5 + $0x458] sm:$0xff]
    %v194 = vld [vmem:[#allocation5 + $0x460] sm:$0xff]
    %v195 = vld [vmem:[#allocation5 + $0x468] sm:$0xff]
    %v196 = vld [vmem:[#allocation5 + $0x470] sm:$0xff]
    %v197 = vld [vmem:[#allocation5 + $0x478] sm:$0xff]
    %v198 = vld [vmem:[#allocation5 + $0x480] sm:$0xff]
    %v199 = vld [vmem:[#allocation5 + $0x488] sm:$0xff]
    %v200 = vld [vmem:[#allocation5 + $0x490] sm:$0xff]
    %v201 = vld [vmem:[#allocation5 + $0x498] sm:$0xff]
    %v202 = vld [vmem:[#allocation5 + $0x4a0] sm:$0xff]
    %v203 = vld [vmem:[#allocation5 + $0x4a8] sm:$0xff]
    %v204 = vld [vmem:[#allocation5 + $0x4b0] sm:$0xff]
    %v205 = vld [vmem:[#allocation5 + $0x4b8] sm:$0xff]
    %v206 = vld [vmem:[#allocation5 + $0x4c0] sm:$0xff]
    %v207 = vld [vmem:[#allocation5 + $0x4c8] sm:$0xff]
    %v208 = vld [vmem:[#allocation5 + $0x4d0] sm:$0xff]
    %v209 = vld [vmem:[#allocation5 + $0x4d8] sm:$0xff]
    %v210 = vld [vmem:[#allocation5 + $0x4e0] sm:$0xff]
    %v211 = vld [vmem:[#allocation5 + $0x4e8] sm:$0xff]
    %v212 = vld [vmem:[#allocation5 + $0x4f0] sm:$0xff]
    %v213 = vld [vmem:[#allocation5 + $0x4f8] sm:$0xff]
    %v214 = vld [vmem:[#allocation5 + $0x500] sm:$0xff]
    %v215 = vld [vmem:[#allocation5 + $0x508] sm:$0xff]
    %v216 = vld [vmem:[#allocation5 + $0x510] sm:$0xff]
    %v217 = vld [vmem:[#allocation5 + $0x518] sm:$0xff]
    %v218 = vld [vmem:[#allocation5 + $0x520] sm:$0xff]
    %v219 = vld [vmem:[#allocation5 + $0x528] sm:$0xff]
    %v220 = vld [vmem:[#allocation5 + $0x530] sm:$0xff]
    %v221 = vld [vmem:[#allocation5 + $0x538] sm:$0xff]
    %v222 = vld [vmem:[#allocation5 + $0x540] sm:$0xff]
    %v223 = vld [vmem:[#allocation5 + $0x548] sm:$0xff]
    %v224 = vld [vmem:[#allocation5 + $0x550] sm:$0xff]
    %v225 = vld [vmem:[#allocation5 + $0x558] sm:$0xff]
    %v226 = vld [vmem:[#allocation5 + $0x560] sm:$0xff]
    %v227 = vld [vmem:[#allocation5 + $0x568] sm:$0xff]
    %v228 = vld [vmem:[#allocation5 + $0x570] sm:$0xff]
    %v229 = vld [vmem:[#allocation5 + $0x578] sm:$0xff]
    %v230 = vld [vmem:[#allocation5 + $0x580] sm:$0xff]
    %v231 = vld [vmem:[#allocation5 + $0x588] sm:$0xff]
    %v232 = vld [vmem:[#allocation5 + $0x590] sm:$0xff]
    %v233 = vld [vmem:[#allocation5 + $0x598] sm:$0xff]
    %v234 = vld [vmem:[#allocation5 + $0x5a0] sm:$0xff]
    %v235 = vld [vmem:[#allocation5 + $0x5a8] sm:$0xff]
    %v236 = vld [vmem:[#allocation5 + $0x5b0] sm:$0xff]
    %v237 = vld [vmem:[#allocation5 + $0x5b8] sm:$0xff]
    %v238 = vld [vmem:[#allocation5 + $0x5c0] sm:$0xff]
    %v239 = vld [vmem:[#allocation5 + $0x5c8] sm:$0xff]
    %v240 = vld [vmem:[#allocation5 + $0x5d0] sm:$0xff]
    %v241 = vld [vmem:[#allocation5 + $0x5d8] sm:$0xff]
    %v242 = vld [vmem:[#allocation5 + $0x5e0] sm:$0xff]
    %v243 = vld [vmem:[#allocation5 + $0x5e8] sm:$0xff]
    %v244 = vld [vmem:[#allocation5 + $0x5f0] sm:$0xff]
    %v245 = vld [vmem:[#allocation5 + $0x5f8] sm:$0xff]
    %v246 = vld [vmem:[#allocation5 + $0x600] sm:$0xff]
    %v247 = vld [vmem:[#allocation5 + $0x608] sm:$0xff]
    %v248 = vld [vmem:[#allocation5 + $0x610] sm:$0xff]
    %v249 = vld [vmem:[#allocation5 + $0x618] sm:$0xff]
    %v250 = vld [vmem:[#allocation5 + $0x620] sm:$0xff]
    %v251 = vld [vmem:[#allocation5 + $0x628] sm:$0xff]
    %v252 = vld [vmem:[#allocation5 + $0x630] sm:$0xff]
    %v253 = vld [vmem:[#allocation5 + $0x638] sm:$0xff]
    %v254 = vld [vmem:[#allocation5 + $0x640] sm:$0xff]
    %v255 = vld [vmem:[#allocation5 + $0x648] sm:$0xff]
    %v256 = vld [vmem:[#allocation5 + $0x650] sm:$0xff]
    %v257 = vld [vmem:[#allocation5 + $0x658] sm:$0xff]
    %v258 = vld [vmem:[#allocation5 + $0x660] sm:$0xff]
    %v259 = vld [vmem:[#allocation5 + $0x668] sm:$0xff]
    %v260 = vld [vmem:[#allocation5 + $0x670] sm:$0xff]
    %v261 = vld [vmem:[#allocation5 + $0x678] sm:$0xff]
    %v262 = vld [vmem:[#allocation5 + $0x680] sm:$0xff]
    %v263 = vld [vmem:[#allocation5 + $0x688] sm:$0xff]
    %v264 = vld [vmem:[#allocation5 + $0x690] sm:$0xff]
    %v265 = vld [vmem:[#allocation5 + $0x698] sm:$0xff]
    %v266 = vld [vmem:[#allocation5 + $0x6a0] sm:$0xff]
    %v267 = vld [vmem:[#allocation5 + $0x6a8] sm:$0xff]
    %v268 = vld [vmem:[#allocation5 + $0x6b0] sm:$0xff]
    %v269 = vld [vmem:[#allocation5 + $0x6b8] sm:$0xff]
    %v270 = vld [vmem:[#allocation5 + $0x6c0] sm:$0xff]
    %v271 = vld [vmem:[#allocation5 + $0x6c8] sm:$0xff]
    %v272 = vld [vmem:[#allocation5 + $0x6d0] sm:$0xff]
    %v273 = vld [vmem:[#allocation5 + $0x6d8] sm:$0xff]
    %v274 = vld [vmem:[#allocation5 + $0x6e0] sm:$0xff]
    %v275 = vld [vmem:[#allocation5 + $0x6e8] sm:$0xff]
    %v276 = vld [vmem:[#allocation5 + $0x6f0] sm:$0xff]
    %v277 = vld [vmem:[#allocation5 + $0x6f8] sm:$0xff]
    %v278 = vld [vmem:[#allocation5 + $0x700] sm:$0xff]
    %v279 = vld [vmem:[#allocation5 + $0x708] sm:$0xff]
    %v280 = vld [vmem:[#allocation5 + $0x710] sm:$0xff]
    %v281 = vld [vmem:[#allocation5 + $0x718] sm:$0xff]
    %v282 = vld [vmem:[#allocation5 + $0x720] sm:$0xff]
    %v283 = vld [vmem:[#allocation5 + $0x728] sm:$0xff]
    %v284 = vld [vmem:[#allocation5 + $0x730] sm:$0xff]
    %v285 = vld [vmem:[#allocation5 + $0x738] sm:$0xff]
    %v286 = vld [vmem:[#allocation5 + $0x740] sm:$0xff]
    %v287 = vld [vmem:[#allocation5 + $0x748] sm:$0xff]
    %v288 = vld [vmem:[#allocation5 + $0x750] sm:$0xff]
    %v289 = vld [vmem:[#allocation5 + $0x758] sm:$0xff]
    %v290 = vld [vmem:[#allocation5 + $0x760] sm:$0xff]
    %v291 = vld [vmem:[#allocation5 + $0x768] sm:$0xff]
    %v292 = vld [vmem:[#allocation5 + $0x770] sm:$0xff]
    %v293 = vld [vmem:[#allocation5 + $0x778] sm:$0xff]
    %v294 = vld [vmem:[#allocation5 + $0x780] sm:$0xff]
    %v295 = vld [vmem:[#allocation5 + $0x788] sm:$0xff]
    %v296 = vld [vmem:[#allocation5 + $0x790] sm:$0xff]
    %v297 = vld [vmem:[#allocation5 + $0x798] sm:$0xff]
    %v298 = vld [vmem:[#allocation5 + $0x7a0] sm:$0xff]
    %v299 = vld [vmem:[#allocation5 + $0x7a8] sm:$0xff]
    %v300 = vld [vmem:[#allocation5 + $0x7b0] sm:$0xff]
    %v301 = vld [vmem:[#allocation5 + $0x7b8] sm:$0xff]
    %v302 = vld [vmem:[#allocation5 + $0x7c0] sm:$0xff]
    %v303 = vld [vmem:[#allocation5 + $0x7c8] sm:$0xff]
    %v304 = vld [vmem:[#allocation5 + $0x7d0] sm:$0xff]
    %v305 = vld [vmem:[#allocation5 + $0x7d8] sm:$0xff]
    %v306 = vld [vmem:[#allocation5 + $0x7e0] sm:$0xff]
    %v307 = vld [vmem:[#allocation5 + $0x7e8] sm:$0xff]
    %v308 = vld [vmem:[#allocation5 + $0x7f0] sm:$0xff]
    %v309 = vld [vmem:[#allocation5 + $0x7f8] sm:$0xff]
    %v310 = vld [vmem:[#allocation5 + $0x800] sm:$0xff]
    %v311 = vld [vmem:[#allocation5 + $0x808] sm:$0xff]
    %v312 = vld [vmem:[#allocation5 + $0x810] sm:$0xff]
    %v313 = vld [vmem:[#allocation5 + $0x818] sm:$0xff]
    %v314 = vld [vmem:[#allocation5 + $0x820] sm:$0xff]
    %v315 = vld [vmem:[#allocation5 + $0x828] sm:$0xff]
    %v316 = vld [vmem:[#allocation5 + $0x830] sm:$0xff]
    %v317 = vld [vmem:[#allocation5 + $0x838] sm:$0xff]
    %v318 = vld [vmem:[#allocation5 + $0x840] sm:$0xff]
    %v319 = vld [vmem:[#allocation5 + $0x848] sm:$0xff]
    %v320 = vld [vmem:[#allocation5 + $0x850] sm:$0xff]
    %v321 = vld [vmem:[#allocation5 + $0x858] sm:$0xff]
    %v322 = vld [vmem:[#allocation5 + $0x860] sm:$0xff]
    %v323 = vld [vmem:[#allocation5 + $0x868] sm:$0xff]
    %v324 = vld [vmem:[#allocation5 + $0x870] sm:$0xff]
    %v325 = vld [vmem:[#allocation5 + $0x878] sm:$0xff]
    %v326 = vld [vmem:[#allocation5 + $0x880] sm:$0xff]
    %v327 = vld [vmem:[#allocation5 + $0x888] sm:$0xff]
    %v328 = vld [vmem:[#allocation5 + $0x890] sm:$0xff]
    %v329 = vld [vmem:[#allocation5 + $0x898] sm:$0xff]
    %v330 = vld [vmem:[#allocation5 + $0x8a0] sm:$0xff]
    %v331 = vld [vmem:[#allocation5 + $0x8a8] sm:$0xff]
    %v332 = vld [vmem:[#allocation5 + $0x8b0] sm:$0xff]
    %v333 = vld [vmem:[#allocation5 + $0x8b8] sm:$0xff]
    %v334 = vld [vmem:[#allocation5 + $0x8c0] sm:$0xff]
    %v335 = vld [vmem:[#allocation5 + $0x8c8] sm:$0xff]
    %v336 = vld [vmem:[#allocation5 + $0x8d0] sm:$0xff]
    %v337 = vld [vmem:[#allocation5 + $0x8d8] sm:$0xff]
    %v338 = vld [vmem:[#allocation5 + $0x8e0] sm:$0xff]
    %v339 = vld [vmem:[#allocation5 + $0x8e8] sm:$0xff]
    %v340 = vld [vmem:[#allocation5 + $0x8f0] sm:$0xff]
    %v341 = vld [vmem:[#allocation5 + $0x8f8] sm:$0xff]
    %v342 = vld [vmem:[#allocation5 + $0x900] sm:$0xff]
    %v343 = vld [vmem:[#allocation5 + $0x908] sm:$0xff]
    %v344 = vld [vmem:[#allocation5 + $0x910] sm:$0xff]
    %v345 = vld [vmem:[#allocation5 + $0x918] sm:$0xff]
    %v346 = vld [vmem:[#allocation5 + $0x920] sm:$0xff]
    %v347 = vld [vmem:[#allocation5 + $0x928] sm:$0xff]
    %v348 = vld [vmem:[#allocation5 + $0x930] sm:$0xff]
    %v349 = vld [vmem:[#allocation5 + $0x938] sm:$0xff]
    %v350 = vld [vmem:[#allocation5 + $0x940] sm:$0xff]
    %v351 = vld [vmem:[#allocation5 + $0x948] sm:$0xff]
    %v352 = vld [vmem:[#allocation5 + $0x950] sm:$0xff]
    %v353 = vld [vmem:[#allocation5 + $0x958] sm:$0xff]
    %v354 = vld [vmem:[#allocation5 + $0x960] sm:$0xff]
    %v355 = vld [vmem:[#allocation5 + $0x968] sm:$0xff]
    %v356 = vld [vmem:[#allocation5 + $0x970] sm:$0xff]
    %v357 = vld [vmem:[#allocation5 + $0x978] sm:$0xff]
    %v358 = vld [vmem:[#allocation5 + $0x980] sm:$0xff]
    %v359 = vld [vmem:[#allocation5 + $0x988] sm:$0xff]
    %v360 = vld [vmem:[#allocation5 + $0x990] sm:$0xff]
    %v361 = vld [vmem:[#allocation5 + $0x998] sm:$0xff]
    %v362 = vld [vmem:[#allocation5 + $0x9a0] sm:$0xff]
    %v363 = vld [vmem:[#allocation5 + $0x9a8] sm:$0xff]
    %v364 = vld [vmem:[#allocation5 + $0x9b0] sm:$0xff]
    %v365 = vld [vmem:[#allocation5 + $0x9b8] sm:$0xff]
    %v366 = vld [vmem:[#allocation5 + $0x9c0] sm:$0xff]
    %v367 = vld [vmem:[#allocation5 + $0x9c8] sm:$0xff]
    %v368 = vld [vmem:[#allocation5 + $0x9d0] sm:$0xff]
    %v369 = vld [vmem:[#allocation5 + $0x9d8] sm:$0xff]
    %v370 = vld [vmem:[#allocation5 + $0x9e0] sm:$0xff]
    %v371 = vld [vmem:[#allocation5 + $0x9e8] sm:$0xff]
    %v372 = vld [vmem:[#allocation5 + $0x9f0] sm:$0xff]
    %v373 = vld [vmem:[#allocation5 + $0x9f8] sm:$0xff]
    %v374 = vld [vmem:[#allocation5 + $0xa00] sm:$0xff]
    %v375 = vld [vmem:[#allocation5 + $0xa08] sm:$0xff]
    %v376 = vld [vmem:[#allocation5 + $0xa10] sm:$0xff]
    %v377 = vld [vmem:[#allocation5 + $0xa18] sm:$0xff]
    %v378 = vld [vmem:[#allocation5 + $0xa20] sm:$0xff]
    %v379 = vld [vmem:[#allocation5 + $0xa28] sm:$0xff]
    %v380 = vld [vmem:[#allocation5 + $0xa30] sm:$0xff]
    %v381 = vld [vmem:[#allocation5 + $0xa38] sm:$0xff]
    %v382 = vld [vmem:[#allocation5 + $0xa40] sm:$0xff]
    %v383 = vld [vmem:[#allocation5 + $0xa48] sm:$0xff]
    %v384 = vld [vmem:[#allocation5 + $0xa50] sm:$0xff]
    %v385 = vld [vmem:[#allocation5 + $0xa58] sm:$0xff]
    %v386 = vld [vmem:[#allocation5 + $0xa60] sm:$0xff]
    %v387 = vld [vmem:[#allocation5 + $0xa68] sm:$0xff]
    %v388 = vld [vmem:[#allocation5 + $0xa70] sm:$0xff]
    %v389 = vld [vmem:[#allocation5 + $0xa78] sm:$0xff]
    %v390 = vld [vmem:[#allocation5 + $0xa80] sm:$0xff]
    %v391 = vld [vmem:[#allocation5 + $0xa88] sm:$0xff]
    %v392 = vld [vmem:[#allocation5 + $0xa90] sm:$0xff]
    %v393 = vld [vmem:[#allocation5 + $0xa98] sm:$0xff]
    %v394 = vld [vmem:[#allocation5 + $0xaa0] sm:$0xff]
    %v395 = vld [vmem:[#allocation5 + $0xaa8] sm:$0xff]
    %v396 = vld [vmem:[#allocation5 + $0xab0] sm:$0xff]
    %v397 = vld [vmem:[#allocation5 + $0xab8] sm:$0xff]
    %v398 = vld [vmem:[#allocation5 + $0xac0] sm:$0xff]
    %v399 = vld [vmem:[#allocation5 + $0xac8] sm:$0xff]
    %v400 = vld [vmem:[#allocation5 + $0xad0] sm:$0xff]
    %v401 = vld [vmem:[#allocation5 + $0xad8] sm:$0xff]
    %v402 = vld [vmem:[#allocation5 + $0xae0] sm:$0xff]
    %v403 = vld [vmem:[#allocation5 + $0xae8] sm:$0xff]
    %v404 = vld [vmem:[#allocation5 + $0xaf0] sm:$0xff]
    %v405 = vld [vmem:[#allocation5 + $0xaf8] sm:$0xff]
    %v406 = vld [vmem:[#allocation5 + $0xb00] sm:$0xff]
    %v407 = vld [vmem:[#allocation5 + $0xb08] sm:$0xff]
    %v408 = vld [vmem:[#allocation5 + $0xb10] sm:$0xff]
    %v409 = vld [vmem:[#allocation5 + $0xb18] sm:$0xff]
    %v410 = vld [vmem:[#allocation5 + $0xb20] sm:$0xff]
    %v411 = vld [vmem:[#allocation5 + $0xb28] sm:$0xff]
    %v412 = vld [vmem:[#allocation5 + $0xb30] sm:$0xff]
    %v413 = vld [vmem:[#allocation5 + $0xb38] sm:$0xff]
    %v414 = vld [vmem:[#allocation5 + $0xb40] sm:$0xff]
    %v415 = vld [vmem:[#allocation5 + $0xb48] sm:$0xff]
    %v416 = vld [vmem:[#allocation5 + $0xb50] sm:$0xff]
    %v417 = vld [vmem:[#allocation5 + $0xb58] sm:$0xff]
    %v418 = vld [vmem:[#allocation5 + $0xb60] sm:$0xff]
    %v419 = vld [vmem:[#allocation5 + $0xb68] sm:$0xff]
    %v420 = vld [vmem:[#allocation5 + $0xb70] sm:$0xff]
    %v421 = vld [vmem:[#allocation5 + $0xb78] sm:$0xff]
    %v422 = vld [vmem:[#allocation5 + $0xb80] sm:$0xff]
    %v423 = vld [vmem:[#allocation5 + $0xb88] sm:$0xff]
    %v424 = vld [vmem:[#allocation5 + $0xb90] sm:$0xff]
    %v425 = vld [vmem:[#allocation5 + $0xb98] sm:$0xff]
    %v426 = vld [vmem:[#allocation5 + $0xba0] sm:$0xff]
    %v427 = vld [vmem:[#allocation5 + $0xba8] sm:$0xff]
    %v428 = vld [vmem:[#allocation5 + $0xbb0] sm:$0xff]
    %v429 = vld [vmem:[#allocation5 + $0xbb8] sm:$0xff]
    %v430 = vld [vmem:[#allocation5 + $0xbc0] sm:$0xff]
    %v431 = vld [vmem:[#allocation5 + $0xbc8] sm:$0xff]
    %v432 = vld [vmem:[#allocation5 + $0xbd0] sm:$0xff]
    %v433 = vld [vmem:[#allocation5 + $0xbd8] sm:$0xff]
    %v434 = vld [vmem:[#allocation5 + $0xbe0] sm:$0xff]
    %v435 = vld [vmem:[#allocation5 + $0xbe8] sm:$0xff]
    %v436 = vld [vmem:[#allocation5 + $0xbf0] sm:$0xff]
    %v437 = vld [vmem:[#allocation5 + $0xbf8] sm:$0xff]
    %v438 = vld [vmem:[#allocation7] sm:$0xff]
    %v439 = vld [vmem:[#allocation7 + $0x8] sm:$0xff]
    %v440 = vld [vmem:[#allocation7 + $0x10] sm:$0xff]
    %v441 = vld [vmem:[#allocation7 + $0x18] sm:$0xff]
    %v442 = vld [vmem:[#allocation7 + $0x20] sm:$0xff]
    %v443 = vld [vmem:[#allocation7 + $0x28] sm:$0xff]
    %v450 = vlaneseq
    %v451 = vshrl.u32 %v450, 7
    %v452 = vsub.s32 0, %v451
    %v453 = vrot.slane %v438, %v452
    %v454 = vlaneseq
    %v455 = vshrl.u32 %v454, 7
    %v456 = vsub.s32 1, %v455
    %v457 = vrot.slane %v438, %v456
    %v458 = vlaneseq
    %v459 = vshrl.u32 %v458, 7
    %v460 = vsub.s32 2, %v459
    %v461 = vrot.slane %v438, %v460
    %v462 = vlaneseq
    %v463 = vshrl.u32 %v462, 7
    %v464 = vsub.s32 3, %v463
    %v465 = vrot.slane %v438, %v464
    %v466 = vlaneseq
    %v467 = vshrl.u32 %v466, 7
    %v468 = vsub.s32 4, %v467
    %v469 = vrot.slane %v438, %v468
    %v470 = vlaneseq
    %v471 = vshrl.u32 %v470, 7
    %v472 = vsub.s32 5, %v471
    %v473 = vrot.slane %v438, %v472
    %v474 = vlaneseq
    %v475 = vshrl.u32 %v474, 7
    %v476 = vsub.s32 6, %v475
    %v477 = vrot.slane %v438, %v476
    %v478 = vlaneseq
    %v479 = vshrl.u32 %v478, 7
    %v480 = vsub.s32 7, %v479
    %v481 = vrot.slane %v438, %v480
    %v482 = vlaneseq
    %v483 = vshrl.u32 %v482, 7
    %v484 = vsub.s32 0, %v483
    %v485 = vrot.slane %v439, %v484
    %v486 = vlaneseq
    %v487 = vshrl.u32 %v486, 7
    %v488 = vsub.s32 1, %v487
    %v489 = vrot.slane %v439, %v488
    %v490 = vlaneseq
    %v491 = vshrl.u32 %v490, 7
    %v492 = vsub.s32 2, %v491
    %v493 = vrot.slane %v439, %v492
    %v494 = vlaneseq
    %v495 = vshrl.u32 %v494, 7
    %v496 = vsub.s32 3, %v495
    %v497 = vrot.slane %v439, %v496
    %v498 = vlaneseq
    %v499 = vshrl.u32 %v498, 7
    %v500 = vsub.s32 4, %v499
    %v501 = vrot.slane %v439, %v500
    %v502 = vlaneseq
    %v503 = vshrl.u32 %v502, 7
    %v504 = vsub.s32 5, %v503
    %v505 = vrot.slane %v439, %v504
    %v506 = vlaneseq
    %v507 = vshrl.u32 %v506, 7
    %v508 = vsub.s32 6, %v507
    %v509 = vrot.slane %v439, %v508
    %v510 = vlaneseq
    %v511 = vshrl.u32 %v510, 7
    %v512 = vsub.s32 7, %v511
    %v513 = vrot.slane %v439, %v512
    %v514 = vlaneseq
    %v515 = vshrl.u32 %v514, 7
    %v516 = vsub.s32 0, %v515
    %v517 = vrot.slane %v440, %v516
    %v518 = vlaneseq
    %v519 = vshrl.u32 %v518, 7
    %v520 = vsub.s32 1, %v519
    %v521 = vrot.slane %v440, %v520
    %v522 = vlaneseq
    %v523 = vshrl.u32 %v522, 7
    %v524 = vsub.s32 2, %v523
    %v525 = vrot.slane %v440, %v524
    %v526 = vlaneseq
    %v527 = vshrl.u32 %v526, 7
    %v528 = vsub.s32 3, %v527
    %v529 = vrot.slane %v440, %v528
    %v530 = vlaneseq
    %v531 = vshrl.u32 %v530, 7
    %v532 = vsub.s32 4, %v531
    %v533 = vrot.slane %v440, %v532
    %v534 = vlaneseq
    %v535 = vshrl.u32 %v534, 7
    %v536 = vsub.s32 5, %v535
    %v537 = vrot.slane %v440, %v536
    %v538 = vlaneseq
    %v539 = vshrl.u32 %v538, 7
    %v540 = vsub.s32 6, %v539
    %v541 = vrot.slane %v440, %v540
    %v542 = vlaneseq
    %v543 = vshrl.u32 %v542, 7
    %v544 = vsub.s32 7, %v543
    %v545 = vrot.slane %v440, %v544
    %v546 = vlaneseq
    %v547 = vshrl.u32 %v546, 7
    %v548 = vsub.s32 0, %v547
    %v549 = vrot.slane %v441, %v548
    %v550 = vlaneseq
    %v551 = vshrl.u32 %v550, 7
    %v552 = vsub.s32 1, %v551
    %v553 = vrot.slane %v441, %v552
    %v554 = vlaneseq
    %v555 = vshrl.u32 %v554, 7
    %v556 = vsub.s32 2, %v555
    %v557 = vrot.slane %v441, %v556
    %v558 = vlaneseq
    %v559 = vshrl.u32 %v558, 7
    %v560 = vsub.s32 3, %v559
    %v561 = vrot.slane %v441, %v560
    %v562 = vlaneseq
    %v563 = vshrl.u32 %v562, 7
    %v564 = vsub.s32 4, %v563
    %v565 = vrot.slane %v441, %v564
    %v566 = vlaneseq
    %v567 = vshrl.u32 %v566, 7
    %v568 = vsub.s32 5, %v567
    %v569 = vrot.slane %v441, %v568
    %v570 = vlaneseq
    %v571 = vshrl.u32 %v570, 7
    %v572 = vsub.s32 6, %v571
    %v573 = vrot.slane %v441, %v572
    %v574 = vlaneseq
    %v575 = vshrl.u32 %v574, 7
    %v576 = vsub.s32 7, %v575
    %v577 = vrot.slane %v441, %v576
    %v578 = vlaneseq
    %v579 = vshrl.u32 %v578, 7
    %v580 = vsub.s32 0, %v579
    %v581 = vrot.slane %v442, %v580
    %v582 = vlaneseq
    %v583 = vshrl.u32 %v582, 7
    %v584 = vsub.s32 1, %v583
    %v585 = vrot.slane %v442, %v584
    %v586 = vlaneseq
    %v587 = vshrl.u32 %v586, 7
    %v588 = vsub.s32 2, %v587
    %v589 = vrot.slane %v442, %v588
    %v590 = vlaneseq
    %v591 = vshrl.u32 %v590, 7
    %v592 = vsub.s32 3, %v591
    %v593 = vrot.slane %v442, %v592
    %v594 = vlaneseq
    %v595 = vshrl.u32 %v594, 7
    %v596 = vsub.s32 4, %v595
    %v597 = vrot.slane %v442, %v596
    %v598 = vlaneseq
    %v599 = vshrl.u32 %v598, 7
    %v600 = vsub.s32 5, %v599
    %v601 = vrot.slane %v442, %v600
    %v602 = vlaneseq
    %v603 = vshrl.u32 %v602, 7
    %v604 = vsub.s32 6, %v603
    %v605 = vrot.slane %v442, %v604
    %v606 = vlaneseq
    %v607 = vshrl.u32 %v606, 7
    %v608 = vsub.s32 7, %v607
    %v609 = vrot.slane %v442, %v608
    %v610 = vlaneseq
    %v611 = vshrl.u32 %v610, 7
    %v612 = vsub.s32 0, %v611
    %v613 = vrot.slane %v443, %v612
    %v614 = vlaneseq
    %v615 = vshrl.u32 %v614, 7
    %v616 = vsub.s32 1, %v615
    %v617 = vrot.slane %v443, %v616
    %v618 = vlaneseq
    %v619 = vshrl.u32 %v618, 7
    %v620 = vsub.s32 2, %v619
    %v621 = vrot.slane %v443, %v620
    %v622 = vlaneseq
    %v623 = vshrl.u32 %v622, 7
    %v624 = vsub.s32 3, %v623
    %v625 = vrot.slane %v443, %v624
    %v626 = vlaneseq
    %v627 = vshrl.u32 %v626, 7
    %v628 = vsub.s32 4, %v627
    %v629 = vrot.slane %v443, %v628
    %v630 = vlaneseq
    %v631 = vshrl.u32 %v630, 7
    %v632 = vsub.s32 5, %v631
    %v633 = vrot.slane %v443, %v632
    %v634 = vlaneseq
    %v635 = vshrl.u32 %v634, 7
    %v636 = vsub.s32 6, %v635
    %v637 = vrot.slane %v443, %v636
    %v638 = vlaneseq
    %v639 = vshrl.u32 %v638, 7
    %v640 = vsub.s32 7, %v639
    %v641 = vrot.slane %v443, %v640
    %v1074 = vunpack.c.l.b16 %v54
    %v1075 = vunpack.c.h.b16 %v54
    %v1076 = vunpack.c.l.b16 %v55
    %v1077 = vunpack.c.h.b16 %v55
    %v1078 = vunpack.c.l.b16 %v56
    %v1079 = vunpack.c.h.b16 %v56
    %v1080 = vunpack.c.l.b16 %v57
    %v1081 = vunpack.c.h.b16 %v57
    %v1082 = vunpack.c.l.b16 %v58
    %v1083 = vunpack.c.h.b16 %v58
    %v1084 = vunpack.c.l.b16 %v59
    %v1085 = vunpack.c.h.b16 %v59
    %v1086 = vunpack.c.l.b16 %v60
    %v1087 = vunpack.c.h.b16 %v60
    %v1088 = vunpack.c.l.b16 %v61
    %v1089 = vunpack.c.h.b16 %v61
    %v1090 = vunpack.c.l.b16 %v62
    %v1091 = vunpack.c.h.b16 %v62
    %v1092 = vunpack.c.l.b16 %v63
    %v1093 = vunpack.c.h.b16 %v63
    %v1094 = vunpack.c.l.b16 %v64
    %v1095 = vunpack.c.h.b16 %v64
    %v1096 = vunpack.c.l.b16 %v65
    %v1097 = vunpack.c.h.b16 %v65
    %v1098 = vunpack.c.l.b16 %v66
    %v1099 = vunpack.c.h.b16 %v66
    %v1100 = vunpack.c.l.b16 %v67
    %v1101 = vunpack.c.h.b16 %v67
    %v1102 = vunpack.c.l.b16 %v68
    %v1103 = vunpack.c.h.b16 %v68
    %v1104 = vunpack.c.l.b16 %v69
    %v1105 = vunpack.c.h.b16 %v69
    %v1106 = vunpack.c.l.b16 %v70
    %v1107 = vunpack.c.h.b16 %v70
    %v1108 = vunpack.c.l.b16 %v71
    %v1109 = vunpack.c.h.b16 %v71
    %v1110 = vunpack.c.l.b16 %v72
    %v1111 = vunpack.c.h.b16 %v72
    %v1112 = vunpack.c.l.b16 %v73
    %v1113 = vunpack.c.h.b16 %v73
    %v1114 = vunpack.c.l.b16 %v74
    %v1115 = vunpack.c.h.b16 %v74
    %v1116 = vunpack.c.l.b16 %v75
    %v1117 = vunpack.c.h.b16 %v75
    %v1118 = vunpack.c.l.b16 %v76
    %v1119 = vunpack.c.h.b16 %v76
    %v1120 = vunpack.c.l.b16 %v77
    %v1121 = vunpack.c.h.b16 %v77
    %v1122 = vunpack.c.l.b16 %v78
    %v1123 = vunpack.c.h.b16 %v78
    %v1124 = vunpack.c.l.b16 %v79
    %v1125 = vunpack.c.h.b16 %v79
    %v1126 = vunpack.c.l.b16 %v80
    %v1127 = vunpack.c.h.b16 %v80
    %v1128 = vunpack.c.l.b16 %v81
    %v1129 = vunpack.c.h.b16 %v81
    %v1130 = vunpack.c.l.b16 %v82
    %v1131 = vunpack.c.h.b16 %v82
    %v1132 = vunpack.c.l.b16 %v83
    %v1133 = vunpack.c.h.b16 %v83
    %v1134 = vunpack.c.l.b16 %v84
    %v1135 = vunpack.c.h.b16 %v84
    %v1136 = vunpack.c.l.b16 %v85
    %v1137 = vunpack.c.h.b16 %v85
    %v1138 = vunpack.c.l.b16 %v86
    %v1139 = vunpack.c.h.b16 %v86
    %v1140 = vunpack.c.l.b16 %v87
    %v1141 = vunpack.c.h.b16 %v87
    %v1142 = vunpack.c.l.b16 %v88
    %v1143 = vunpack.c.h.b16 %v88
    %v1144 = vunpack.c.l.b16 %v89
    %v1145 = vunpack.c.h.b16 %v89
    %v1146 = vunpack.c.l.b16 %v90
    %v1147 = vunpack.c.h.b16 %v90
    %v1148 = vunpack.c.l.b16 %v91
    %v1149 = vunpack.c.h.b16 %v91
    %v1150 = vunpack.c.l.b16 %v92
    %v1151 = vunpack.c.h.b16 %v92
    %v1152 = vunpack.c.l.b16 %v93
    %v1153 = vunpack.c.h.b16 %v93
    %v1154 = vunpack.c.l.b16 %v94
    %v1155 = vunpack.c.h.b16 %v94
    %v1156 = vunpack.c.l.b16 %v95
    %v1157 = vunpack.c.h.b16 %v95
    %v1158 = vunpack.c.l.b16 %v96
    %v1159 = vunpack.c.h.b16 %v96
    %v1160 = vunpack.c.l.b16 %v97
    %v1161 = vunpack.c.h.b16 %v97
    %v1162 = vunpack.c.l.b16 %v98
    %v1163 = vunpack.c.h.b16 %v98
    %v1164 = vunpack.c.l.b16 %v99
    %v1165 = vunpack.c.h.b16 %v99
    %v1166 = vunpack.c.l.b16 %v100
    %v1167 = vunpack.c.h.b16 %v100
    %v1168 = vunpack.c.l.b16 %v101
    %v1169 = vunpack.c.h.b16 %v101
    %v1170 = vunpack.c.l.b16 %v102
    %v1171 = vunpack.c.h.b16 %v102
    %v1172 = vunpack.c.l.b16 %v103
    %v1173 = vunpack.c.h.b16 %v103
    %v1174 = vunpack.c.l.b16 %v104
    %v1175 = vunpack.c.h.b16 %v104
    %v1176 = vunpack.c.l.b16 %v105
    %v1177 = vunpack.c.h.b16 %v105
    %v1178 = vunpack.c.l.b16 %v106
    %v1179 = vunpack.c.h.b16 %v106
    %v1180 = vunpack.c.l.b16 %v107
    %v1181 = vunpack.c.h.b16 %v107
    %v1182 = vunpack.c.l.b16 %v108
    %v1183 = vunpack.c.h.b16 %v108
    %v1184 = vunpack.c.l.b16 %v109
    %v1185 = vunpack.c.h.b16 %v109
    %v1186 = vunpack.c.l.b16 %v110
    %v1187 = vunpack.c.h.b16 %v110
    %v1188 = vunpack.c.l.b16 %v111
    %v1189 = vunpack.c.h.b16 %v111
    %v1190 = vunpack.c.l.b16 %v112
    %v1191 = vunpack.c.h.b16 %v112
    %v1192 = vunpack.c.l.b16 %v113
    %v1193 = vunpack.c.h.b16 %v113
    %v1194 = vunpack.c.l.b16 %v114
    %v1195 = vunpack.c.h.b16 %v114
    %v1196 = vunpack.c.l.b16 %v115
    %v1197 = vunpack.c.h.b16 %v115
    %v1198 = vunpack.c.l.b16 %v116
    %v1199 = vunpack.c.h.b16 %v116
    %v1200 = vunpack.c.l.b16 %v117
    %v1201 = vunpack.c.h.b16 %v117
    %v1202 = vunpack.c.l.b16 %v118
    %v1203 = vunpack.c.h.b16 %v118
    %v1204 = vunpack.c.l.b16 %v119
    %v1205 = vunpack.c.h.b16 %v119
    %v1206 = vunpack.c.l.b16 %v120
    %v1207 = vunpack.c.h.b16 %v120
    %v1208 = vunpack.c.l.b16 %v121
    %v1209 = vunpack.c.h.b16 %v121
    %v1210 = vunpack.c.l.b16 %v122
    %v1211 = vunpack.c.h.b16 %v122
    %v1212 = vunpack.c.l.b16 %v123
    %v1213 = vunpack.c.h.b16 %v123
    %v1214 = vunpack.c.l.b16 %v124
    %v1215 = vunpack.c.h.b16 %v124
    %v1216 = vunpack.c.l.b16 %v125
    %v1217 = vunpack.c.h.b16 %v125
    %v1218 = vunpack.c.l.b16 %v126
    %v1219 = vunpack.c.h.b16 %v126
    %v1220 = vunpack.c.l.b16 %v127
    %v1221 = vunpack.c.h.b16 %v127
    %v1222 = vunpack.c.l.b16 %v128
    %v1223 = vunpack.c.h.b16 %v128
    %v1224 = vunpack.c.l.b16 %v129
    %v1225 = vunpack.c.h.b16 %v129
    %v1226 = vunpack.c.l.b16 %v130
    %v1227 = vunpack.c.h.b16 %v130
    %v1228 = vunpack.c.l.b16 %v131
    %v1229 = vunpack.c.h.b16 %v131
    %v1230 = vunpack.c.l.b16 %v132
    %v1231 = vunpack.c.h.b16 %v132
    %v1232 = vunpack.c.l.b16 %v133
    %v1233 = vunpack.c.h.b16 %v133
    %v1234 = vunpack.c.l.b16 %v134
    %v1235 = vunpack.c.h.b16 %v134
    %v1236 = vunpack.c.l.b16 %v135
    %v1237 = vunpack.c.h.b16 %v135
    %v1238 = vunpack.c.l.b16 %v136
    %v1239 = vunpack.c.h.b16 %v136
    %v1240 = vunpack.c.l.b16 %v137
    %v1241 = vunpack.c.h.b16 %v137
    %v1242 = vunpack.c.l.b16 %v138
    %v1243 = vunpack.c.h.b16 %v138
    %v1244 = vunpack.c.l.b16 %v139
    %v1245 = vunpack.c.h.b16 %v139
    %v1246 = vunpack.c.l.b16 %v140
    %v1247 = vunpack.c.h.b16 %v140
    %v1248 = vunpack.c.l.b16 %v141
    %v1249 = vunpack.c.h.b16 %v141
    %v1250 = vunpack.c.l.b16 %v142
    %v1251 = vunpack.c.h.b16 %v142
    %v1252 = vunpack.c.l.b16 %v143
    %v1253 = vunpack.c.h.b16 %v143
    %v1254 = vunpack.c.l.b16 %v144
    %v1255 = vunpack.c.h.b16 %v144
    %v1256 = vunpack.c.l.b16 %v145
    %v1257 = vunpack.c.h.b16 %v145
    %v1258 = vunpack.c.l.b16 %v146
    %v1259 = vunpack.c.h.b16 %v146
    %v1260 = vunpack.c.l.b16 %v147
    %v1261 = vunpack.c.h.b16 %v147
    %v1262 = vunpack.c.l.b16 %v148
    %v1263 = vunpack.c.h.b16 %v148
    %v1264 = vunpack.c.l.b16 %v149
    %v1265 = vunpack.c.h.b16 %v149
    %v1266 = vunpack.c.l.b16 %v150
    %v1267 = vunpack.c.h.b16 %v150
    %v1268 = vunpack.c.l.b16 %v151
    %v1269 = vunpack.c.h.b16 %v151
    %v1270 = vunpack.c.l.b16 %v152
    %v1271 = vunpack.c.h.b16 %v152
    %v1272 = vunpack.c.l.b16 %v153
    %v1273 = vunpack.c.h.b16 %v153
    %v1274 = vunpack.c.l.b16 %v154
    %v1275 = vunpack.c.h.b16 %v154
    %v1276 = vunpack.c.l.b16 %v155
    %v1277 = vunpack.c.h.b16 %v155
    %v1278 = vunpack.c.l.b16 %v156
    %v1279 = vunpack.c.h.b16 %v156
    %v1280 = vunpack.c.l.b16 %v157
    %v1281 = vunpack.c.h.b16 %v157
    %v1282 = vunpack.c.l.b16 %v158
    %v1283 = vunpack.c.h.b16 %v158
    %v1284 = vunpack.c.l.b16 %v159
    %v1285 = vunpack.c.h.b16 %v159
    %v1286 = vunpack.c.l.b16 %v160
    %v1287 = vunpack.c.h.b16 %v160
    %v1288 = vunpack.c.l.b16 %v161
    %v1289 = vunpack.c.h.b16 %v161
    %v1290 = vunpack.c.l.b16 %v162
    %v1291 = vunpack.c.h.b16 %v162
    %v1292 = vunpack.c.l.b16 %v163
    %v1293 = vunpack.c.h.b16 %v163
    %v1294 = vunpack.c.l.b16 %v164
    %v1295 = vunpack.c.h.b16 %v164
    %v1296 = vunpack.c.l.b16 %v165
    %v1297 = vunpack.c.h.b16 %v165
    %v1298 = vunpack.c.l.b16 %v166
    %v1299 = vunpack.c.h.b16 %v166
    %v1300 = vunpack.c.l.b16 %v167
    %v1301 = vunpack.c.h.b16 %v167
    %v1302 = vunpack.c.l.b16 %v168
    %v1303 = vunpack.c.h.b16 %v168
    %v1304 = vunpack.c.l.b16 %v169
    %v1305 = vunpack.c.h.b16 %v169
    %v1306 = vunpack.c.l.b16 %v170
    %v1307 = vunpack.c.h.b16 %v170
    %v1308 = vunpack.c.l.b16 %v171
    %v1309 = vunpack.c.h.b16 %v171
    %v1310 = vunpack.c.l.b16 %v172
    %v1311 = vunpack.c.h.b16 %v172
    %v1312 = vunpack.c.l.b16 %v173
    %v1313 = vunpack.c.h.b16 %v173
    %v1314 = vunpack.c.l.b16 %v174
    %v1315 = vunpack.c.h.b16 %v174
    %v1316 = vunpack.c.l.b16 %v175
    %v1317 = vunpack.c.h.b16 %v175
    %v1318 = vunpack.c.l.b16 %v176
    %v1319 = vunpack.c.h.b16 %v176
    %v1320 = vunpack.c.l.b16 %v177
    %v1321 = vunpack.c.h.b16 %v177
    %v1322 = vunpack.c.l.b16 %v178
    %v1323 = vunpack.c.h.b16 %v178
    %v1324 = vunpack.c.l.b16 %v179
    %v1325 = vunpack.c.h.b16 %v179
    %v1326 = vunpack.c.l.b16 %v180
    %v1327 = vunpack.c.h.b16 %v180
    %v1328 = vunpack.c.l.b16 %v181
    %v1329 = vunpack.c.h.b16 %v181
    %v1330 = vunpack.c.l.b16 %v182
    %v1331 = vunpack.c.h.b16 %v182
    %v1332 = vunpack.c.l.b16 %v183
    %v1333 = vunpack.c.h.b16 %v183
    %v1334 = vunpack.c.l.b16 %v184
    %v1335 = vunpack.c.h.b16 %v184
    %v1336 = vunpack.c.l.b16 %v185
    %v1337 = vunpack.c.h.b16 %v185
    %v1338 = vunpack.c.l.b16 %v186
    %v1339 = vunpack.c.h.b16 %v186
    %v1340 = vunpack.c.l.b16 %v187
    %v1341 = vunpack.c.h.b16 %v187
    %v1342 = vunpack.c.l.b16 %v188
    %v1343 = vunpack.c.h.b16 %v188
    %v1344 = vunpack.c.l.b16 %v189
    %v1345 = vunpack.c.h.b16 %v189
    %v1346 = vunpack.c.l.b16 %v190
    %v1347 = vunpack.c.h.b16 %v190
    %v1348 = vunpack.c.l.b16 %v191
    %v1349 = vunpack.c.h.b16 %v191
    %v1350 = vunpack.c.l.b16 %v192
    %v1351 = vunpack.c.h.b16 %v192
    %v1352 = vunpack.c.l.b16 %v193
    %v1353 = vunpack.c.h.b16 %v193
    %v1354 = vunpack.c.l.b16 %v194
    %v1355 = vunpack.c.h.b16 %v194
    %v1356 = vunpack.c.l.b16 %v195
    %v1357 = vunpack.c.h.b16 %v195
    %v1358 = vunpack.c.l.b16 %v196
    %v1359 = vunpack.c.h.b16 %v196
    %v1360 = vunpack.c.l.b16 %v197
    %v1361 = vunpack.c.h.b16 %v197
    %v1362 = vunpack.c.l.b16 %v198
    %v1363 = vunpack.c.h.b16 %v198
    %v1364 = vunpack.c.l.b16 %v199
    %v1365 = vunpack.c.h.b16 %v199
    %v1366 = vunpack.c.l.b16 %v200
    %v1367 = vunpack.c.h.b16 %v200
    %v1368 = vunpack.c.l.b16 %v201
    %v1369 = vunpack.c.h.b16 %v201
    %v1370 = vunpack.c.l.b16 %v202
    %v1371 = vunpack.c.h.b16 %v202
    %v1372 = vunpack.c.l.b16 %v203
    %v1373 = vunpack.c.h.b16 %v203
    %v1374 = vunpack.c.l.b16 %v204
    %v1375 = vunpack.c.h.b16 %v204
    %v1376 = vunpack.c.l.b16 %v205
    %v1377 = vunpack.c.h.b16 %v205
    %v1378 = vunpack.c.l.b16 %v206
    %v1379 = vunpack.c.h.b16 %v206
    %v1380 = vunpack.c.l.b16 %v207
    %v1381 = vunpack.c.h.b16 %v207
    %v1382 = vunpack.c.l.b16 %v208
    %v1383 = vunpack.c.h.b16 %v208
    %v1384 = vunpack.c.l.b16 %v209
    %v1385 = vunpack.c.h.b16 %v209
    %v1386 = vunpack.c.l.b16 %v210
    %v1387 = vunpack.c.h.b16 %v210
    %v1388 = vunpack.c.l.b16 %v211
    %v1389 = vunpack.c.h.b16 %v211
    %v1390 = vunpack.c.l.b16 %v212
    %v1391 = vunpack.c.h.b16 %v212
    %v1392 = vunpack.c.l.b16 %v213
    %v1393 = vunpack.c.h.b16 %v213
    %v1394 = vunpack.c.l.b16 %v214
    %v1395 = vunpack.c.h.b16 %v214
    %v1396 = vunpack.c.l.b16 %v215
    %v1397 = vunpack.c.h.b16 %v215
    %v1398 = vunpack.c.l.b16 %v216
    %v1399 = vunpack.c.h.b16 %v216
    %v1400 = vunpack.c.l.b16 %v217
    %v1401 = vunpack.c.h.b16 %v217
    %v1402 = vunpack.c.l.b16 %v218
    %v1403 = vunpack.c.h.b16 %v218
    %v1404 = vunpack.c.l.b16 %v219
    %v1405 = vunpack.c.h.b16 %v219
    %v1406 = vunpack.c.l.b16 %v220
    %v1407 = vunpack.c.h.b16 %v220
    %v1408 = vunpack.c.l.b16 %v221
    %v1409 = vunpack.c.h.b16 %v221
    %v1410 = vunpack.c.l.b16 %v222
    %v1411 = vunpack.c.h.b16 %v222
    %v1412 = vunpack.c.l.b16 %v223
    %v1413 = vunpack.c.h.b16 %v223
    %v1414 = vunpack.c.l.b16 %v224
    %v1415 = vunpack.c.h.b16 %v224
    %v1416 = vunpack.c.l.b16 %v225
    %v1417 = vunpack.c.h.b16 %v225
    %v1418 = vunpack.c.l.b16 %v226
    %v1419 = vunpack.c.h.b16 %v226
    %v1420 = vunpack.c.l.b16 %v227
    %v1421 = vunpack.c.h.b16 %v227
    %v1422 = vunpack.c.l.b16 %v228
    %v1423 = vunpack.c.h.b16 %v228
    %v1424 = vunpack.c.l.b16 %v229
    %v1425 = vunpack.c.h.b16 %v229
    %v1426 = vunpack.c.l.b16 %v230
    %v1427 = vunpack.c.h.b16 %v230
    %v1428 = vunpack.c.l.b16 %v231
    %v1429 = vunpack.c.h.b16 %v231
    %v1430 = vunpack.c.l.b16 %v232
    %v1431 = vunpack.c.h.b16 %v232
    %v1432 = vunpack.c.l.b16 %v233
    %v1433 = vunpack.c.h.b16 %v233
    %v1434 = vunpack.c.l.b16 %v234
    %v1435 = vunpack.c.h.b16 %v234
    %v1436 = vunpack.c.l.b16 %v235
    %v1437 = vunpack.c.h.b16 %v235
    %v1438 = vunpack.c.l.b16 %v236
    %v1439 = vunpack.c.h.b16 %v236
    %v1440 = vunpack.c.l.b16 %v237
    %v1441 = vunpack.c.h.b16 %v237
    %v1442 = vunpack.c.l.b16 %v238
    %v1443 = vunpack.c.h.b16 %v238
    %v1444 = vunpack.c.l.b16 %v239
    %v1445 = vunpack.c.h.b16 %v239
    %v1446 = vunpack.c.l.b16 %v240
    %v1447 = vunpack.c.h.b16 %v240
    %v1448 = vunpack.c.l.b16 %v241
    %v1449 = vunpack.c.h.b16 %v241
    %v1450 = vunpack.c.l.b16 %v242
    %v1451 = vunpack.c.h.b16 %v242
    %v1452 = vunpack.c.l.b16 %v243
    %v1453 = vunpack.c.h.b16 %v243
    %v1454 = vunpack.c.l.b16 %v244
    %v1455 = vunpack.c.h.b16 %v244
    %v1456 = vunpack.c.l.b16 %v245
    %v1457 = vunpack.c.h.b16 %v245
    %v1458 = vunpack.c.l.b16 %v246
    %v1459 = vunpack.c.h.b16 %v246
    %v1460 = vunpack.c.l.b16 %v247
    %v1461 = vunpack.c.h.b16 %v247
    %v1462 = vunpack.c.l.b16 %v248
    %v1463 = vunpack.c.h.b16 %v248
    %v1464 = vunpack.c.l.b16 %v249
    %v1465 = vunpack.c.h.b16 %v249
    %v1466 = vunpack.c.l.b16 %v250
    %v1467 = vunpack.c.h.b16 %v250
    %v1468 = vunpack.c.l.b16 %v251
    %v1469 = vunpack.c.h.b16 %v251
    %v1470 = vunpack.c.l.b16 %v252
    %v1471 = vunpack.c.h.b16 %v252
    %v1472 = vunpack.c.l.b16 %v253
    %v1473 = vunpack.c.h.b16 %v253
    %v1474 = vunpack.c.l.b16 %v254
    %v1475 = vunpack.c.h.b16 %v254
    %v1476 = vunpack.c.l.b16 %v255
    %v1477 = vunpack.c.h.b16 %v255
    %v1478 = vunpack.c.l.b16 %v256
    %v1479 = vunpack.c.h.b16 %v256
    %v1480 = vunpack.c.l.b16 %v257
    %v1481 = vunpack.c.h.b16 %v257
    %v1482 = vunpack.c.l.b16 %v258
    %v1483 = vunpack.c.h.b16 %v258
    %v1484 = vunpack.c.l.b16 %v259
    %v1485 = vunpack.c.h.b16 %v259
    %v1486 = vunpack.c.l.b16 %v260
    %v1487 = vunpack.c.h.b16 %v260
    %v1488 = vunpack.c.l.b16 %v261
    %v1489 = vunpack.c.h.b16 %v261
    %v1490 = vunpack.c.l.b16 %v262
    %v1491 = vunpack.c.h.b16 %v262
    %v1492 = vunpack.c.l.b16 %v263
    %v1493 = vunpack.c.h.b16 %v263
    %v1494 = vunpack.c.l.b16 %v264
    %v1495 = vunpack.c.h.b16 %v264
    %v1496 = vunpack.c.l.b16 %v265
    %v1497 = vunpack.c.h.b16 %v265
    %v1498 = vunpack.c.l.b16 %v266
    %v1499 = vunpack.c.h.b16 %v266
    %v1500 = vunpack.c.l.b16 %v267
    %v1501 = vunpack.c.h.b16 %v267
    %v1502 = vunpack.c.l.b16 %v268
    %v1503 = vunpack.c.h.b16 %v268
    %v1504 = vunpack.c.l.b16 %v269
    %v1505 = vunpack.c.h.b16 %v269
    %v1506 = vunpack.c.l.b16 %v270
    %v1507 = vunpack.c.h.b16 %v270
    %v1508 = vunpack.c.l.b16 %v271
    %v1509 = vunpack.c.h.b16 %v271
    %v1510 = vunpack.c.l.b16 %v272
    %v1511 = vunpack.c.h.b16 %v272
    %v1512 = vunpack.c.l.b16 %v273
    %v1513 = vunpack.c.h.b16 %v273
    %v1514 = vunpack.c.l.b16 %v274
    %v1515 = vunpack.c.h.b16 %v274
    %v1516 = vunpack.c.l.b16 %v275
    %v1517 = vunpack.c.h.b16 %v275
    %v1518 = vunpack.c.l.b16 %v276
    %v1519 = vunpack.c.h.b16 %v276
    %v1520 = vunpack.c.l.b16 %v277
    %v1521 = vunpack.c.h.b16 %v277
    %v1522 = vunpack.c.l.b16 %v278
    %v1523 = vunpack.c.h.b16 %v278
    %v1524 = vunpack.c.l.b16 %v279
    %v1525 = vunpack.c.h.b16 %v279
    %v1526 = vunpack.c.l.b16 %v280
    %v1527 = vunpack.c.h.b16 %v280
    %v1528 = vunpack.c.l.b16 %v281
    %v1529 = vunpack.c.h.b16 %v281
    %v1530 = vunpack.c.l.b16 %v282
    %v1531 = vunpack.c.h.b16 %v282
    %v1532 = vunpack.c.l.b16 %v283
    %v1533 = vunpack.c.h.b16 %v283
    %v1534 = vunpack.c.l.b16 %v284
    %v1535 = vunpack.c.h.b16 %v284
    %v1536 = vunpack.c.l.b16 %v285
    %v1537 = vunpack.c.h.b16 %v285
    %v1538 = vunpack.c.l.b16 %v286
    %v1539 = vunpack.c.h.b16 %v286
    %v1540 = vunpack.c.l.b16 %v287
    %v1541 = vunpack.c.h.b16 %v287
    %v1542 = vunpack.c.l.b16 %v288
    %v1543 = vunpack.c.h.b16 %v288
    %v1544 = vunpack.c.l.b16 %v289
    %v1545 = vunpack.c.h.b16 %v289
    %v1546 = vunpack.c.l.b16 %v290
    %v1547 = vunpack.c.h.b16 %v290
    %v1548 = vunpack.c.l.b16 %v291
    %v1549 = vunpack.c.h.b16 %v291
    %v1550 = vunpack.c.l.b16 %v292
    %v1551 = vunpack.c.h.b16 %v292
    %v1552 = vunpack.c.l.b16 %v293
    %v1553 = vunpack.c.h.b16 %v293
    %v1554 = vunpack.c.l.b16 %v294
    %v1555 = vunpack.c.h.b16 %v294
    %v1556 = vunpack.c.l.b16 %v295
    %v1557 = vunpack.c.h.b16 %v295
    %v1558 = vunpack.c.l.b16 %v296
    %v1559 = vunpack.c.h.b16 %v296
    %v1560 = vunpack.c.l.b16 %v297
    %v1561 = vunpack.c.h.b16 %v297
    %v1562 = vunpack.c.l.b16 %v298
    %v1563 = vunpack.c.h.b16 %v298
    %v1564 = vunpack.c.l.b16 %v299
    %v1565 = vunpack.c.h.b16 %v299
    %v1566 = vunpack.c.l.b16 %v300
    %v1567 = vunpack.c.h.b16 %v300
    %v1568 = vunpack.c.l.b16 %v301
    %v1569 = vunpack.c.h.b16 %v301
    %v1570 = vunpack.c.l.b16 %v302
    %v1571 = vunpack.c.h.b16 %v302
    %v1572 = vunpack.c.l.b16 %v303
    %v1573 = vunpack.c.h.b16 %v303
    %v1574 = vunpack.c.l.b16 %v304
    %v1575 = vunpack.c.h.b16 %v304
    %v1576 = vunpack.c.l.b16 %v305
    %v1577 = vunpack.c.h.b16 %v305
    %v1578 = vunpack.c.l.b16 %v306
    %v1579 = vunpack.c.h.b16 %v306
    %v1580 = vunpack.c.l.b16 %v307
    %v1581 = vunpack.c.h.b16 %v307
    %v1582 = vunpack.c.l.b16 %v308
    %v1583 = vunpack.c.h.b16 %v308
    %v1584 = vunpack.c.l.b16 %v309
    %v1585 = vunpack.c.h.b16 %v309
    %v1586 = vunpack.c.l.b16 %v310
    %v1587 = vunpack.c.h.b16 %v310
    %v1588 = vunpack.c.l.b16 %v311
    %v1589 = vunpack.c.h.b16 %v311
    %v1590 = vunpack.c.l.b16 %v312
    %v1591 = vunpack.c.h.b16 %v312
    %v1592 = vunpack.c.l.b16 %v313
    %v1593 = vunpack.c.h.b16 %v313
    %v1594 = vunpack.c.l.b16 %v314
    %v1595 = vunpack.c.h.b16 %v314
    %v1596 = vunpack.c.l.b16 %v315
    %v1597 = vunpack.c.h.b16 %v315
    %v1598 = vunpack.c.l.b16 %v316
    %v1599 = vunpack.c.h.b16 %v316
    %v1600 = vunpack.c.l.b16 %v317
    %v1601 = vunpack.c.h.b16 %v317
    %v1602 = vunpack.c.l.b16 %v318
    %v1603 = vunpack.c.h.b16 %v318
    %v1604 = vunpack.c.l.b16 %v319
    %v1605 = vunpack.c.h.b16 %v319
    %v1606 = vunpack.c.l.b16 %v320
    %v1607 = vunpack.c.h.b16 %v320
    %v1608 = vunpack.c.l.b16 %v321
    %v1609 = vunpack.c.h.b16 %v321
    %v1610 = vunpack.c.l.b16 %v322
    %v1611 = vunpack.c.h.b16 %v322
    %v1612 = vunpack.c.l.b16 %v323
    %v1613 = vunpack.c.h.b16 %v323
    %v1614 = vunpack.c.l.b16 %v324
    %v1615 = vunpack.c.h.b16 %v324
    %v1616 = vunpack.c.l.b16 %v325
    %v1617 = vunpack.c.h.b16 %v325
    %v1618 = vunpack.c.l.b16 %v326
    %v1619 = vunpack.c.h.b16 %v326
    %v1620 = vunpack.c.l.b16 %v327
    %v1621 = vunpack.c.h.b16 %v327
    %v1622 = vunpack.c.l.b16 %v328
    %v1623 = vunpack.c.h.b16 %v328
    %v1624 = vunpack.c.l.b16 %v329
    %v1625 = vunpack.c.h.b16 %v329
    %v1626 = vunpack.c.l.b16 %v330
    %v1627 = vunpack.c.h.b16 %v330
    %v1628 = vunpack.c.l.b16 %v331
    %v1629 = vunpack.c.h.b16 %v331
    %v1630 = vunpack.c.l.b16 %v332
    %v1631 = vunpack.c.h.b16 %v332
    %v1632 = vunpack.c.l.b16 %v333
    %v1633 = vunpack.c.h.b16 %v333
    %v1634 = vunpack.c.l.b16 %v334
    %v1635 = vunpack.c.h.b16 %v334
    %v1636 = vunpack.c.l.b16 %v335
    %v1637 = vunpack.c.h.b16 %v335
    %v1638 = vunpack.c.l.b16 %v336
    %v1639 = vunpack.c.h.b16 %v336
    %v1640 = vunpack.c.l.b16 %v337
    %v1641 = vunpack.c.h.b16 %v337
    %v1642 = vunpack.c.l.b16 %v338
    %v1643 = vunpack.c.h.b16 %v338
    %v1644 = vunpack.c.l.b16 %v339
    %v1645 = vunpack.c.h.b16 %v339
    %v1646 = vunpack.c.l.b16 %v340
    %v1647 = vunpack.c.h.b16 %v340
    %v1648 = vunpack.c.l.b16 %v341
    %v1649 = vunpack.c.h.b16 %v341
    %v1650 = vunpack.c.l.b16 %v342
    %v1651 = vunpack.c.h.b16 %v342
    %v1652 = vunpack.c.l.b16 %v343
    %v1653 = vunpack.c.h.b16 %v343
    %v1654 = vunpack.c.l.b16 %v344
    %v1655 = vunpack.c.h.b16 %v344
    %v1656 = vunpack.c.l.b16 %v345
    %v1657 = vunpack.c.h.b16 %v345
    %v1658 = vunpack.c.l.b16 %v346
    %v1659 = vunpack.c.h.b16 %v346
    %v1660 = vunpack.c.l.b16 %v347
    %v1661 = vunpack.c.h.b16 %v347
    %v1662 = vunpack.c.l.b16 %v348
    %v1663 = vunpack.c.h.b16 %v348
    %v1664 = vunpack.c.l.b16 %v349
    %v1665 = vunpack.c.h.b16 %v349
    %v1666 = vunpack.c.l.b16 %v350
    %v1667 = vunpack.c.h.b16 %v350
    %v1668 = vunpack.c.l.b16 %v351
    %v1669 = vunpack.c.h.b16 %v351
    %v1670 = vunpack.c.l.b16 %v352
    %v1671 = vunpack.c.h.b16 %v352
    %v1672 = vunpack.c.l.b16 %v353
    %v1673 = vunpack.c.h.b16 %v353
    %v1674 = vunpack.c.l.b16 %v354
    %v1675 = vunpack.c.h.b16 %v354
    %v1676 = vunpack.c.l.b16 %v355
    %v1677 = vunpack.c.h.b16 %v355
    %v1678 = vunpack.c.l.b16 %v356
    %v1679 = vunpack.c.h.b16 %v356
    %v1680 = vunpack.c.l.b16 %v357
    %v1681 = vunpack.c.h.b16 %v357
    %v1682 = vunpack.c.l.b16 %v358
    %v1683 = vunpack.c.h.b16 %v358
    %v1684 = vunpack.c.l.b16 %v359
    %v1685 = vunpack.c.h.b16 %v359
    %v1686 = vunpack.c.l.b16 %v360
    %v1687 = vunpack.c.h.b16 %v360
    %v1688 = vunpack.c.l.b16 %v361
    %v1689 = vunpack.c.h.b16 %v361
    %v1690 = vunpack.c.l.b16 %v362
    %v1691 = vunpack.c.h.b16 %v362
    %v1692 = vunpack.c.l.b16 %v363
    %v1693 = vunpack.c.h.b16 %v363
    %v1694 = vunpack.c.l.b16 %v364
    %v1695 = vunpack.c.h.b16 %v364
    %v1696 = vunpack.c.l.b16 %v365
    %v1697 = vunpack.c.h.b16 %v365
    %v1698 = vunpack.c.l.b16 %v366
    %v1699 = vunpack.c.h.b16 %v366
    %v1700 = vunpack.c.l.b16 %v367
    %v1701 = vunpack.c.h.b16 %v367
    %v1702 = vunpack.c.l.b16 %v368
    %v1703 = vunpack.c.h.b16 %v368
    %v1704 = vunpack.c.l.b16 %v369
    %v1705 = vunpack.c.h.b16 %v369
    %v1706 = vunpack.c.l.b16 %v370
    %v1707 = vunpack.c.h.b16 %v370
    %v1708 = vunpack.c.l.b16 %v371
    %v1709 = vunpack.c.h.b16 %v371
    %v1710 = vunpack.c.l.b16 %v372
    %v1711 = vunpack.c.h.b16 %v372
    %v1712 = vunpack.c.l.b16 %v373
    %v1713 = vunpack.c.h.b16 %v373
    %v1714 = vunpack.c.l.b16 %v374
    %v1715 = vunpack.c.h.b16 %v374
    %v1716 = vunpack.c.l.b16 %v375
    %v1717 = vunpack.c.h.b16 %v375
    %v1718 = vunpack.c.l.b16 %v376
    %v1719 = vunpack.c.h.b16 %v376
    %v1720 = vunpack.c.l.b16 %v377
    %v1721 = vunpack.c.h.b16 %v377
    %v1722 = vunpack.c.l.b16 %v378
    %v1723 = vunpack.c.h.b16 %v378
    %v1724 = vunpack.c.l.b16 %v379
    %v1725 = vunpack.c.h.b16 %v379
    %v1726 = vunpack.c.l.b16 %v380
    %v1727 = vunpack.c.h.b16 %v380
    %v1728 = vunpack.c.l.b16 %v381
    %v1729 = vunpack.c.h.b16 %v381
    %v1730 = vunpack.c.l.b16 %v382
    %v1731 = vunpack.c.h.b16 %v382
    %v1732 = vunpack.c.l.b16 %v383
    %v1733 = vunpack.c.h.b16 %v383
    %v1734 = vunpack.c.l.b16 %v384
    %v1735 = vunpack.c.h.b16 %v384
    %v1736 = vunpack.c.l.b16 %v385
    %v1737 = vunpack.c.h.b16 %v385
    %v1738 = vunpack.c.l.b16 %v386
    %v1739 = vunpack.c.h.b16 %v386
    %v1740 = vunpack.c.l.b16 %v387
    %v1741 = vunpack.c.h.b16 %v387
    %v1742 = vunpack.c.l.b16 %v388
    %v1743 = vunpack.c.h.b16 %v388
    %v1744 = vunpack.c.l.b16 %v389
    %v1745 = vunpack.c.h.b16 %v389
    %v1746 = vunpack.c.l.b16 %v390
    %v1747 = vunpack.c.h.b16 %v390
    %v1748 = vunpack.c.l.b16 %v391
    %v1749 = vunpack.c.h.b16 %v391
    %v1750 = vunpack.c.l.b16 %v392
    %v1751 = vunpack.c.h.b16 %v392
    %v1752 = vunpack.c.l.b16 %v393
    %v1753 = vunpack.c.h.b16 %v393
    %v1754 = vunpack.c.l.b16 %v394
    %v1755 = vunpack.c.h.b16 %v394
    %v1756 = vunpack.c.l.b16 %v395
    %v1757 = vunpack.c.h.b16 %v395
    %v1758 = vunpack.c.l.b16 %v396
    %v1759 = vunpack.c.h.b16 %v396
    %v1760 = vunpack.c.l.b16 %v397
    %v1761 = vunpack.c.h.b16 %v397
    %v1762 = vunpack.c.l.b16 %v398
    %v1763 = vunpack.c.h.b16 %v398
    %v1764 = vunpack.c.l.b16 %v399
    %v1765 = vunpack.c.h.b16 %v399
    %v1766 = vunpack.c.l.b16 %v400
    %v1767 = vunpack.c.h.b16 %v400
    %v1768 = vunpack.c.l.b16 %v401
    %v1769 = vunpack.c.h.b16 %v401
    %v1770 = vunpack.c.l.b16 %v402
    %v1771 = vunpack.c.h.b16 %v402
    %v1772 = vunpack.c.l.b16 %v403
    %v1773 = vunpack.c.h.b16 %v403
    %v1774 = vunpack.c.l.b16 %v404
    %v1775 = vunpack.c.h.b16 %v404
    %v1776 = vunpack.c.l.b16 %v405
    %v1777 = vunpack.c.h.b16 %v405
    %v1778 = vunpack.c.l.b16 %v406
    %v1779 = vunpack.c.h.b16 %v406
    %v1780 = vunpack.c.l.b16 %v407
    %v1781 = vunpack.c.h.b16 %v407
    %v1782 = vunpack.c.l.b16 %v408
    %v1783 = vunpack.c.h.b16 %v408
    %v1784 = vunpack.c.l.b16 %v409
    %v1785 = vunpack.c.h.b16 %v409
    %v1786 = vunpack.c.l.b16 %v410
    %v1787 = vunpack.c.h.b16 %v410
    %v1788 = vunpack.c.l.b16 %v411
    %v1789 = vunpack.c.h.b16 %v411
    %v1790 = vunpack.c.l.b16 %v412
    %v1791 = vunpack.c.h.b16 %v412
    %v1792 = vunpack.c.l.b16 %v413
    %v1793 = vunpack.c.h.b16 %v413
    %v1794 = vunpack.c.l.b16 %v414
    %v1795 = vunpack.c.h.b16 %v414
    %v1796 = vunpack.c.l.b16 %v415
    %v1797 = vunpack.c.h.b16 %v415
    %v1798 = vunpack.c.l.b16 %v416
    %v1799 = vunpack.c.h.b16 %v416
    %v1800 = vunpack.c.l.b16 %v417
    %v1801 = vunpack.c.h.b16 %v417
    %v1802 = vunpack.c.l.b16 %v418
    %v1803 = vunpack.c.h.b16 %v418
    %v1804 = vunpack.c.l.b16 %v419
    %v1805 = vunpack.c.h.b16 %v419
    %v1806 = vunpack.c.l.b16 %v420
    %v1807 = vunpack.c.h.b16 %v420
    %v1808 = vunpack.c.l.b16 %v421
    %v1809 = vunpack.c.h.b16 %v421
    %v1810 = vunpack.c.l.b16 %v422
    %v1811 = vunpack.c.h.b16 %v422
    %v1812 = vunpack.c.l.b16 %v423
    %v1813 = vunpack.c.h.b16 %v423
    %v1814 = vunpack.c.l.b16 %v424
    %v1815 = vunpack.c.h.b16 %v424
    %v1816 = vunpack.c.l.b16 %v425
    %v1817 = vunpack.c.h.b16 %v425
    %v1818 = vunpack.c.l.b16 %v426
    %v1819 = vunpack.c.h.b16 %v426
    %v1820 = vunpack.c.l.b16 %v427
    %v1821 = vunpack.c.h.b16 %v427
    %v1822 = vunpack.c.l.b16 %v428
    %v1823 = vunpack.c.h.b16 %v428
    %v1824 = vunpack.c.l.b16 %v429
    %v1825 = vunpack.c.h.b16 %v429
    %v1826 = vunpack.c.l.b16 %v430
    %v1827 = vunpack.c.h.b16 %v430
    %v1828 = vunpack.c.l.b16 %v431
    %v1829 = vunpack.c.h.b16 %v431
    %v1830 = vunpack.c.l.b16 %v432
    %v1831 = vunpack.c.h.b16 %v432
    %v1832 = vunpack.c.l.b16 %v433
    %v1833 = vunpack.c.h.b16 %v433
    %v1834 = vunpack.c.l.b16 %v434
    %v1835 = vunpack.c.h.b16 %v434
    %v1836 = vunpack.c.l.b16 %v435
    %v1837 = vunpack.c.h.b16 %v435
    %v1838 = vunpack.c.l.b16 %v436
    %v1839 = vunpack.c.h.b16 %v436
    %v1840 = vunpack.c.l.b16 %v437
    %v1841 = vunpack.c.h.b16 %v437
    %v1842 = vpack.c.b16 %v1122, %v1074
    %v1843 = vpack.c.b16 %v1123, %v1075
    %v1844 = vpack.c.b16 %v1124, %v1076
    %v1845 = vpack.c.b16 %v1125, %v1077
    %v1846 = vpack.c.b16 %v1126, %v1078
    %v1847 = vpack.c.b16 %v1127, %v1079
    %v1848 = vpack.c.b16 %v1128, %v1080
    %v1849 = vpack.c.b16 %v1129, %v1081
    %v1850 = vpack.c.b16 %v1130, %v1082
    %v1851 = vpack.c.b16 %v1131, %v1083
    %v1852 = vpack.c.b16 %v1132, %v1084
    %v1853 = vpack.c.b16 %v1133, %v1085
    %v1854 = vpack.c.b16 %v1134, %v1086
    %v1855 = vpack.c.b16 %v1135, %v1087
    %v1856 = vpack.c.b16 %v1136, %v1088
    %v1857 = vpack.c.b16 %v1137, %v1089
    %v1858 = vpack.c.b16 %v1138, %v1090
    %v1859 = vpack.c.b16 %v1139, %v1091
    %v1860 = vpack.c.b16 %v1140, %v1092
    %v1861 = vpack.c.b16 %v1141, %v1093
    %v1862 = vpack.c.b16 %v1142, %v1094
    %v1863 = vpack.c.b16 %v1143, %v1095
    %v1864 = vpack.c.b16 %v1144, %v1096
    %v1865 = vpack.c.b16 %v1145, %v1097
    %v1866 = vpack.c.b16 %v1146, %v1098
    %v1867 = vpack.c.b16 %v1147, %v1099
    %v1868 = vpack.c.b16 %v1148, %v1100
    %v1869 = vpack.c.b16 %v1149, %v1101
    %v1870 = vpack.c.b16 %v1150, %v1102
    %v1871 = vpack.c.b16 %v1151, %v1103
    %v1872 = vpack.c.b16 %v1152, %v1104
    %v1873 = vpack.c.b16 %v1153, %v1105
    %v1874 = vpack.c.b16 %v1154, %v1106
    %v1875 = vpack.c.b16 %v1155, %v1107
    %v1876 = vpack.c.b16 %v1156, %v1108
    %v1877 = vpack.c.b16 %v1157, %v1109
    %v1878 = vpack.c.b16 %v1158, %v1110
    %v1879 = vpack.c.b16 %v1159, %v1111
    %v1880 = vpack.c.b16 %v1160, %v1112
    %v1881 = vpack.c.b16 %v1161, %v1113
    %v1882 = vpack.c.b16 %v1162, %v1114
    %v1883 = vpack.c.b16 %v1163, %v1115
    %v1884 = vpack.c.b16 %v1164, %v1116
    %v1885 = vpack.c.b16 %v1165, %v1117
    %v1886 = vpack.c.b16 %v1166, %v1118
    %v1887 = vpack.c.b16 %v1167, %v1119
    %v1888 = vpack.c.b16 %v1168, %v1120
    %v1889 = vpack.c.b16 %v1169, %v1121
    %v1890 = vpack.c.b16 %v1218, %v1170
    %v1891 = vpack.c.b16 %v1219, %v1171
    %v1892 = vpack.c.b16 %v1220, %v1172
    %v1893 = vpack.c.b16 %v1221, %v1173
    %v1894 = vpack.c.b16 %v1222, %v1174
    %v1895 = vpack.c.b16 %v1223, %v1175
    %v1896 = vpack.c.b16 %v1224, %v1176
    %v1897 = vpack.c.b16 %v1225, %v1177
    %v1898 = vpack.c.b16 %v1226, %v1178
    %v1899 = vpack.c.b16 %v1227, %v1179
    %v1900 = vpack.c.b16 %v1228, %v1180
    %v1901 = vpack.c.b16 %v1229, %v1181
    %v1902 = vpack.c.b16 %v1230, %v1182
    %v1903 = vpack.c.b16 %v1231, %v1183
    %v1904 = vpack.c.b16 %v1232, %v1184
    %v1905 = vpack.c.b16 %v1233, %v1185
    %v1906 = vpack.c.b16 %v1234, %v1186
    %v1907 = vpack.c.b16 %v1235, %v1187
    %v1908 = vpack.c.b16 %v1236, %v1188
    %v1909 = vpack.c.b16 %v1237, %v1189
    %v1910 = vpack.c.b16 %v1238, %v1190
    %v1911 = vpack.c.b16 %v1239, %v1191
    %v1912 = vpack.c.b16 %v1240, %v1192
    %v1913 = vpack.c.b16 %v1241, %v1193
    %v1914 = vpack.c.b16 %v1242, %v1194
    %v1915 = vpack.c.b16 %v1243, %v1195
    %v1916 = vpack.c.b16 %v1244, %v1196
    %v1917 = vpack.c.b16 %v1245, %v1197
    %v1918 = vpack.c.b16 %v1246, %v1198
    %v1919 = vpack.c.b16 %v1247, %v1199
    %v1920 = vpack.c.b16 %v1248, %v1200
    %v1921 = vpack.c.b16 %v1249, %v1201
    %v1922 = vpack.c.b16 %v1250, %v1202
    %v1923 = vpack.c.b16 %v1251, %v1203
    %v1924 = vpack.c.b16 %v1252, %v1204
    %v1925 = vpack.c.b16 %v1253, %v1205
    %v1926 = vpack.c.b16 %v1254, %v1206
    %v1927 = vpack.c.b16 %v1255, %v1207
    %v1928 = vpack.c.b16 %v1256, %v1208
    %v1929 = vpack.c.b16 %v1257, %v1209
    %v1930 = vpack.c.b16 %v1258, %v1210
    %v1931 = vpack.c.b16 %v1259, %v1211
    %v1932 = vpack.c.b16 %v1260, %v1212
    %v1933 = vpack.c.b16 %v1261, %v1213
    %v1934 = vpack.c.b16 %v1262, %v1214
    %v1935 = vpack.c.b16 %v1263, %v1215
    %v1936 = vpack.c.b16 %v1264, %v1216
    %v1937 = vpack.c.b16 %v1265, %v1217
    %v1938 = vpack.c.b16 %v1314, %v1266
    %v1939 = vpack.c.b16 %v1315, %v1267
    %v1940 = vpack.c.b16 %v1316, %v1268
    %v1941 = vpack.c.b16 %v1317, %v1269
    %v1942 = vpack.c.b16 %v1318, %v1270
    %v1943 = vpack.c.b16 %v1319, %v1271
    %v1944 = vpack.c.b16 %v1320, %v1272
    %v1945 = vpack.c.b16 %v1321, %v1273
    %v1946 = vpack.c.b16 %v1322, %v1274
    %v1947 = vpack.c.b16 %v1323, %v1275
    %v1948 = vpack.c.b16 %v1324, %v1276
    %v1949 = vpack.c.b16 %v1325, %v1277
    %v1950 = vpack.c.b16 %v1326, %v1278
    %v1951 = vpack.c.b16 %v1327, %v1279
    %v1952 = vpack.c.b16 %v1328, %v1280
    %v1953 = vpack.c.b16 %v1329, %v1281
    %v1954 = vpack.c.b16 %v1330, %v1282
    %v1955 = vpack.c.b16 %v1331, %v1283
    %v1956 = vpack.c.b16 %v1332, %v1284
    %v1957 = vpack.c.b16 %v1333, %v1285
    %v1958 = vpack.c.b16 %v1334, %v1286
    %v1959 = vpack.c.b16 %v1335, %v1287
    %v1960 = vpack.c.b16 %v1336, %v1288
    %v1961 = vpack.c.b16 %v1337, %v1289
    %v1962 = vpack.c.b16 %v1338, %v1290
    %v1963 = vpack.c.b16 %v1339, %v1291
    %v1964 = vpack.c.b16 %v1340, %v1292
    %v1965 = vpack.c.b16 %v1341, %v1293
    %v1966 = vpack.c.b16 %v1342, %v1294
    %v1967 = vpack.c.b16 %v1343, %v1295
    %v1968 = vpack.c.b16 %v1344, %v1296
    %v1969 = vpack.c.b16 %v1345, %v1297
    %v1970 = vpack.c.b16 %v1346, %v1298
    %v1971 = vpack.c.b16 %v1347, %v1299
    %v1972 = vpack.c.b16 %v1348, %v1300
    %v1973 = vpack.c.b16 %v1349, %v1301
    %v1974 = vpack.c.b16 %v1350, %v1302
    %v1975 = vpack.c.b16 %v1351, %v1303
    %v1976 = vpack.c.b16 %v1352, %v1304
    %v1977 = vpack.c.b16 %v1353, %v1305
    %v1978 = vpack.c.b16 %v1354, %v1306
    %v1979 = vpack.c.b16 %v1355, %v1307
    %v1980 = vpack.c.b16 %v1356, %v1308
    %v1981 = vpack.c.b16 %v1357, %v1309
    %v1982 = vpack.c.b16 %v1358, %v1310
    %v1983 = vpack.c.b16 %v1359, %v1311
    %v1984 = vpack.c.b16 %v1360, %v1312
    %v1985 = vpack.c.b16 %v1361, %v1313
    %v1986 = vpack.c.b16 %v1410, %v1362
    %v1987 = vpack.c.b16 %v1411, %v1363
    %v1988 = vpack.c.b16 %v1412, %v1364
    %v1989 = vpack.c.b16 %v1413, %v1365
    %v1990 = vpack.c.b16 %v1414, %v1366
    %v1991 = vpack.c.b16 %v1415, %v1367
    %v1992 = vpack.c.b16 %v1416, %v1368
    %v1993 = vpack.c.b16 %v1417, %v1369
    %v1994 = vpack.c.b16 %v1418, %v1370
    %v1995 = vpack.c.b16 %v1419, %v1371
    %v1996 = vpack.c.b16 %v1420, %v1372
    %v1997 = vpack.c.b16 %v1421, %v1373
    %v1998 = vpack.c.b16 %v1422, %v1374
    %v1999 = vpack.c.b16 %v1423, %v1375
    %v2000 = vpack.c.b16 %v1424, %v1376
    %v2001 = vpack.c.b16 %v1425, %v1377
    %v2002 = vpack.c.b16 %v1426, %v1378
    %v2003 = vpack.c.b16 %v1427, %v1379
    %v2004 = vpack.c.b16 %v1428, %v1380
    %v2005 = vpack.c.b16 %v1429, %v1381
    %v2006 = vpack.c.b16 %v1430, %v1382
    %v2007 = vpack.c.b16 %v1431, %v1383
    %v2008 = vpack.c.b16 %v1432, %v1384
    %v2009 = vpack.c.b16 %v1433, %v1385
    %v2010 = vpack.c.b16 %v1434, %v1386
    %v2011 = vpack.c.b16 %v1435, %v1387
    %v2012 = vpack.c.b16 %v1436, %v1388
    %v2013 = vpack.c.b16 %v1437, %v1389
    %v2014 = vpack.c.b16 %v1438, %v1390
    %v2015 = vpack.c.b16 %v1439, %v1391
    %v2016 = vpack.c.b16 %v1440, %v1392
    %v2017 = vpack.c.b16 %v1441, %v1393
    %v2018 = vpack.c.b16 %v1442, %v1394
    %v2019 = vpack.c.b16 %v1443, %v1395
    %v2020 = vpack.c.b16 %v1444, %v1396
    %v2021 = vpack.c.b16 %v1445, %v1397
    %v2022 = vpack.c.b16 %v1446, %v1398
    %v2023 = vpack.c.b16 %v1447, %v1399
    %v2024 = vpack.c.b16 %v1448, %v1400
    %v2025 = vpack.c.b16 %v1449, %v1401
    %v2026 = vpack.c.b16 %v1450, %v1402
    %v2027 = vpack.c.b16 %v1451, %v1403
    %v2028 = vpack.c.b16 %v1452, %v1404
    %v2029 = vpack.c.b16 %v1453, %v1405
    %v2030 = vpack.c.b16 %v1454, %v1406
    %v2031 = vpack.c.b16 %v1455, %v1407
    %v2032 = vpack.c.b16 %v1456, %v1408
    %v2033 = vpack.c.b16 %v1457, %v1409
    %v2034 = vpack.c.b16 %v1506, %v1458
    %v2035 = vpack.c.b16 %v1507, %v1459
    %v2036 = vpack.c.b16 %v1508, %v1460
    %v2037 = vpack.c.b16 %v1509, %v1461
    %v2038 = vpack.c.b16 %v1510, %v1462
    %v2039 = vpack.c.b16 %v1511, %v1463
    %v2040 = vpack.c.b16 %v1512, %v1464
    %v2041 = vpack.c.b16 %v1513, %v1465
    %v2042 = vpack.c.b16 %v1514, %v1466
    %v2043 = vpack.c.b16 %v1515, %v1467
    %v2044 = vpack.c.b16 %v1516, %v1468
    %v2045 = vpack.c.b16 %v1517, %v1469
    %v2046 = vpack.c.b16 %v1518, %v1470
    %v2047 = vpack.c.b16 %v1519, %v1471
    %v2048 = vpack.c.b16 %v1520, %v1472
    %v2049 = vpack.c.b16 %v1521, %v1473
    %v2050 = vpack.c.b16 %v1522, %v1474
    %v2051 = vpack.c.b16 %v1523, %v1475
    %v2052 = vpack.c.b16 %v1524, %v1476
    %v2053 = vpack.c.b16 %v1525, %v1477
    %v2054 = vpack.c.b16 %v1526, %v1478
    %v2055 = vpack.c.b16 %v1527, %v1479
    %v2056 = vpack.c.b16 %v1528, %v1480
    %v2057 = vpack.c.b16 %v1529, %v1481
    %v2058 = vpack.c.b16 %v1530, %v1482
    %v2059 = vpack.c.b16 %v1531, %v1483
    %v2060 = vpack.c.b16 %v1532, %v1484
    %v2061 = vpack.c.b16 %v1533, %v1485
    %v2062 = vpack.c.b16 %v1534, %v1486
    %v2063 = vpack.c.b16 %v1535, %v1487
    %v2064 = vpack.c.b16 %v1536, %v1488
    %v2065 = vpack.c.b16 %v1537, %v1489
    %v2066 = vpack.c.b16 %v1538, %v1490
    %v2067 = vpack.c.b16 %v1539, %v1491
    %v2068 = vpack.c.b16 %v1540, %v1492
    %v2069 = vpack.c.b16 %v1541, %v1493
    %v2070 = vpack.c.b16 %v1542, %v1494
    %v2071 = vpack.c.b16 %v1543, %v1495
    %v2072 = vpack.c.b16 %v1544, %v1496
    %v2073 = vpack.c.b16 %v1545, %v1497
    %v2074 = vpack.c.b16 %v1546, %v1498
    %v2075 = vpack.c.b16 %v1547, %v1499
    %v2076 = vpack.c.b16 %v1548, %v1500
    %v2077 = vpack.c.b16 %v1549, %v1501
    %v2078 = vpack.c.b16 %v1550, %v1502
    %v2079 = vpack.c.b16 %v1551, %v1503
    %v2080 = vpack.c.b16 %v1552, %v1504
    %v2081 = vpack.c.b16 %v1553, %v1505
    %v2082 = vpack.c.b16 %v1602, %v1554
    %v2083 = vpack.c.b16 %v1603, %v1555
    %v2084 = vpack.c.b16 %v1604, %v1556
    %v2085 = vpack.c.b16 %v1605, %v1557
    %v2086 = vpack.c.b16 %v1606, %v1558
    %v2087 = vpack.c.b16 %v1607, %v1559
    %v2088 = vpack.c.b16 %v1608, %v1560
    %v2089 = vpack.c.b16 %v1609, %v1561
    %v2090 = vpack.c.b16 %v1610, %v1562
    %v2091 = vpack.c.b16 %v1611, %v1563
    %v2092 = vpack.c.b16 %v1612, %v1564
    %v2093 = vpack.c.b16 %v1613, %v1565
    %v2094 = vpack.c.b16 %v1614, %v1566
    %v2095 = vpack.c.b16 %v1615, %v1567
    %v2096 = vpack.c.b16 %v1616, %v1568
    %v2097 = vpack.c.b16 %v1617, %v1569
    %v2098 = vpack.c.b16 %v1618, %v1570
    %v2099 = vpack.c.b16 %v1619, %v1571
    %v2100 = vpack.c.b16 %v1620, %v1572
    %v2101 = vpack.c.b16 %v1621, %v1573
    %v2102 = vpack.c.b16 %v1622, %v1574
    %v2103 = vpack.c.b16 %v1623, %v1575
    %v2104 = vpack.c.b16 %v1624, %v1576
    %v2105 = vpack.c.b16 %v1625, %v1577
    %v2106 = vpack.c.b16 %v1626, %v1578
    %v2107 = vpack.c.b16 %v1627, %v1579
    %v2108 = vpack.c.b16 %v1628, %v1580
    %v2109 = vpack.c.b16 %v1629, %v1581
    %v2110 = vpack.c.b16 %v1630, %v1582
    %v2111 = vpack.c.b16 %v1631, %v1583
    %v2112 = vpack.c.b16 %v1632, %v1584
    %v2113 = vpack.c.b16 %v1633, %v1585
    %v2114 = vpack.c.b16 %v1634, %v1586
    %v2115 = vpack.c.b16 %v1635, %v1587
    %v2116 = vpack.c.b16 %v1636, %v1588
    %v2117 = vpack.c.b16 %v1637, %v1589
    %v2118 = vpack.c.b16 %v1638, %v1590
    %v2119 = vpack.c.b16 %v1639, %v1591
    %v2120 = vpack.c.b16 %v1640, %v1592
    %v2121 = vpack.c.b16 %v1641, %v1593
    %v2122 = vpack.c.b16 %v1642, %v1594
    %v2123 = vpack.c.b16 %v1643, %v1595
    %v2124 = vpack.c.b16 %v1644, %v1596
    %v2125 = vpack.c.b16 %v1645, %v1597
    %v2126 = vpack.c.b16 %v1646, %v1598
    %v2127 = vpack.c.b16 %v1647, %v1599
    %v2128 = vpack.c.b16 %v1648, %v1600
    %v2129 = vpack.c.b16 %v1649, %v1601
    %v2130 = vpack.c.b16 %v1698, %v1650
    %v2131 = vpack.c.b16 %v1699, %v1651
    %v2132 = vpack.c.b16 %v1700, %v1652
    %v2133 = vpack.c.b16 %v1701, %v1653
    %v2134 = vpack.c.b16 %v1702, %v1654
    %v2135 = vpack.c.b16 %v1703, %v1655
    %v2136 = vpack.c.b16 %v1704, %v1656
    %v2137 = vpack.c.b16 %v1705, %v1657
    %v2138 = vpack.c.b16 %v1706, %v1658
    %v2139 = vpack.c.b16 %v1707, %v1659
    %v2140 = vpack.c.b16 %v1708, %v1660
    %v2141 = vpack.c.b16 %v1709, %v1661
    %v2142 = vpack.c.b16 %v1710, %v1662
    %v2143 = vpack.c.b16 %v1711, %v1663
    %v2144 = vpack.c.b16 %v1712, %v1664
    %v2145 = vpack.c.b16 %v1713, %v1665
    %v2146 = vpack.c.b16 %v1714, %v1666
    %v2147 = vpack.c.b16 %v1715, %v1667
    %v2148 = vpack.c.b16 %v1716, %v1668
    %v2149 = vpack.c.b16 %v1717, %v1669
    %v2150 = vpack.c.b16 %v1718, %v1670
    %v2151 = vpack.c.b16 %v1719, %v1671
    %v2152 = vpack.c.b16 %v1720, %v1672
    %v2153 = vpack.c.b16 %v1721, %v1673
    %v2154 = vpack.c.b16 %v1722, %v1674
    %v2155 = vpack.c.b16 %v1723, %v1675
    %v2156 = vpack.c.b16 %v1724, %v1676
    %v2157 = vpack.c.b16 %v1725, %v1677
    %v2158 = vpack.c.b16 %v1726, %v1678
    %v2159 = vpack.c.b16 %v1727, %v1679
    %v2160 = vpack.c.b16 %v1728, %v1680
    %v2161 = vpack.c.b16 %v1729, %v1681
    %v2162 = vpack.c.b16 %v1730, %v1682
    %v2163 = vpack.c.b16 %v1731, %v1683
    %v2164 = vpack.c.b16 %v1732, %v1684
    %v2165 = vpack.c.b16 %v1733, %v1685
    %v2166 = vpack.c.b16 %v1734, %v1686
    %v2167 = vpack.c.b16 %v1735, %v1687
    %v2168 = vpack.c.b16 %v1736, %v1688
    %v2169 = vpack.c.b16 %v1737, %v1689
    %v2170 = vpack.c.b16 %v1738, %v1690
    %v2171 = vpack.c.b16 %v1739, %v1691
    %v2172 = vpack.c.b16 %v1740, %v1692
    %v2173 = vpack.c.b16 %v1741, %v1693
    %v2174 = vpack.c.b16 %v1742, %v1694
    %v2175 = vpack.c.b16 %v1743, %v1695
    %v2176 = vpack.c.b16 %v1744, %v1696
    %v2177 = vpack.c.b16 %v1745, %v1697
    %v2178 = vpack.c.b16 %v1794, %v1746
    %v2179 = vpack.c.b16 %v1795, %v1747
    %v2180 = vpack.c.b16 %v1796, %v1748
    %v2181 = vpack.c.b16 %v1797, %v1749
    %v2182 = vpack.c.b16 %v1798, %v1750
    %v2183 = vpack.c.b16 %v1799, %v1751
    %v2184 = vpack.c.b16 %v1800, %v1752
    %v2185 = vpack.c.b16 %v1801, %v1753
    %v2186 = vpack.c.b16 %v1802, %v1754
    %v2187 = vpack.c.b16 %v1803, %v1755
    %v2188 = vpack.c.b16 %v1804, %v1756
    %v2189 = vpack.c.b16 %v1805, %v1757
    %v2190 = vpack.c.b16 %v1806, %v1758
    %v2191 = vpack.c.b16 %v1807, %v1759
    %v2192 = vpack.c.b16 %v1808, %v1760
    %v2193 = vpack.c.b16 %v1809, %v1761
    %v2194 = vpack.c.b16 %v1810, %v1762
    %v2195 = vpack.c.b16 %v1811, %v1763
    %v2196 = vpack.c.b16 %v1812, %v1764
    %v2197 = vpack.c.b16 %v1813, %v1765
    %v2198 = vpack.c.b16 %v1814, %v1766
    %v2199 = vpack.c.b16 %v1815, %v1767
    %v2200 = vpack.c.b16 %v1816, %v1768
    %v2201 = vpack.c.b16 %v1817, %v1769
    %v2202 = vpack.c.b16 %v1818, %v1770
    %v2203 = vpack.c.b16 %v1819, %v1771
    %v2204 = vpack.c.b16 %v1820, %v1772
    %v2205 = vpack.c.b16 %v1821, %v1773
    %v2206 = vpack.c.b16 %v1822, %v1774
    %v2207 = vpack.c.b16 %v1823, %v1775
    %v2208 = vpack.c.b16 %v1824, %v1776
    %v2209 = vpack.c.b16 %v1825, %v1777
    %v2210 = vpack.c.b16 %v1826, %v1778
    %v2211 = vpack.c.b16 %v1827, %v1779
    %v2212 = vpack.c.b16 %v1828, %v1780
    %v2213 = vpack.c.b16 %v1829, %v1781
    %v2214 = vpack.c.b16 %v1830, %v1782
    %v2215 = vpack.c.b16 %v1831, %v1783
    %v2216 = vpack.c.b16 %v1832, %v1784
    %v2217 = vpack.c.b16 %v1833, %v1785
    %v2218 = vpack.c.b16 %v1834, %v1786
    %v2219 = vpack.c.b16 %v1835, %v1787
    %v2220 = vpack.c.b16 %v1836, %v1788
    %v2221 = vpack.c.b16 %v1837, %v1789
    %v2222 = vpack.c.b16 %v1838, %v1790
    %v2223 = vpack.c.b16 %v1839, %v1791
    %v2224 = vpack.c.b16 %v1840, %v1792
    %v2225 = vpack.c.b16 %v1841, %v1793
    %2610 = vmatprep.subr.bf16.mxu0 %v1843
    %2611 = vmatpush1.bf16.msra.mxu0 %v1842
    %2612 = vmatprep.subr.bf16.mxu0 %v1891
    %2613 = vmatpush1.bf16.msra.mxu0 %v1890
    %2614 = vmatprep.subr.bf16.mxu0 %v1939
    %2615 = vmatpush1.bf16.msra.mxu0 %v1938
    %2616 = vmatprep.subr.bf16.mxu0 %v1987
    %2617 = vmatpush1.bf16.msra.mxu0 %v1986
    %2618 = vmatprep.subr.bf16.mxu0 %v2035
    %2619 = vmatpush1.bf16.msra.mxu0 %v2034
    %2620 = vmatprep.subr.bf16.mxu0 %v2083
    %2621 = vmatpush1.bf16.msra.mxu0 %v2082
    %2622 = vmatprep.subr.bf16.mxu0 %v2131
    %2623 = vmatpush1.bf16.msra.mxu0 %v2130
    %2624 = vmatprep.subr.bf16.mxu0 %v2179
    %2625 = vmatpush1.bf16.msra.mxu0 %v2178
    %2626 = vmatprep.subr.bf16.mxu0 0
    %2627 = vmatpush1.bf16.msra.mxu0 0
    %2628 = vmatprep.subr.bf16.mxu0 0
    %2629 = vmatpush1.bf16.msra.mxu0 0
    %2630 = vmatprep.subr.bf16.mxu0 0
    %2631 = vmatpush1.bf16.msra.mxu0 0
    %2632 = vmatprep.subr.bf16.mxu0 0
    %2633 = vmatpush1.bf16.msra.mxu0 0
    %2634 = vmatprep.subr.bf16.mxu0 0
    %2635 = vmatpush1.bf16.msra.mxu0 0
    %2636 = vmatprep.subr.bf16.mxu0 0
    %2637 = vmatpush1.bf16.msra.mxu0 0
    %2638 = vmatprep.subr.bf16.mxu0 0
    %2639 = vmatpush1.bf16.msra.mxu0 0
    %2640 = vmatprep.subr.bf16.mxu0 0
    %2641 = vmatpush1.bf16.msra.mxu0 0
    %2642 = vmatprep.mubr.bf16.mxu0 0
    %2643 = vmatmul.mubr.bf16.gmra.mrb[0].mxu0 %v53
    %v2644 = vpop.f32.mrb[0].mxu0
    %v2645 = vadd.f32 %v453, %v2644
    %v2646 = vpop.f32.mrb[0].mxu0
    %v2647 = vadd.f32 %v457, %v2646
    %v2648 = vpop.f32.mrb[0].mxu0
    %v2649 = vpop.f32.mrb[0].mxu0
    %2650 = vdwg.mxu0
    %2651 = vmatprep.subr.bf16.mxu0 %v1845
    %2652 = vmatpush1.bf16.msra.mxu0 %v1844
    %2653 = vmatprep.subr.bf16.mxu0 %v1893
    %2654 = vmatpush1.bf16.msra.mxu0 %v1892
    %2655 = vmatprep.subr.bf16.mxu0 %v1941
    %2656 = vmatpush1.bf16.msra.mxu0 %v1940
    %2657 = vmatprep.subr.bf16.mxu0 %v1989
    %2658 = vmatpush1.bf16.msra.mxu0 %v1988
    %2659 = vmatprep.subr.bf16.mxu0 %v2037
    %2660 = vmatpush1.bf16.msra.mxu0 %v2036
    %2661 = vmatprep.subr.bf16.mxu0 %v2085
    %2662 = vmatpush1.bf16.msra.mxu0 %v2084
    %2663 = vmatprep.subr.bf16.mxu0 %v2133
    %2664 = vmatpush1.bf16.msra.mxu0 %v2132
    %2665 = vmatprep.subr.bf16.mxu0 %v2181
    %2666 = vmatpush1.bf16.msra.mxu0 %v2180
    %2667 = vmatprep.subr.bf16.mxu0 0
    %2668 = vmatpush1.bf16.msra.mxu0 0
    %2669 = vmatprep.subr.bf16.mxu0 0
    %2670 = vmatpush1.bf16.msra.mxu0 0
    %2671 = vmatprep.subr.bf16.mxu0 0
    %2672 = vmatpush1.bf16.msra.mxu0 0
    %2673 = vmatprep.subr.bf16.mxu0 0
    %2674 = vmatpush1.bf16.msra.mxu0 0
    %2675 = vmatprep.subr.bf16.mxu0 0
    %2676 = vmatpush1.bf16.msra.mxu0 0
    %2677 = vmatprep.subr.bf16.mxu0 0
    %2678 = vmatpush1.bf16.msra.mxu0 0
    %2679 = vmatprep.subr.bf16.mxu0 0
    %2680 = vmatpush1.bf16.msra.mxu0 0
    %2681 = vmatprep.subr.bf16.mxu0 0
    %2682 = vmatpush1.bf16.msra.mxu0 0
    %2683 = vmatprep.mubr.bf16.mxu0 0
    %2684 = vmatmul.mubr.bf16.gmra.mrb[0].mxu0 %v53
    %v2685 = vpop.f32.mrb[0].mxu0
    %v2686 = vadd.f32 %v461, %v2685
    %v2687 = vpop.f32.mrb[0].mxu0
    %v2688 = vadd.f32 %v465, %v2687
    %v2689 = vpop.f32.mrb[0].mxu0
    %v2690 = vpop.f32.mrb[0].mxu0
    %2691 = vdwg.mxu0
    %2692 = vmatprep.subr.bf16.mxu0 %v1847
    %2693 = vmatpush1.bf16.msra.mxu0 %v1846
    %2694 = vmatprep.subr.bf16.mxu0 %v1895
    %2695 = vmatpush1.bf16.msra.mxu0 %v1894
    %2696 = vmatprep.subr.bf16.mxu0 %v1943
    %2697 = vmatpush1.bf16.msra.mxu0 %v1942
    %2698 = vmatprep.subr.bf16.mxu0 %v1991
    %2699 = vmatpush1.bf16.msra.mxu0 %v1990
    %2700 = vmatprep.subr.bf16.mxu0 %v2039
    %2701 = vmatpush1.bf16.msra.mxu0 %v2038
    %2702 = vmatprep.subr.bf16.mxu0 %v2087
    %2703 = vmatpush1.bf16.msra.mxu0 %v2086
    %2704 = vmatprep.subr.bf16.mxu0 %v2135
    %2705 = vmatpush1.bf16.msra.mxu0 %v2134
    %2706 = vmatprep.subr.bf16.mxu0 %v2183
    %2707 = vmatpush1.bf16.msra.mxu0 %v2182
    %2708 = vmatprep.subr.bf16.mxu0 0
    %2709 = vmatpush1.bf16.msra.mxu0 0
    %2710 = vmatprep.subr.bf16.mxu0 0
    %2711 = vmatpush1.bf16.msra.mxu0 0
    %2712 = vmatprep.subr.bf16.mxu0 0
    %2713 = vmatpush1.bf16.msra.mxu0 0
    %2714 = vmatprep.subr.bf16.mxu0 0
    %2715 = vmatpush1.bf16.msra.mxu0 0
    %2716 = vmatprep.subr.bf16.mxu0 0
    %2717 = vmatpush1.bf16.msra.mxu0 0
    %2718 = vmatprep.subr.bf16.mxu0 0
    %2719 = vmatpush1.bf16.msra.mxu0 0
    %2720 = vmatprep.subr.bf16.mxu0 0
    %2721 = vmatpush1.bf16.msra.mxu0 0
    %2722 = vmatprep.subr.bf16.mxu0 0
    %2723 = vmatpush1.bf16.msra.mxu0 0
    %2724 = vmatprep.mubr.bf16.mxu0 0
    %2725 = vmatmul.mubr.bf16.gmra.mrb[0].mxu0 %v53
    %v2726 = vpop.f32.mrb[0].mxu0
    %v2727 = vadd.f32 %v469, %v2726
    %v2728 = vpop.f32.mrb[0].mxu0
    %v2729 = vadd.f32 %v473, %v2728
    %v2730 = vpop.f32.mrb[0].mxu0
    %v2731 = vpop.f32.mrb[0].mxu0
    %2732 = vdwg.mxu0
    %2733 = vmatprep.subr.bf16.mxu0 %v1849
    %2734 = vmatpush1.bf16.msra.mxu0 %v1848
    %2735 = vmatprep.subr.bf16.mxu0 %v1897
    %2736 = vmatpush1.bf16.msra.mxu0 %v1896
    %2737 = vmatprep.subr.bf16.mxu0 %v1945
    %2738 = vmatpush1.bf16.msra.mxu0 %v1944
    %2739 = vmatprep.subr.bf16.mxu0 %v1993
    %2740 = vmatpush1.bf16.msra.mxu0 %v1992
    %2741 = vmatprep.subr.bf16.mxu0 %v2041
    %2742 = vmatpush1.bf16.msra.mxu0 %v2040
    %2743 = vmatprep.subr.bf16.mxu0 %v2089
    %2744 = vmatpush1.bf16.msra.mxu0 %v2088
    %2745 = vmatprep.subr.bf16.mxu0 %v2137
    %2746 = vmatpush1.bf16.msra.mxu0 %v2136
    %2747 = vmatprep.subr.bf16.mxu0 %v2185
    %2748 = vmatpush1.bf16.msra.mxu0 %v2184
    %2749 = vmatprep.subr.bf16.mxu0 0
    %2750 = vmatpush1.bf16.msra.mxu0 0
    %2751 = vmatprep.subr.bf16.mxu0 0
    %2752 = vmatpush1.bf16.msra.mxu0 0
    %2753 = vmatprep.subr.bf16.mxu0 0
    %2754 = vmatpush1.bf16.msra.mxu0 0
    %2755 = vmatprep.subr.bf16.mxu0 0
    %2756 = vmatpush1.bf16.msra.mxu0 0
    %2757 = vmatprep.subr.bf16.mxu0 0
    %2758 = vmatpush1.bf16.msra.mxu0 0
    %2759 = vmatprep.subr.bf16.mxu0 0
    %2760 = vmatpush1.bf16.msra.mxu0 0
    %2761 = vmatprep.subr.bf16.mxu0 0
    %2762 = vmatpush1.bf16.msra.mxu0 0
    %2763 = vmatprep.subr.bf16.mxu0 0
    %2764 = vmatpush1.bf16.msra.mxu0 0
    %2765 = vmatprep.mubr.bf16.mxu0 0
    %2766 = vmatmul.mubr.bf16.gmra.mrb[0].mxu0 %v53
    %v2767 = vpop.f32.mrb[0].mxu0
    %v2768 = vadd.f32 %v477, %v2767
    %v2769 = vpop.f32.mrb[0].mxu0
    %v2770 = vadd.f32 %v481, %v2769
    %v2771 = vpop.f32.mrb[0].mxu0
    %v2772 = vpop.f32.mrb[0].mxu0
    %2773 = vdwg.mxu0
    %2774 = vmatprep.subr.bf16.mxu0 %v1851
    %2775 = vmatpush1.bf16.msra.mxu0 %v1850
    %2776 = vmatprep.subr.bf16.mxu0 %v1899
    %2777 = vmatpush1.bf16.msra.mxu0 %v1898
    %2778 = vmatprep.subr.bf16.mxu0 %v1947
    %2779 = vmatpush1.bf16.msra.mxu0 %v1946
    %2780 = vmatprep.subr.bf16.mxu0 %v1995
    %2781 = vmatpush1.bf16.msra.mxu0 %v1994
    %2782 = vmatprep.subr.bf16.mxu0 %v2043
    %2783 = vmatpush1.bf16.msra.mxu0 %v2042
    %2784 = vmatprep.subr.bf16.mxu0 %v2091
    %2785 = vmatpush1.bf16.msra.mxu0 %v2090
    %2786 = vmatprep.subr.bf16.mxu0 %v2139
    %2787 = vmatpush1.bf16.msra.mxu0 %v2138
    %2788 = vmatprep.subr.bf16.mxu0 %v2187
    %2789 = vmatpush1.bf16.msra.mxu0 %v2186
    %2790 = vmatprep.subr.bf16.mxu0 0
    %2791 = vmatpush1.bf16.msra.mxu0 0
    %2792 = vmatprep.subr.bf16.mxu0 0
    %2793 = vmatpush1.bf16.msra.mxu0 0
    %2794 = vmatprep.subr.bf16.mxu0 0
    %2795 = vmatpush1.bf16.msra.mxu0 0
    %2796 = vmatprep.subr.bf16.mxu0 0
    %2797 = vmatpush1.bf16.msra.mxu0 0
    %2798 = vmatprep.subr.bf16.mxu0 0
    %2799 = vmatpush1.bf16.msra.mxu0 0
    %2800 = vmatprep.subr.bf16.mxu0 0
    %2801 = vmatpush1.bf16.msra.mxu0 0
    %2802 = vmatprep.subr.bf16.mxu0 0
    %2803 = vmatpush1.bf16.msra.mxu0 0
    %2804 = vmatprep.subr.bf16.mxu0 0
    %2805 = vmatpush1.bf16.msra.mxu0 0
    %2806 = vmatprep.mubr.bf16.mxu0 0
    %2807 = vmatmul.mubr.bf16.gmra.mrb[0].mxu0 %v53
    %v2808 = vpop.f32.mrb[0].mxu0
    %v2809 = vadd.f32 %v485, %v2808
    %v2810 = vpop.f32.mrb[0].mxu0
    %v2811 = vadd.f32 %v489, %v2810
    %v2812 = vpop.f32.mrb[0].mxu0
    %v2813 = vpop.f32.mrb[0].mxu0
    %2814 = vdwg.mxu0
    %2815 = vmatprep.subr.bf16.mxu0 %v1853
    %2816 = vmatpush1.bf16.msra.mxu0 %v1852
    %2817 = vmatprep.subr.bf16.mxu0 %v1901
    %2818 = vmatpush1.bf16.msra.mxu0 %v1900
    %2819 = vmatprep.subr.bf16.mxu0 %v1949
    %2820 = vmatpush1.bf16.msra.mxu0 %v1948
    %2821 = vmatprep.subr.bf16.mxu0 %v1997
    %2822 = vmatpush1.bf16.msra.mxu0 %v1996
    %2823 = vmatprep.subr.bf16.mxu0 %v2045
    %2824 = vmatpush1.bf16.msra.mxu0 %v2044
    %2825 = vmatprep.subr.bf16.mxu0 %v2093
    %2826 = vmatpush1.bf16.msra.mxu0 %v2092
    %2827 = vmatprep.subr.bf16.mxu0 %v2141
    %2828 = vmatpush1.bf16.msra.mxu0 %v2140
    %2829 = vmatprep.subr.bf16.mxu0 %v2189
    %2830 = vmatpush1.bf16.msra.mxu0 %v2188
    %2831 = vmatprep.subr.bf16.mxu0 0
    %2832 = vmatpush1.bf16.msra.mxu0 0
    %2833 = vmatprep.subr.bf16.mxu0 0
    %2834 = vmatpush1.bf16.msra.mxu0 0
    %2835 = vmatprep.subr.bf16.mxu0 0
    %2836 = vmatpush1.bf16.msra.mxu0 0
    %2837 = vmatprep.subr.bf16.mxu0 0
    %2838 = vmatpush1.bf16.msra.mxu0 0
    %2839 = vmatprep.subr.bf16.mxu0 0
    %2840 = vmatpush1.bf16.msra.mxu0 0
    %2841 = vmatprep.subr.bf16.mxu0 0
    %2842 = vmatpush1.bf16.msra.mxu0 0
    %2843 = vmatprep.subr.bf16.mxu0 0
    %2844 = vmatpush1.bf16.msra.mxu0 0
    %2845 = vmatprep.subr.bf16.mxu0 0
    %2846 = vmatpush1.bf16.msra.mxu0 0
    %2847 = vmatprep.mubr.bf16.mxu0 0
    %2848 = vmatmul.mubr.bf16.gmra.mrb[0].mxu0 %v53
    %v2849 = vpop.f32.mrb[0].mxu0
    %v2850 = vadd.f32 %v493, %v2849
    %v2851 = vpop.f32.mrb[0].mxu0
    %v2852 = vadd.f32 %v497, %v2851
    %v2853 = vpop.f32.mrb[0].mxu0
    %v2854 = vpop.f32.mrb[0].mxu0
    %2855 = vdwg.mxu0
    %2856 = vmatprep.subr.bf16.mxu0 %v1855
    %2857 = vmatpush1.bf16.msra.mxu0 %v1854
    %2858 = vmatprep.subr.bf16.mxu0 %v1903
    %2859 = vmatpush1.bf16.msra.mxu0 %v1902
    %2860 = vmatprep.subr.bf16.mxu0 %v1951
    %2861 = vmatpush1.bf16.msra.mxu0 %v1950
    %2862 = vmatprep.subr.bf16.mxu0 %v1999
    %2863 = vmatpush1.bf16.msra.mxu0 %v1998
    %2864 = vmatprep.subr.bf16.mxu0 %v2047
    %2865 = vmatpush1.bf16.msra.mxu0 %v2046
    %2866 = vmatprep.subr.bf16.mxu0 %v2095
    %2867 = vmatpush1.bf16.msra.mxu0 %v2094
    %2868 = vmatprep.subr.bf16.mxu0 %v2143
    %2869 = vmatpush1.bf16.msra.mxu0 %v2142
    %2870 = vmatprep.subr.bf16.mxu0 %v2191
    %2871 = vmatpush1.bf16.msra.mxu0 %v2190
    %2872 = vmatprep.subr.bf16.mxu0 0
    %2873 = vmatpush1.bf16.msra.mxu0 0
    %2874 = vmatprep.subr.bf16.mxu0 0
    %2875 = vmatpush1.bf16.msra.mxu0 0
    %2876 = vmatprep.subr.bf16.mxu0 0
    %2877 = vmatpush1.bf16.msra.mxu0 0
    %2878 = vmatprep.subr.bf16.mxu0 0
    %2879 = vmatpush1.bf16.msra.mxu0 0
    %2880 = vmatprep.subr.bf16.mxu0 0
    %2881 = vmatpush1.bf16.msra.mxu0 0
    %2882 = vmatprep.subr.bf16.mxu0 0
    %2883 = vmatpush1.bf16.msra.mxu0 0
    %2884 = vmatprep.subr.bf16.mxu0 0
    %2885 = vmatpush1.bf16.msra.mxu0 0
    %2886 = vmatprep.subr.bf16.mxu0 0
    %2887 = vmatpush1.bf16.msra.mxu0 0
    %2888 = vmatprep.mubr.bf16.mxu0 0
    %2889 = vmatmul.mubr.bf16.gmra.mrb[0].mxu0 %v53
    %v2890 = vpop.f32.mrb[0].mxu0
    %v2891 = vadd.f32 %v501, %v2890
    %v2892 = vpop.f32.mrb[0].mxu0
    %v2893 = vadd.f32 %v505, %v2892
    %v2894 = vpop.f32.mrb[0].mxu0
    %v2895 = vpop.f32.mrb[0].mxu0
    %2896 = vdwg.mxu0
    %2897 = vmatprep.subr.bf16.mxu0 %v1857
    %2898 = vmatpush1.bf16.msra.mxu0 %v1856
    %2899 = vmatprep.subr.bf16.mxu0 %v1905
    %2900 = vmatpush1.bf16.msra.mxu0 %v1904
    %2901 = vmatprep.subr.bf16.mxu0 %v1953
    %2902 = vmatpush1.bf16.msra.mxu0 %v1952
    %2903 = vmatprep.subr.bf16.mxu0 %v2001
    %2904 = vmatpush1.bf16.msra.mxu0 %v2000
    %2905 = vmatprep.subr.bf16.mxu0 %v2049
    %2906 = vmatpush1.bf16.msra.mxu0 %v2048
    %2907 = vmatprep.subr.bf16.mxu0 %v2097
    %2908 = vmatpush1.bf16.msra.mxu0 %v2096
    %2909 = vmatprep.subr.bf16.mxu0 %v2145
    %2910 = vmatpush1.bf16.msra.mxu0 %v2144
    %2911 = vmatprep.subr.bf16.mxu0 %v2193
    %2912 = vmatpush1.bf16.msra.mxu0 %v2192
    %2913 = vmatprep.subr.bf16.mxu0 0
    %2914 = vmatpush1.bf16.msra.mxu0 0
    %2915 = vmatprep.subr.bf16.mxu0 0
    %2916 = vmatpush1.bf16.msra.mxu0 0
    %2917 = vmatprep.subr.bf16.mxu0 0
    %2918 = vmatpush1.bf16.msra.mxu0 0
    %2919 = vmatprep.subr.bf16.mxu0 0
    %2920 = vmatpush1.bf16.msra.mxu0 0
    %2921 = vmatprep.subr.bf16.mxu0 0
    %2922 = vmatpush1.bf16.msra.mxu0 0
    %2923 = vmatprep.subr.bf16.mxu0 0
    %2924 = vmatpush1.bf16.msra.mxu0 0
    %2925 = vmatprep.subr.bf16.mxu0 0
    %2926 = vmatpush1.bf16.msra.mxu0 0
    %2927 = vmatprep.subr.bf16.mxu0 0
    %2928 = vmatpush1.bf16.msra.mxu0 0
    %2929 = vmatprep.mubr.bf16.mxu0 0
    %2930 = vmatmul.mubr.bf16.gmra.mrb[0].mxu0 %v53
    %v2931 = vpop.f32.mrb[0].mxu0
    %v2932 = vadd.f32 %v509, %v2931
    %v2933 = vpop.f32.mrb[0].mxu0
    %v2934 = vadd.f32 %v513, %v2933
    %v2935 = vpop.f32.mrb[0].mxu0
    %v2936 = vpop.f32.mrb[0].mxu0
    %2937 = vdwg.mxu0
    %2938 = vmatprep.subr.bf16.mxu0 %v1859
    %2939 = vmatpush1.bf16.msra.mxu0 %v1858
    %2940 = vmatprep.subr.bf16.mxu0 %v1907
    %2941 = vmatpush1.bf16.msra.mxu0 %v1906
    %2942 = vmatprep.subr.bf16.mxu0 %v1955
    %2943 = vmatpush1.bf16.msra.mxu0 %v1954
    %2944 = vmatprep.subr.bf16.mxu0 %v2003
    %2945 = vmatpush1.bf16.msra.mxu0 %v2002
    %2946 = vmatprep.subr.bf16.mxu0 %v2051
    %2947 = vmatpush1.bf16.msra.mxu0 %v2050
    %2948 = vmatprep.subr.bf16.mxu0 %v2099
    %2949 = vmatpush1.bf16.msra.mxu0 %v2098
    %2950 = vmatprep.subr.bf16.mxu0 %v2147
    %2951 = vmatpush1.bf16.msra.mxu0 %v2146
    %2952 = vmatprep.subr.bf16.mxu0 %v2195
    %2953 = vmatpush1.bf16.msra.mxu0 %v2194
    %2954 = vmatprep.subr.bf16.mxu0 0
    %2955 = vmatpush1.bf16.msra.mxu0 0
    %2956 = vmatprep.subr.bf16.mxu0 0
    %2957 = vmatpush1.bf16.msra.mxu0 0
    %2958 = vmatprep.subr.bf16.mxu0 0
    %2959 = vmatpush1.bf16.msra.mxu0 0
    %2960 = vmatprep.subr.bf16.mxu0 0
    %2961 = vmatpush1.bf16.msra.mxu0 0
    %2962 = vmatprep.subr.bf16.mxu0 0
    %2963 = vmatpush1.bf16.msra.mxu0 0
    %2964 = vmatprep.subr.bf16.mxu0 0
    %2965 = vmatpush1.bf16.msra.mxu0 0
    %2966 = vmatprep.subr.bf16.mxu0 0
    %2967 = vmatpush1.bf16.msra.mxu0 0
    %2968 = vmatprep.subr.bf16.mxu0 0
    %2969 = vmatpush1.bf16.msra.mxu0 0
    %2970 = vmatprep.mubr.bf16.mxu0 0
    %2971 = vmatmul.mubr.bf16.gmra.mrb[0].mxu0 %v53
    %v2972 = vpop.f32.mrb[0].mxu0
    %v2973 = vadd.f32 %v517, %v2972
    %v2974 = vpop.f32.mrb[0].mxu0
    %v2975 = vadd.f32 %v521, %v2974
    %v2976 = vpop.f32.mrb[0].mxu0
    %v2977 = vpop.f32.mrb[0].mxu0
    %2978 = vdwg.mxu0
    %2979 = vmatprep.subr.bf16.mxu0 %v1861
    %2980 = vmatpush1.bf16.msra.mxu0 %v1860
    %2981 = vmatprep.subr.bf16.mxu0 %v1909
    %2982 = vmatpush1.bf16.msra.mxu0 %v1908
    %2983 = vmatprep.subr.bf16.mxu0 %v1957
    %2984 = vmatpush1.bf16.msra.mxu0 %v1956
    %2985 = vmatprep.subr.bf16.mxu0 %v2005
    %2986 = vmatpush1.bf16.msra.mxu0 %v2004
    %2987 = vmatprep.subr.bf16.mxu0 %v2053
    %2988 = vmatpush1.bf16.msra.mxu0 %v2052
    %2989 = vmatprep.subr.bf16.mxu0 %v2101
    %2990 = vmatpush1.bf16.msra.mxu0 %v2100
    %2991 = vmatprep.subr.bf16.mxu0 %v2149
    %2992 = vmatpush1.bf16.msra.mxu0 %v2148
    %2993 = vmatprep.subr.bf16.mxu0 %v2197
    %2994 = vmatpush1.bf16.msra.mxu0 %v2196
    %2995 = vmatprep.subr.bf16.mxu0 0
    %2996 = vmatpush1.bf16.msra.mxu0 0
    %2997 = vmatprep.subr.bf16.mxu0 0
    %2998 = vmatpush1.bf16.msra.mxu0 0
    %2999 = vmatprep.subr.bf16.mxu0 0
    %3000 = vmatpush1.bf16.msra.mxu0 0
    %3001 = vmatprep.subr.bf16.mxu0 0
    %3002 = vmatpush1.bf16.msra.mxu0 0
    %3003 = vmatprep.subr.bf16.mxu0 0
    %3004 = vmatpush1.bf16.msra.mxu0 0
    %3005 = vmatprep.subr.bf16.mxu0 0
    %3006 = vmatpush1.bf16.msra.mxu0 0
    %3007 = vmatprep.subr.bf16.mxu0 0
    %3008 = vmatpush1.bf16.msra.mxu0 0
    %3009 = vmatprep.subr.bf16.mxu0 0
    %3010 = vmatpush1.bf16.msra.mxu0 0
    %3011 = vmatprep.mubr.bf16.mxu0 0
    %3012 = vmatmul.mubr.bf16.gmra.mrb[0].mxu0 %v53
    %v3013 = vpop.f32.mrb[0].mxu0
    %v3014 = vadd.f32 %v525, %v3013
    %v3015 = vpop.f32.mrb[0].mxu0
    %v3016 = vadd.f32 %v529, %v3015
    %v3017 = vpop.f32.mrb[0].mxu0
    %v3018 = vpop.f32.mrb[0].mxu0
    %3019 = vdwg.mxu0
    %3020 = vmatprep.subr.bf16.mxu0 %v1863
    %3021 = vmatpush1.bf16.msra.mxu0 %v1862
    %3022 = vmatprep.subr.bf16.mxu0 %v1911
    %3023 = vmatpush1.bf16.msra.mxu0 %v1910
    %3024 = vmatprep.subr.bf16.mxu0 %v1959
    %3025 = vmatpush1.bf16.msra.mxu0 %v1958
    %3026 = vmatprep.subr.bf16.mxu0 %v2007
    %3027 = vmatpush1.bf16.msra.mxu0 %v2006
    %3028 = vmatprep.subr.bf16.mxu0 %v2055
    %3029 = vmatpush1.bf16.msra.mxu0 %v2054
    %3030 = vmatprep.subr.bf16.mxu0 %v2103
    %3031 = vmatpush1.bf16.msra.mxu0 %v2102
    %3032 = vmatprep.subr.bf16.mxu0 %v2151
    %3033 = vmatpush1.bf16.msra.mxu0 %v2150
    %3034 = vmatprep.subr.bf16.mxu0 %v2199
    %3035 = vmatpush1.bf16.msra.mxu0 %v2198
    %3036 = vmatprep.subr.bf16.mxu0 0
    %3037 = vmatpush1.bf16.msra.mxu0 0
    %3038 = vmatprep.subr.bf16.mxu0 0
    %3039 = vmatpush1.bf16.msra.mxu0 0
    %3040 = vmatprep.subr.bf16.mxu0 0
    %3041 = vmatpush1.bf16.msra.mxu0 0
    %3042 = vmatprep.subr.bf16.mxu0 0
    %3043 = vmatpush1.bf16.msra.mxu0 0
    %3044 = vmatprep.subr.bf16.mxu0 0
    %3045 = vmatpush1.bf16.msra.mxu0 0
    %3046 = vmatprep.subr.bf16.mxu0 0
    %3047 = vmatpush1.bf16.msra.mxu0 0
    %3048 = vmatprep.subr.bf16.mxu0 0
    %3049 = vmatpush1.bf16.msra.mxu0 0
    %3050 = vmatprep.subr.bf16.mxu0 0
    %3051 = vmatpush1.bf16.msra.mxu0 0
    %3052 = vmatprep.mubr.bf16.mxu0 0
    %3053 = vmatmul.mubr.bf16.gmra.mrb[0].mxu0 %v53
    %v3054 = vpop.f32.mrb[0].mxu0
    %v3055 = vadd.f32 %v533, %v3054
    %v3056 = vpop.f32.mrb[0].mxu0
    %v3057 = vadd.f32 %v537, %v3056
    %v3058 = vpop.f32.mrb[0].mxu0
    %v3059 = vpop.f32.mrb[0].mxu0
    %3060 = vdwg.mxu0
    %3061 = vmatprep.subr.bf16.mxu0 %v1865
    %3062 = vmatpush1.bf16.msra.mxu0 %v1864
    %3063 = vmatprep.subr.bf16.mxu0 %v1913
    %3064 = vmatpush1.bf16.msra.mxu0 %v1912
    %3065 = vmatprep.subr.bf16.mxu0 %v1961
    %3066 = vmatpush1.bf16.msra.mxu0 %v1960
    %3067 = vmatprep.subr.bf16.mxu0 %v2009
    %3068 = vmatpush1.bf16.msra.mxu0 %v2008
    %3069 = vmatprep.subr.bf16.mxu0 %v2057
    %3070 = vmatpush1.bf16.msra.mxu0 %v2056
    %3071 = vmatprep.subr.bf16.mxu0 %v2105
    %3072 = vmatpush1.bf16.msra.mxu0 %v2104
    %3073 = vmatprep.subr.bf16.mxu0 %v2153
    %3074 = vmatpush1.bf16.msra.mxu0 %v2152
    %3075 = vmatprep.subr.bf16.mxu0 %v2201
    %3076 = vmatpush1.bf16.msra.mxu0 %v2200
    %3077 = vmatprep.subr.bf16.mxu0 0
    %3078 = vmatpush1.bf16.msra.mxu0 0
    %3079 = vmatprep.subr.bf16.mxu0 0
    %3080 = vmatpush1.bf16.msra.mxu0 0
    %3081 = vmatprep.subr.bf16.mxu0 0
    %3082 = vmatpush1.bf16.msra.mxu0 0
    %3083 = vmatprep.subr.bf16.mxu0 0
    %3084 = vmatpush1.bf16.msra.mxu0 0
    %3085 = vmatprep.subr.bf16.mxu0 0
    %3086 = vmatpush1.bf16.msra.mxu0 0
    %3087 = vmatprep.subr.bf16.mxu0 0
    %3088 = vmatpush1.bf16.msra.mxu0 0
    %3089 = vmatprep.subr.bf16.mxu0 0
    %3090 = vmatpush1.bf16.msra.mxu0 0
    %3091 = vmatprep.subr.bf16.mxu0 0
    %3092 = vmatpush1.bf16.msra.mxu0 0
    %3093 = vmatprep.mubr.bf16.mxu0 0
    %3094 = vmatmul.mubr.bf16.gmra.mrb[0].mxu0 %v53
    %v3095 = vpop.f32.mrb[0].mxu0
    %v3096 = vadd.f32 %v541, %v3095
    %v3097 = vpop.f32.mrb[0].mxu0
    %v3098 = vadd.f32 %v545, %v3097
    %v3099 = vpop.f32.mrb[0].mxu0
    %v3100 = vpop.f32.mrb[0].mxu0
    %3101 = vdwg.mxu0
    %3102 = vmatprep.subr.bf16.mxu0 %v1867
    %3103 = vmatpush1.bf16.msra.mxu0 %v1866
    %3104 = vmatprep.subr.bf16.mxu0 %v1915
    %3105 = vmatpush1.bf16.msra.mxu0 %v1914
    %3106 = vmatprep.subr.bf16.mxu0 %v1963
    %3107 = vmatpush1.bf16.msra.mxu0 %v1962
    %3108 = vmatprep.subr.bf16.mxu0 %v2011
    %3109 = vmatpush1.bf16.msra.mxu0 %v2010
    %3110 = vmatprep.subr.bf16.mxu0 %v2059
    %3111 = vmatpush1.bf16.msra.mxu0 %v2058
    %3112 = vmatprep.subr.bf16.mxu0 %v2107
    %3113 = vmatpush1.bf16.msra.mxu0 %v2106
    %3114 = vmatprep.subr.bf16.mxu0 %v2155
    %3115 = vmatpush1.bf16.msra.mxu0 %v2154
    %3116 = vmatprep.subr.bf16.mxu0 %v2203
    %3117 = vmatpush1.bf16.msra.mxu0 %v2202
    %3118 = vmatprep.subr.bf16.mxu0 0
    %3119 = vmatpush1.bf16.msra.mxu0 0
    %3120 = vmatprep.subr.bf16.mxu0 0
    %3121 = vmatpush1.bf16.msra.mxu0 0
    %3122 = vmatprep.subr.bf16.mxu0 0
    %3123 = vmatpush1.bf16.msra.mxu0 0
    %3124 = vmatprep.subr.bf16.mxu0 0
    %3125 = vmatpush1.bf16.msra.mxu0 0
    %3126 = vmatprep.subr.bf16.mxu0 0
    %3127 = vmatpush1.bf16.msra.mxu0 0
    %3128 = vmatprep.subr.bf16.mxu0 0
    %3129 = vmatpush1.bf16.msra.mxu0 0
    %3130 = vmatprep.subr.bf16.mxu0 0
    %3131 = vmatpush1.bf16.msra.mxu0 0
    %3132 = vmatprep.subr.bf16.mxu0 0
    %3133 = vmatpush1.bf16.msra.mxu0 0
    %3134 = vmatprep.mubr.bf16.mxu0 0
    %3135 = vmatmul.mubr.bf16.gmra.mrb[0].mxu0 %v53
    %v3136 = vpop.f32.mrb[0].mxu0
    %v3137 = vadd.f32 %v549, %v3136
    %v3138 = vpop.f32.mrb[0].mxu0
    %v3139 = vadd.f32 %v553, %v3138
    %v3140 = vpop.f32.mrb[0].mxu0
    %v3141 = vpop.f32.mrb[0].mxu0
    %3142 = vdwg.mxu0
    %3143 = vmatprep.subr.bf16.mxu0 %v1869
    %3144 = vmatpush1.bf16.msra.mxu0 %v1868
    %3145 = vmatprep.subr.bf16.mxu0 %v1917
    %3146 = vmatpush1.bf16.msra.mxu0 %v1916
    %3147 = vmatprep.subr.bf16.mxu0 %v1965
    %3148 = vmatpush1.bf16.msra.mxu0 %v1964
    %3149 = vmatprep.subr.bf16.mxu0 %v2013
    %3150 = vmatpush1.bf16.msra.mxu0 %v2012
    %3151 = vmatprep.subr.bf16.mxu0 %v2061
    %3152 = vmatpush1.bf16.msra.mxu0 %v2060
    %3153 = vmatprep.subr.bf16.mxu0 %v2109
    %3154 = vmatpush1.bf16.msra.mxu0 %v2108
    %3155 = vmatprep.subr.bf16.mxu0 %v2157
    %3156 = vmatpush1.bf16.msra.mxu0 %v2156
    %3157 = vmatprep.subr.bf16.mxu0 %v2205
    %3158 = vmatpush1.bf16.msra.mxu0 %v2204
    %3159 = vmatprep.subr.bf16.mxu0 0
    %3160 = vmatpush1.bf16.msra.mxu0 0
    %3161 = vmatprep.subr.bf16.mxu0 0
    %3162 = vmatpush1.bf16.msra.mxu0 0
    %3163 = vmatprep.subr.bf16.mxu0 0
    %3164 = vmatpush1.bf16.msra.mxu0 0
    %3165 = vmatprep.subr.bf16.mxu0 0
    %3166 = vmatpush1.bf16.msra.mxu0 0
    %3167 = vmatprep.subr.bf16.mxu0 0
    %3168 = vmatpush1.bf16.msra.mxu0 0
    %3169 = vmatprep.subr.bf16.mxu0 0
    %3170 = vmatpush1.bf16.msra.mxu0 0
    %3171 = vmatprep.subr.bf16.mxu0 0
    %3172 = vmatpush1.bf16.msra.mxu0 0
    %3173 = vmatprep.subr.bf16.mxu0 0
    %3174 = vmatpush1.bf16.msra.mxu0 0
    %3175 = vmatprep.mubr.bf16.mxu0 0
    %3176 = vmatmul.mubr.bf16.gmra.mrb[0].mxu0 %v53
    %v3177 = vpop.f32.mrb[0].mxu0
    %v3178 = vadd.f32 %v557, %v3177
    %v3179 = vpop.f32.mrb[0].mxu0
    %v3180 = vadd.f32 %v561, %v3179
    %v3181 = vpop.f32.mrb[0].mxu0
    %v3182 = vpop.f32.mrb[0].mxu0
    %3183 = vdwg.mxu0
    %3184 = vmatprep.subr.bf16.mxu0 %v1871
    %3185 = vmatpush1.bf16.msra.mxu0 %v1870
    %3186 = vmatprep.subr.bf16.mxu0 %v1919
    %3187 = vmatpush1.bf16.msra.mxu0 %v1918
    %3188 = vmatprep.subr.bf16.mxu0 %v1967
    %3189 = vmatpush1.bf16.msra.mxu0 %v1966
    %3190 = vmatprep.subr.bf16.mxu0 %v2015
    %3191 = vmatpush1.bf16.msra.mxu0 %v2014
    %3192 = vmatprep.subr.bf16.mxu0 %v2063
    %3193 = vmatpush1.bf16.msra.mxu0 %v2062
    %3194 = vmatprep.subr.bf16.mxu0 %v2111
    %3195 = vmatpush1.bf16.msra.mxu0 %v2110
    %3196 = vmatprep.subr.bf16.mxu0 %v2159
    %3197 = vmatpush1.bf16.msra.mxu0 %v2158
    %3198 = vmatprep.subr.bf16.mxu0 %v2207
    %3199 = vmatpush1.bf16.msra.mxu0 %v2206
    %3200 = vmatprep.subr.bf16.mxu0 0
    %3201 = vmatpush1.bf16.msra.mxu0 0
    %3202 = vmatprep.subr.bf16.mxu0 0
    %3203 = vmatpush1.bf16.msra.mxu0 0
    %3204 = vmatprep.subr.bf16.mxu0 0
    %3205 = vmatpush1.bf16.msra.mxu0 0
    %3206 = vmatprep.subr.bf16.mxu0 0
    %3207 = vmatpush1.bf16.msra.mxu0 0
    %3208 = vmatprep.subr.bf16.mxu0 0
    %3209 = vmatpush1.bf16.msra.mxu0 0
    %3210 = vmatprep.subr.bf16.mxu0 0
    %3211 = vmatpush1.bf16.msra.mxu0 0
    %3212 = vmatprep.subr.bf16.mxu0 0
    %3213 = vmatpush1.bf16.msra.mxu0 0
    %3214 = vmatprep.subr.bf16.mxu0 0
    %3215 = vmatpush1.bf16.msra.mxu0 0
    %3216 = vmatprep.mubr.bf16.mxu0 0
    %3217 = vmatmul.mubr.bf16.gmra.mrb[0].mxu0 %v53
    %v3218 = vpop.f32.mrb[0].mxu0
    %v3219 = vadd.f32 %v565, %v3218
    %v3220 = vpop.f32.mrb[0].mxu0
    %v3221 = vadd.f32 %v569, %v3220
    %v3222 = vpop.f32.mrb[0].mxu0
    %v3223 = vpop.f32.mrb[0].mxu0
    %3224 = vdwg.mxu0
    %3225 = vmatprep.subr.bf16.mxu0 %v1873
    %3226 = vmatpush1.bf16.msra.mxu0 %v1872
    %3227 = vmatprep.subr.bf16.mxu0 %v1921
    %3228 = vmatpush1.bf16.msra.mxu0 %v1920
    %3229 = vmatprep.subr.bf16.mxu0 %v1969
    %3230 = vmatpush1.bf16.msra.mxu0 %v1968
    %3231 = vmatprep.subr.bf16.mxu0 %v2017
    %3232 = vmatpush1.bf16.msra.mxu0 %v2016
    %3233 = vmatprep.subr.bf16.mxu0 %v2065
    %3234 = vmatpush1.bf16.msra.mxu0 %v2064
    %3235 = vmatprep.subr.bf16.mxu0 %v2113
    %3236 = vmatpush1.bf16.msra.mxu0 %v2112
    %3237 = vmatprep.subr.bf16.mxu0 %v2161
    %3238 = vmatpush1.bf16.msra.mxu0 %v2160
    %3239 = vmatprep.subr.bf16.mxu0 %v2209
    %3240 = vmatpush1.bf16.msra.mxu0 %v2208
    %3241 = vmatprep.subr.bf16.mxu0 0
    %3242 = vmatpush1.bf16.msra.mxu0 0
    %3243 = vmatprep.subr.bf16.mxu0 0
    %3244 = vmatpush1.bf16.msra.mxu0 0
    %3245 = vmatprep.subr.bf16.mxu0 0
    %3246 = vmatpush1.bf16.msra.mxu0 0
    %3247 = vmatprep.subr.bf16.mxu0 0
    %3248 = vmatpush1.bf16.msra.mxu0 0
    %3249 = vmatprep.subr.bf16.mxu0 0
    %3250 = vmatpush1.bf16.msra.mxu0 0
    %3251 = vmatprep.subr.bf16.mxu0 0
    %3252 = vmatpush1.bf16.msra.mxu0 0
    %3253 = vmatprep.subr.bf16.mxu0 0
    %3254 = vmatpush1.bf16.msra.mxu0 0
    %3255 = vmatprep.subr.bf16.mxu0 0
    %3256 = vmatpush1.bf16.msra.mxu0 0
    %3257 = vmatprep.mubr.bf16.mxu0 0
    %3258 = vmatmul.mubr.bf16.gmra.mrb[0].mxu0 %v53
    %v3259 = vpop.f32.mrb[0].mxu0
    %v3260 = vadd.f32 %v573, %v3259
    %v3261 = vpop.f32.mrb[0].mxu0
    %v3262 = vadd.f32 %v577, %v3261
    %v3263 = vpop.f32.mrb[0].mxu0
    %v3264 = vpop.f32.mrb[0].mxu0
    %3265 = vdwg.mxu0
    %3266 = vmatprep.subr.bf16.mxu0 %v1875
    %3267 = vmatpush1.bf16.msra.mxu0 %v1874
    %3268 = vmatprep.subr.bf16.mxu0 %v1923
    %3269 = vmatpush1.bf16.msra.mxu0 %v1922
    %3270 = vmatprep.subr.bf16.mxu0 %v1971
    %3271 = vmatpush1.bf16.msra.mxu0 %v1970
    %3272 = vmatprep.subr.bf16.mxu0 %v2019
    %3273 = vmatpush1.bf16.msra.mxu0 %v2018
    %3274 = vmatprep.subr.bf16.mxu0 %v2067
    %3275 = vmatpush1.bf16.msra.mxu0 %v2066
    %3276 = vmatprep.subr.bf16.mxu0 %v2115
    %3277 = vmatpush1.bf16.msra.mxu0 %v2114
    %3278 = vmatprep.subr.bf16.mxu0 %v2163
    %3279 = vmatpush1.bf16.msra.mxu0 %v2162
    %3280 = vmatprep.subr.bf16.mxu0 %v2211
    %3281 = vmatpush1.bf16.msra.mxu0 %v2210
    %3282 = vmatprep.subr.bf16.mxu0 0
    %3283 = vmatpush1.bf16.msra.mxu0 0
    %3284 = vmatprep.subr.bf16.mxu0 0
    %3285 = vmatpush1.bf16.msra.mxu0 0
    %3286 = vmatprep.subr.bf16.mxu0 0
    %3287 = vmatpush1.bf16.msra.mxu0 0
    %3288 = vmatprep.subr.bf16.mxu0 0
    %3289 = vmatpush1.bf16.msra.mxu0 0
    %3290 = vmatprep.subr.bf16.mxu0 0
    %3291 = vmatpush1.bf16.msra.mxu0 0
    %3292 = vmatprep.subr.bf16.mxu0 0
    %3293 = vmatpush1.bf16.msra.mxu0 0
    %3294 = vmatprep.subr.bf16.mxu0 0
    %3295 = vmatpush1.bf16.msra.mxu0 0
    %3296 = vmatprep.subr.bf16.mxu0 0
    %3297 = vmatpush1.bf16.msra.mxu0 0
    %3298 = vmatprep.mubr.bf16.mxu0 0
    %3299 = vmatmul.mubr.bf16.gmra.mrb[0].mxu0 %v53
    %v3300 = vpop.f32.mrb[0].mxu0
    %v3301 = vadd.f32 %v581, %v3300
    %v3302 = vpop.f32.mrb[0].mxu0
    %v3303 = vadd.f32 %v585, %v3302
    %v3304 = vpop.f32.mrb[0].mxu0
    %v3305 = vpop.f32.mrb[0].mxu0
    %3306 = vdwg.mxu0
    %3307 = vmatprep.subr.bf16.mxu0 %v1877
    %3308 = vmatpush1.bf16.msra.mxu0 %v1876
    %3309 = vmatprep.subr.bf16.mxu0 %v1925
    %3310 = vmatpush1.bf16.msra.mxu0 %v1924
    %3311 = vmatprep.subr.bf16.mxu0 %v1973
    %3312 = vmatpush1.bf16.msra.mxu0 %v1972
    %3313 = vmatprep.subr.bf16.mxu0 %v2021
    %3314 = vmatpush1.bf16.msra.mxu0 %v2020
    %3315 = vmatprep.subr.bf16.mxu0 %v2069
    %3316 = vmatpush1.bf16.msra.mxu0 %v2068
    %3317 = vmatprep.subr.bf16.mxu0 %v2117
    %3318 = vmatpush1.bf16.msra.mxu0 %v2116
    %3319 = vmatprep.subr.bf16.mxu0 %v2165
    %3320 = vmatpush1.bf16.msra.mxu0 %v2164
    %3321 = vmatprep.subr.bf16.mxu0 %v2213
    %3322 = vmatpush1.bf16.msra.mxu0 %v2212
    %3323 = vmatprep.subr.bf16.mxu0 0
    %3324 = vmatpush1.bf16.msra.mxu0 0
    %3325 = vmatprep.subr.bf16.mxu0 0
    %3326 = vmatpush1.bf16.msra.mxu0 0
    %3327 = vmatprep.subr.bf16.mxu0 0
    %3328 = vmatpush1.bf16.msra.mxu0 0
    %3329 = vmatprep.subr.bf16.mxu0 0
    %3330 = vmatpush1.bf16.msra.mxu0 0
    %3331 = vmatprep.subr.bf16.mxu0 0
    %3332 = vmatpush1.bf16.msra.mxu0 0
    %3333 = vmatprep.subr.bf16.mxu0 0
    %3334 = vmatpush1.bf16.msra.mxu0 0
    %3335 = vmatprep.subr.bf16.mxu0 0
    %3336 = vmatpush1.bf16.msra.mxu0 0
    %3337 = vmatprep.subr.bf16.mxu0 0
    %3338 = vmatpush1.bf16.msra.mxu0 0
    %3339 = vmatprep.mubr.bf16.mxu0 0
    %3340 = vmatmul.mubr.bf16.gmra.mrb[0].mxu0 %v53
    %v3341 = vpop.f32.mrb[0].mxu0
    %v3342 = vadd.f32 %v589, %v3341
    %v3343 = vpop.f32.mrb[0].mxu0
    %v3344 = vadd.f32 %v593, %v3343
    %v3345 = vpop.f32.mrb[0].mxu0
    %v3346 = vpop.f32.mrb[0].mxu0
    %3347 = vdwg.mxu0
    %3348 = vmatprep.subr.bf16.mxu0 %v1879
    %3349 = vmatpush1.bf16.msra.mxu0 %v1878
    %3350 = vmatprep.subr.bf16.mxu0 %v1927
    %3351 = vmatpush1.bf16.msra.mxu0 %v1926
    %3352 = vmatprep.subr.bf16.mxu0 %v1975
    %3353 = vmatpush1.bf16.msra.mxu0 %v1974
    %3354 = vmatprep.subr.bf16.mxu0 %v2023
    %3355 = vmatpush1.bf16.msra.mxu0 %v2022
    %3356 = vmatprep.subr.bf16.mxu0 %v2071
    %3357 = vmatpush1.bf16.msra.mxu0 %v2070
    %3358 = vmatprep.subr.bf16.mxu0 %v2119
    %3359 = vmatpush1.bf16.msra.mxu0 %v2118
    %3360 = vmatprep.subr.bf16.mxu0 %v2167
    %3361 = vmatpush1.bf16.msra.mxu0 %v2166
    %3362 = vmatprep.subr.bf16.mxu0 %v2215
    %3363 = vmatpush1.bf16.msra.mxu0 %v2214
    %3364 = vmatprep.subr.bf16.mxu0 0
    %3365 = vmatpush1.bf16.msra.mxu0 0
    %3366 = vmatprep.subr.bf16.mxu0 0
    %3367 = vmatpush1.bf16.msra.mxu0 0
    %3368 = vmatprep.subr.bf16.mxu0 0
    %3369 = vmatpush1.bf16.msra.mxu0 0
    %3370 = vmatprep.subr.bf16.mxu0 0
    %3371 = vmatpush1.bf16.msra.mxu0 0
    %3372 = vmatprep.subr.bf16.mxu0 0
    %3373 = vmatpush1.bf16.msra.mxu0 0
    %3374 = vmatprep.subr.bf16.mxu0 0
    %3375 = vmatpush1.bf16.msra.mxu0 0
    %3376 = vmatprep.subr.bf16.mxu0 0
    %3377 = vmatpush1.bf16.msra.mxu0 0
    %3378 = vmatprep.subr.bf16.mxu0 0
    %3379 = vmatpush1.bf16.msra.mxu0 0
    %3380 = vmatprep.mubr.bf16.mxu0 0
    %3381 = vmatmul.mubr.bf16.gmra.mrb[0].mxu0 %v53
    %v3382 = vpop.f32.mrb[0].mxu0
    %v3383 = vadd.f32 %v597, %v3382
    %v3384 = vpop.f32.mrb[0].mxu0
    %v3385 = vadd.f32 %v601, %v3384
    %v3386 = vpop.f32.mrb[0].mxu0
    %v3387 = vpop.f32.mrb[0].mxu0
    %3388 = vdwg.mxu0
    %3389 = vmatprep.subr.bf16.mxu0 %v1881
    %3390 = vmatpush1.bf16.msra.mxu0 %v1880
    %3391 = vmatprep.subr.bf16.mxu0 %v1929
    %3392 = vmatpush1.bf16.msra.mxu0 %v1928
    %3393 = vmatprep.subr.bf16.mxu0 %v1977
    %3394 = vmatpush1.bf16.msra.mxu0 %v1976
    %3395 = vmatprep.subr.bf16.mxu0 %v2025
    %3396 = vmatpush1.bf16.msra.mxu0 %v2024
    %3397 = vmatprep.subr.bf16.mxu0 %v2073
    %3398 = vmatpush1.bf16.msra.mxu0 %v2072
    %3399 = vmatprep.subr.bf16.mxu0 %v2121
    %3400 = vmatpush1.bf16.msra.mxu0 %v2120
    %3401 = vmatprep.subr.bf16.mxu0 %v2169
    %3402 = vmatpush1.bf16.msra.mxu0 %v2168
    %3403 = vmatprep.subr.bf16.mxu0 %v2217
    %3404 = vmatpush1.bf16.msra.mxu0 %v2216
    %3405 = vmatprep.subr.bf16.mxu0 0
    %3406 = vmatpush1.bf16.msra.mxu0 0
    %3407 = vmatprep.subr.bf16.mxu0 0
    %3408 = vmatpush1.bf16.msra.mxu0 0
    %3409 = vmatprep.subr.bf16.mxu0 0
    %3410 = vmatpush1.bf16.msra.mxu0 0
    %3411 = vmatprep.subr.bf16.mxu0 0
    %3412 = vmatpush1.bf16.msra.mxu0 0
    %3413 = vmatprep.subr.bf16.mxu0 0
    %3414 = vmatpush1.bf16.msra.mxu0 0
    %3415 = vmatprep.subr.bf16.mxu0 0
    %3416 = vmatpush1.bf16.msra.mxu0 0
    %3417 = vmatprep.subr.bf16.mxu0 0
    %3418 = vmatpush1.bf16.msra.mxu0 0
    %3419 = vmatprep.subr.bf16.mxu0 0
    %3420 = vmatpush1.bf16.msra.mxu0 0
    %3421 = vmatprep.mubr.bf16.mxu0 0
    %3422 = vmatmul.mubr.bf16.gmra.mrb[0].mxu0 %v53
    %v3423 = vpop.f32.mrb[0].mxu0
    %v3424 = vadd.f32 %v605, %v3423
    %v3425 = vpop.f32.mrb[0].mxu0
    %v3426 = vadd.f32 %v609, %v3425
    %v3427 = vpop.f32.mrb[0].mxu0
    %v3428 = vpop.f32.mrb[0].mxu0
    %3429 = vdwg.mxu0
    %3430 = vmatprep.subr.bf16.mxu0 %v1883
    %3431 = vmatpush1.bf16.msra.mxu0 %v1882
    %3432 = vmatprep.subr.bf16.mxu0 %v1931
    %3433 = vmatpush1.bf16.msra.mxu0 %v1930
    %3434 = vmatprep.subr.bf16.mxu0 %v1979
    %3435 = vmatpush1.bf16.msra.mxu0 %v1978
    %3436 = vmatprep.subr.bf16.mxu0 %v2027
    %3437 = vmatpush1.bf16.msra.mxu0 %v2026
    %3438 = vmatprep.subr.bf16.mxu0 %v2075
    %3439 = vmatpush1.bf16.msra.mxu0 %v2074
    %3440 = vmatprep.subr.bf16.mxu0 %v2123
    %3441 = vmatpush1.bf16.msra.mxu0 %v2122
    %3442 = vmatprep.subr.bf16.mxu0 %v2171
    %3443 = vmatpush1.bf16.msra.mxu0 %v2170
    %3444 = vmatprep.subr.bf16.mxu0 %v2219
    %3445 = vmatpush1.bf16.msra.mxu0 %v2218
    %3446 = vmatprep.subr.bf16.mxu0 0
    %3447 = vmatpush1.bf16.msra.mxu0 0
    %3448 = vmatprep.subr.bf16.mxu0 0
    %3449 = vmatpush1.bf16.msra.mxu0 0
    %3450 = vmatprep.subr.bf16.mxu0 0
    %3451 = vmatpush1.bf16.msra.mxu0 0
    %3452 = vmatprep.subr.bf16.mxu0 0
    %3453 = vmatpush1.bf16.msra.mxu0 0
    %3454 = vmatprep.subr.bf16.mxu0 0
    %3455 = vmatpush1.bf16.msra.mxu0 0
    %3456 = vmatprep.subr.bf16.mxu0 0
    %3457 = vmatpush1.bf16.msra.mxu0 0
    %3458 = vmatprep.subr.bf16.mxu0 0
    %3459 = vmatpush1.bf16.msra.mxu0 0
    %3460 = vmatprep.subr.bf16.mxu0 0
    %3461 = vmatpush1.bf16.msra.mxu0 0
    %3462 = vmatprep.mubr.bf16.mxu0 0
    %3463 = vmatmul.mubr.bf16.gmra.mrb[0].mxu0 %v53
    %v3464 = vpop.f32.mrb[0].mxu0
    %v3465 = vadd.f32 %v613, %v3464
    %v3466 = vpop.f32.mrb[0].mxu0
    %v3467 = vadd.f32 %v617, %v3466
    %v3468 = vpop.f32.mrb[0].mxu0
    %v3469 = vpop.f32.mrb[0].mxu0
    %3470 = vdwg.mxu0
    %3471 = vmatprep.subr.bf16.mxu0 %v1885
    %3472 = vmatpush1.bf16.msra.mxu0 %v1884
    %3473 = vmatprep.subr.bf16.mxu0 %v1933
    %3474 = vmatpush1.bf16.msra.mxu0 %v1932
    %3475 = vmatprep.subr.bf16.mxu0 %v1981
    %3476 = vmatpush1.bf16.msra.mxu0 %v1980
    %3477 = vmatprep.subr.bf16.mxu0 %v2029
    %3478 = vmatpush1.bf16.msra.mxu0 %v2028
    %3479 = vmatprep.subr.bf16.mxu0 %v2077
    %3480 = vmatpush1.bf16.msra.mxu0 %v2076
    %3481 = vmatprep.subr.bf16.mxu0 %v2125
    %3482 = vmatpush1.bf16.msra.mxu0 %v2124
    %3483 = vmatprep.subr.bf16.mxu0 %v2173
    %3484 = vmatpush1.bf16.msra.mxu0 %v2172
    %3485 = vmatprep.subr.bf16.mxu0 %v2221
    %3486 = vmatpush1.bf16.msra.mxu0 %v2220
    %3487 = vmatprep.subr.bf16.mxu0 0
    %3488 = vmatpush1.bf16.msra.mxu0 0
    %3489 = vmatprep.subr.bf16.mxu0 0
    %3490 = vmatpush1.bf16.msra.mxu0 0
    %3491 = vmatprep.subr.bf16.mxu0 0
    %3492 = vmatpush1.bf16.msra.mxu0 0
    %3493 = vmatprep.subr.bf16.mxu0 0
    %3494 = vmatpush1.bf16.msra.mxu0 0
    %3495 = vmatprep.subr.bf16.mxu0 0
    %3496 = vmatpush1.bf16.msra.mxu0 0
    %3497 = vmatprep.subr.bf16.mxu0 0
    %3498 = vmatpush1.bf16.msra.mxu0 0
    %3499 = vmatprep.subr.bf16.mxu0 0
    %3500 = vmatpush1.bf16.msra.mxu0 0
    %3501 = vmatprep.subr.bf16.mxu0 0
    %3502 = vmatpush1.bf16.msra.mxu0 0
    %3503 = vmatprep.mubr.bf16.mxu0 0
    %3504 = vmatmul.mubr.bf16.gmra.mrb[0].mxu0 %v53
    %v3505 = vpop.f32.mrb[0].mxu0
    %v3506 = vadd.f32 %v621, %v3505
    %v3507 = vpop.f32.mrb[0].mxu0
    %v3508 = vadd.f32 %v625, %v3507
    %v3509 = vpop.f32.mrb[0].mxu0
    %v3510 = vpop.f32.mrb[0].mxu0
    %3511 = vdwg.mxu0
    %3512 = vmatprep.subr.bf16.mxu0 %v1887
    %3513 = vmatpush1.bf16.msra.mxu0 %v1886
    %3514 = vmatprep.subr.bf16.mxu0 %v1935
    %3515 = vmatpush1.bf16.msra.mxu0 %v1934
    %3516 = vmatprep.subr.bf16.mxu0 %v1983
    %3517 = vmatpush1.bf16.msra.mxu0 %v1982
    %3518 = vmatprep.subr.bf16.mxu0 %v2031
    %3519 = vmatpush1.bf16.msra.mxu0 %v2030
    %3520 = vmatprep.subr.bf16.mxu0 %v2079
    %3521 = vmatpush1.bf16.msra.mxu0 %v2078
    %3522 = vmatprep.subr.bf16.mxu0 %v2127
    %3523 = vmatpush1.bf16.msra.mxu0 %v2126
    %3524 = vmatprep.subr.bf16.mxu0 %v2175
    %3525 = vmatpush1.bf16.msra.mxu0 %v2174
    %3526 = vmatprep.subr.bf16.mxu0 %v2223
    %3527 = vmatpush1.bf16.msra.mxu0 %v2222
    %3528 = vmatprep.subr.bf16.mxu0 0
    %3529 = vmatpush1.bf16.msra.mxu0 0
    %3530 = vmatprep.subr.bf16.mxu0 0
    %3531 = vmatpush1.bf16.msra.mxu0 0
    %3532 = vmatprep.subr.bf16.mxu0 0
    %3533 = vmatpush1.bf16.msra.mxu0 0
    %3534 = vmatprep.subr.bf16.mxu0 0
    %3535 = vmatpush1.bf16.msra.mxu0 0
    %3536 = vmatprep.subr.bf16.mxu0 0
    %3537 = vmatpush1.bf16.msra.mxu0 0
    %3538 = vmatprep.subr.bf16.mxu0 0
    %3539 = vmatpush1.bf16.msra.mxu0 0
    %3540 = vmatprep.subr.bf16.mxu0 0
    %3541 = vmatpush1.bf16.msra.mxu0 0
    %3542 = vmatprep.subr.bf16.mxu0 0
    %3543 = vmatpush1.bf16.msra.mxu0 0
    %3544 = vmatprep.mubr.bf16.mxu0 0
    %3545 = vmatmul.mubr.bf16.gmra.mrb[0].mxu0 %v53
    %v3546 = vpop.f32.mrb[0].mxu0
    %v3547 = vadd.f32 %v629, %v3546
    %v3548 = vpop.f32.mrb[0].mxu0
    %v3549 = vadd.f32 %v633, %v3548
    %v3550 = vpop.f32.mrb[0].mxu0
    %v3551 = vpop.f32.mrb[0].mxu0
    %3552 = vdwg.mxu0
    %3553 = vmatprep.subr.bf16.mxu0 %v1889
    %3554 = vmatpush1.bf16.msra.mxu0 %v1888
    %3555 = vmatprep.subr.bf16.mxu0 %v1937
    %3556 = vmatpush1.bf16.msra.mxu0 %v1936
    %3557 = vmatprep.subr.bf16.mxu0 %v1985
    %3558 = vmatpush1.bf16.msra.mxu0 %v1984
    %3559 = vmatprep.subr.bf16.mxu0 %v2033
    %3560 = vmatpush1.bf16.msra.mxu0 %v2032
    %3561 = vmatprep.subr.bf16.mxu0 %v2081
    %3562 = vmatpush1.bf16.msra.mxu0 %v2080
    %3563 = vmatprep.subr.bf16.mxu0 %v2129
    %3564 = vmatpush1.bf16.msra.mxu0 %v2128
    %3565 = vmatprep.subr.bf16.mxu0 %v2177
    %3566 = vmatpush1.bf16.msra.mxu0 %v2176
    %3567 = vmatprep.subr.bf16.mxu0 %v2225
    %3568 = vmatpush1.bf16.msra.mxu0 %v2224
    %3569 = vmatprep.subr.bf16.mxu0 0
    %3570 = vmatpush1.bf16.msra.mxu0 0
    %3571 = vmatprep.subr.bf16.mxu0 0
    %3572 = vmatpush1.bf16.msra.mxu0 0
    %3573 = vmatprep.subr.bf16.mxu0 0
    %3574 = vmatpush1.bf16.msra.mxu0 0
    %3575 = vmatprep.subr.bf16.mxu0 0
    %3576 = vmatpush1.bf16.msra.mxu0 0
    %3577 = vmatprep.subr.bf16.mxu0 0
    %3578 = vmatpush1.bf16.msra.mxu0 0
    %3579 = vmatprep.subr.bf16.mxu0 0
    %3580 = vmatpush1.bf16.msra.mxu0 0
    %3581 = vmatprep.subr.bf16.mxu0 0
    %3582 = vmatpush1.bf16.msra.mxu0 0
    %3583 = vmatprep.subr.bf16.mxu0 0
    %3584 = vmatpush1.bf16.msra.mxu0 0
    %3585 = vmatprep.mubr.bf16.mxu0 0
    %3586 = vmatmul.mubr.bf16.gmra.mrb[0].mxu0 %v53
    %v3587 = vpop.f32.mrb[0].mxu0
    %v3588 = vadd.f32 %v637, %v3587
    %v3589 = vpop.f32.mrb[0].mxu0
    %v3590 = vadd.f32 %v641, %v3589
    %v3591 = vpop.f32.mrb[0].mxu0
    %v3592 = vpop.f32.mrb[0].mxu0
    %3593 = vdwg.mxu0
    %v3594 = vmul.f32 %v2645, 0.5
    %v3595 = vmul.f32 %v2647, 0.5
    %v3596 = vmul.f32 %v2686, 0.5
    %v3597 = vmul.f32 %v2688, 0.5
    %v3598 = vmul.f32 %v2727, 0.5
    %v3599 = vmul.f32 %v2729, 0.5
    %v3600 = vmul.f32 %v2768, 0.5
    %v3601 = vmul.f32 %v2770, 0.5
    %v3602 = vmul.f32 %v2809, 0.5
    %v3603 = vmul.f32 %v2811, 0.5
    %v3604 = vmul.f32 %v2850, 0.5
    %v3605 = vmul.f32 %v2852, 0.5
    %v3606 = vmul.f32 %v2891, 0.5
    %v3607 = vmul.f32 %v2893, 0.5
    %v3608 = vmul.f32 %v2932, 0.5
    %v3609 = vmul.f32 %v2934, 0.5
    %v3610 = vmul.f32 %v2973, 0.5
    %v3611 = vmul.f32 %v2975, 0.5
    %v3612 = vmul.f32 %v3014, 0.5
    %v3613 = vmul.f32 %v3016, 0.5
    %v3614 = vmul.f32 %v3055, 0.5
    %v3615 = vmul.f32 %v3057, 0.5
    %v3616 = vmul.f32 %v3096, 0.5
    %v3617 = vmul.f32 %v3098, 0.5
    %v3618 = vmul.f32 %v3137, 0.5
    %v3619 = vmul.f32 %v3139, 0.5
    %v3620 = vmul.f32 %v3178, 0.5
    %v3621 = vmul.f32 %v3180, 0.5
    %v3622 = vmul.f32 %v3219, 0.5
    %v3623 = vmul.f32 %v3221, 0.5
    %v3624 = vmul.f32 %v3260, 0.5
    %v3625 = vmul.f32 %v3262, 0.5
    %v3626 = vmul.f32 %v3301, 0.5
    %v3627 = vmul.f32 %v3303, 0.5
    %v3628 = vmul.f32 %v3342, 0.5
    %v3629 = vmul.f32 %v3344, 0.5
    %v3630 = vmul.f32 %v3383, 0.5
    %v3631 = vmul.f32 %v3385, 0.5
    %v3632 = vmul.f32 %v3424, 0.5
    %v3633 = vmul.f32 %v3426, 0.5
    %v3634 = vmul.f32 %v3465, 0.5
    %v3635 = vmul.f32 %v3467, 0.5
    %v3636 = vmul.f32 %v3506, 0.5
    %v3637 = vmul.f32 %v3508, 0.5
    %v3638 = vmul.f32 %v3547, 0.5
    %v3639 = vmul.f32 %v3549, 0.5
    %v3640 = vmul.f32 %v3588, 0.5
    %v3641 = vmul.f32 %v3590, 0.5
    %v3642 = vmul.f32 %v2645, 0.70710677
    %v3643 = vmul.f32 %v2647, 0.70710677
    %v3644 = vmul.f32 %v2686, 0.70710677
    %v3645 = vmul.f32 %v2688, 0.70710677
    %v3646 = vmul.f32 %v2727, 0.70710677
    %v3647 = vmul.f32 %v2729, 0.70710677
    %v3648 = vmul.f32 %v2768, 0.70710677
    %v3649 = vmul.f32 %v2770, 0.70710677
    %v3650 = vmul.f32 %v2809, 0.70710677
    %v3651 = vmul.f32 %v2811, 0.70710677
    %v3652 = vmul.f32 %v2850, 0.70710677
    %v3653 = vmul.f32 %v2852, 0.70710677
    %v3654 = vmul.f32 %v2891, 0.70710677
    %v3655 = vmul.f32 %v2893, 0.70710677
    %v3656 = vmul.f32 %v2932, 0.70710677
    %v3657 = vmul.f32 %v2934, 0.70710677
    %v3658 = vmul.f32 %v2973, 0.70710677
    %v3659 = vmul.f32 %v2975, 0.70710677
    %v3660 = vmul.f32 %v3014, 0.70710677
    %v3661 = vmul.f32 %v3016, 0.70710677
    %v3662 = vmul.f32 %v3055, 0.70710677
    %v3663 = vmul.f32 %v3057, 0.70710677
    %v3664 = vmul.f32 %v3096, 0.70710677
    %v3665 = vmul.f32 %v3098, 0.70710677
    %v3666 = vmul.f32 %v3137, 0.70710677
    %v3667 = vmul.f32 %v3139, 0.70710677
    %v3668 = vmul.f32 %v3178, 0.70710677
    %v3669 = vmul.f32 %v3180, 0.70710677
    %v3670 = vmul.f32 %v3219, 0.70710677
    %v3671 = vmul.f32 %v3221, 0.70710677
    %v3672 = vmul.f32 %v3260, 0.70710677
    %v3673 = vmul.f32 %v3262, 0.70710677
    %v3674 = vmul.f32 %v3301, 0.70710677
    %v3675 = vmul.f32 %v3303, 0.70710677
    %v3676 = vmul.f32 %v3342, 0.70710677
    %v3677 = vmul.f32 %v3344, 0.70710677
    %v3678 = vmul.f32 %v3383, 0.70710677
    %v3679 = vmul.f32 %v3385, 0.70710677
    %v3680 = vmul.f32 %v3424, 0.70710677
    %v3681 = vmul.f32 %v3426, 0.70710677
    %v3682 = vmul.f32 %v3465, 0.70710677
    %v3683 = vmul.f32 %v3467, 0.70710677
    %v3684 = vmul.f32 %v3506, 0.70710677
    %v3685 = vmul.f32 %v3508, 0.70710677
    %v3686 = vmul.f32 %v3547, 0.70710677
    %v3687 = vmul.f32 %v3549, 0.70710677
    %v3688 = vmul.f32 %v3588, 0.70710677
    %v3689 = vmul.f32 %v3590, 0.70710677
    %v3690 = verf.f32.pop %v3642
    %v3691 = verf.f32.pop %v3643
    %v3692 = verf.f32.pop %v3644
    %v3693 = verf.f32.pop %v3645
    %v3694 = verf.f32.pop %v3646
    %v3695 = verf.f32.pop %v3647
    %v3696 = verf.f32.pop %v3648
    %v3697 = verf.f32.pop %v3649
    %v3698 = verf.f32.pop %v3650
    %v3699 = verf.f32.pop %v3651
    %v3700 = verf.f32.pop %v3652
    %v3701 = verf.f32.pop %v3653
    %v3702 = verf.f32.pop %v3654
    %v3703 = verf.f32.pop %v3655
    %v3704 = verf.f32.pop %v3656
    %v3705 = verf.f32.pop %v3657
    %v3706 = verf.f32.pop %v3658
    %v3707 = verf.f32.pop %v3659
    %v3708 = verf.f32.pop %v3660
    %v3709 = verf.f32.pop %v3661
    %v3710 = verf.f32.pop %v3662
    %v3711 = verf.f32.pop %v3663
    %v3712 = verf.f32.pop %v3664
    %v3713 = verf.f32.pop %v3665
    %v3714 = verf.f32.pop %v3666
    %v3715 = verf.f32.pop %v3667
    %v3716 = verf.f32.pop %v3668
    %v3717 = verf.f32.pop %v3669
    %v3718 = verf.f32.pop %v3670
    %v3719 = verf.f32.pop %v3671
    %v3720 = verf.f32.pop %v3672
    %v3721 = verf.f32.pop %v3673
    %v3722 = verf.f32.pop %v3674
    %v3723 = verf.f32.pop %v3675
    %v3724 = verf.f32.pop %v3676
    %v3725 = verf.f32.pop %v3677
    %v3726 = verf.f32.pop %v3678
    %v3727 = verf.f32.pop %v3679
    %v3728 = verf.f32.pop %v3680
    %v3729 = verf.f32.pop %v3681
    %v3730 = verf.f32.pop %v3682
    %v3731 = verf.f32.pop %v3683
    %v3732 = verf.f32.pop %v3684
    %v3733 = verf.f32.pop %v3685
    %v3734 = verf.f32.pop %v3686
    %v3735 = verf.f32.pop %v3687
    %v3736 = verf.f32.pop %v3688
    %v3737 = verf.f32.pop %v3689
    %v3738 = vadd.f32 %v3690, 1.0
    %v3739 = vadd.f32 %v3691, 1.0
    %v3740 = vadd.f32 %v3692, 1.0
    %v3741 = vadd.f32 %v3693, 1.0
    %v3742 = vadd.f32 %v3694, 1.0
    %v3743 = vadd.f32 %v3695, 1.0
    %v3744 = vadd.f32 %v3696, 1.0
    %v3745 = vadd.f32 %v3697, 1.0
    %v3746 = vadd.f32 %v3698, 1.0
    %v3747 = vadd.f32 %v3699, 1.0
    %v3748 = vadd.f32 %v3700, 1.0
    %v3749 = vadd.f32 %v3701, 1.0
    %v3750 = vadd.f32 %v3702, 1.0
    %v3751 = vadd.f32 %v3703, 1.0
    %v3752 = vadd.f32 %v3704, 1.0
    %v3753 = vadd.f32 %v3705, 1.0
    %v3754 = vadd.f32 %v3706, 1.0
    %v3755 = vadd.f32 %v3707, 1.0
    %v3756 = vadd.f32 %v3708, 1.0
    %v3757 = vadd.f32 %v3709, 1.0
    %v3758 = vadd.f32 %v3710, 1.0
    %v3759 = vadd.f32 %v3711, 1.0
    %v3760 = vadd.f32 %v3712, 1.0
    %v3761 = vadd.f32 %v3713, 1.0
    %v3762 = vadd.f32 %v3714, 1.0
    %v3763 = vadd.f32 %v3715, 1.0
    %v3764 = vadd.f32 %v3716, 1.0
    %v3765 = vadd.f32 %v3717, 1.0
    %v3766 = vadd.f32 %v3718, 1.0
    %v3767 = vadd.f32 %v3719, 1.0
    %v3768 = vadd.f32 %v3720, 1.0
    %v3769 = vadd.f32 %v3721, 1.0
    %v3770 = vadd.f32 %v3722, 1.0
    %v3771 = vadd.f32 %v3723, 1.0
    %v3772 = vadd.f32 %v3724, 1.0
    %v3773 = vadd.f32 %v3725, 1.0
    %v3774 = vadd.f32 %v3726, 1.0
    %v3775 = vadd.f32 %v3727, 1.0
    %v3776 = vadd.f32 %v3728, 1.0
    %v3777 = vadd.f32 %v3729, 1.0
    %v3778 = vadd.f32 %v3730, 1.0
    %v3779 = vadd.f32 %v3731, 1.0
    %v3780 = vadd.f32 %v3732, 1.0
    %v3781 = vadd.f32 %v3733, 1.0
    %v3782 = vadd.f32 %v3734, 1.0
    %v3783 = vadd.f32 %v3735, 1.0
    %v3784 = vadd.f32 %v3736, 1.0
    %v3785 = vadd.f32 %v3737, 1.0
    %v3786 = vmul.f32 %v3594, %v3738
    %v3787 = vmul.f32 %v3595, %v3739
    %v3788 = vmul.f32 %v3596, %v3740
    %v3789 = vmul.f32 %v3597, %v3741
    %v3790 = vmul.f32 %v3598, %v3742
    %v3791 = vmul.f32 %v3599, %v3743
    %v3792 = vmul.f32 %v3600, %v3744
    %v3793 = vmul.f32 %v3601, %v3745
    %v3794 = vmul.f32 %v3602, %v3746
    %v3795 = vmul.f32 %v3603, %v3747
    %v3796 = vmul.f32 %v3604, %v3748
    %v3797 = vmul.f32 %v3605, %v3749
    %v3798 = vmul.f32 %v3606, %v3750
    %v3799 = vmul.f32 %v3607, %v3751
    %v3800 = vmul.f32 %v3608, %v3752
    %v3801 = vmul.f32 %v3609, %v3753
    %v3802 = vmul.f32 %v3610, %v3754
    %v3803 = vmul.f32 %v3611, %v3755
    %v3804 = vmul.f32 %v3612, %v3756
    %v3805 = vmul.f32 %v3613, %v3757
    %v3806 = vmul.f32 %v3614, %v3758
    %v3807 = vmul.f32 %v3615, %v3759
    %v3808 = vmul.f32 %v3616, %v3760
    %v3809 = vmul.f32 %v3617, %v3761
    %v3810 = vmul.f32 %v3618, %v3762
    %v3811 = vmul.f32 %v3619, %v3763
    %v3812 = vmul.f32 %v3620, %v3764
    %v3813 = vmul.f32 %v3621, %v3765
    %v3814 = vmul.f32 %v3622, %v3766
    %v3815 = vmul.f32 %v3623, %v3767
    %v3816 = vmul.f32 %v3624, %v3768
    %v3817 = vmul.f32 %v3625, %v3769
    %v3818 = vmul.f32 %v3626, %v3770
    %v3819 = vmul.f32 %v3627, %v3771
    %v3820 = vmul.f32 %v3628, %v3772
    %v3821 = vmul.f32 %v3629, %v3773
    %v3822 = vmul.f32 %v3630, %v3774
    %v3823 = vmul.f32 %v3631, %v3775
    %v3824 = vmul.f32 %v3632, %v3776
    %v3825 = vmul.f32 %v3633, %v3777
    %v3826 = vmul.f32 %v3634, %v3778
    %v3827 = vmul.f32 %v3635, %v3779
    %v3828 = vmul.f32 %v3636, %v3780
    %v3829 = vmul.f32 %v3637, %v3781
    %v3830 = vmul.f32 %v3638, %v3782
    %v3831 = vmul.f32 %v3639, %v3783
    %v3832 = vmul.f32 %v3640, %v3784
    %v3833 = vmul.f32 %v3641, %v3785
    %3834 = vst [vmem:[#allocation8] sm:$0xff] %v3786
    %3835 = vst [vmem:[#allocation8 + $0x8] sm:$0xff] %v3787
    %3836 = vst [vmem:[#allocation8 + $0x10] sm:$0xff] %v3788
    %3837 = vst [vmem:[#allocation8 + $0x18] sm:$0xff] %v3789
    %3838 = vst [vmem:[#allocation8 + $0x20] sm:$0xff] %v3790
    %3839 = vst [vmem:[#allocation8 + $0x28] sm:$0xff] %v3791
    %3840 = vst [vmem:[#allocation8 + $0x30] sm:$0xff] %v3792
    %3841 = vst [vmem:[#allocation8 + $0x38] sm:$0xff] %v3793
    %3842 = vst [vmem:[#allocation8 + $0x40] sm:$0xff] %v3794
    %3843 = vst [vmem:[#allocation8 + $0x48] sm:$0xff] %v3795
    %3844 = vst [vmem:[#allocation8 + $0x50] sm:$0xff] %v3796
    %3845 = vst [vmem:[#allocation8 + $0x58] sm:$0xff] %v3797
    %3846 = vst [vmem:[#allocation8 + $0x60] sm:$0xff] %v3798
    %3847 = vst [vmem:[#allocation8 + $0x68] sm:$0xff] %v3799
    %3848 = vst [vmem:[#allocation8 + $0x70] sm:$0xff] %v3800
    %3849 = vst [vmem:[#allocation8 + $0x78] sm:$0xff] %v3801
    %3850 = vst [vmem:[#allocation8 + $0x80] sm:$0xff] %v3802
    %3851 = vst [vmem:[#allocation8 + $0x88] sm:$0xff] %v3803
    %3852 = vst [vmem:[#allocation8 + $0x90] sm:$0xff] %v3804
    %3853 = vst [vmem:[#allocation8 + $0x98] sm:$0xff] %v3805
    %3854 = vst [vmem:[#allocation8 + $0xa0] sm:$0xff] %v3806
    %3855 = vst [vmem:[#allocation8 + $0xa8] sm:$0xff] %v3807
    %3856 = vst [vmem:[#allocation8 + $0xb0] sm:$0xff] %v3808
    %3857 = vst [vmem:[#allocation8 + $0xb8] sm:$0xff] %v3809
    %3858 = vst [vmem:[#allocation8 + $0xc0] sm:$0xff] %v3810
    %3859 = vst [vmem:[#allocation8 + $0xc8] sm:$0xff] %v3811
    %3860 = vst [vmem:[#allocation8 + $0xd0] sm:$0xff] %v3812
    %3861 = vst [vmem:[#allocation8 + $0xd8] sm:$0xff] %v3813
    %3862 = vst [vmem:[#allocation8 + $0xe0] sm:$0xff] %v3814
    %3863 = vst [vmem:[#allocation8 + $0xe8] sm:$0xff] %v3815
    %3864 = vst [vmem:[#allocation8 + $0xf0] sm:$0xff] %v3816
    %3865 = vst [vmem:[#allocation8 + $0xf8] sm:$0xff] %v3817
    %3866 = vst [vmem:[#allocation8 + $0x100] sm:$0xff] %v3818
    %3867 = vst [vmem:[#allocation8 + $0x108] sm:$0xff] %v3819
    %3868 = vst [vmem:[#allocation8 + $0x110] sm:$0xff] %v3820
    %3869 = vst [vmem:[#allocation8 + $0x118] sm:$0xff] %v3821
    %3870 = vst [vmem:[#allocation8 + $0x120] sm:$0xff] %v3822
    %3871 = vst [vmem:[#allocation8 + $0x128] sm:$0xff] %v3823
    %3872 = vst [vmem:[#allocation8 + $0x130] sm:$0xff] %v3824
    %3873 = vst [vmem:[#allocation8 + $0x138] sm:$0xff] %v3825
    %3874 = vst [vmem:[#allocation8 + $0x140] sm:$0xff] %v3826
    %3875 = vst [vmem:[#allocation8 + $0x148] sm:$0xff] %v3827
    %3876 = vst [vmem:[#allocation8 + $0x150] sm:$0xff] %v3828
    %3877 = vst [vmem:[#allocation8 + $0x158] sm:$0xff] %v3829
    %3878 = vst [vmem:[#allocation8 + $0x160] sm:$0xff] %v3830
    %3879 = vst [vmem:[#allocation8 + $0x168] sm:$0xff] %v3831
    %3880 = vst [vmem:[#allocation8 + $0x170] sm:$0xff] %v3832
    %3881 = vst [vmem:[#allocation8 + $0x178] sm:$0xff] %v3833
    // Predicated region
    $region26: #{tpu_custom_call.1} parent=1 // pred_check
      _
    $region27: #{tpu_custom_call.1} parent=1 // pred_check_branch
      %3883 = sbr.rel (0) target = $region29
    $region28: #{tpu_custom_call.1} parent=1 // pred_region
      %s3885 = ssub.s32 6144, 6144
      %3886 = vsyncadd [#allocation4], %s3885
      %s3888 = sshll.u32 [#allocation8], 4
      %s3889 = int_to_ptr.vmem [resolvable:$true] %s3888
      %3891 = dma.vmem_to_hbm [thread:$0]  %s3889, 6144, %s3, [#allocation4]
    $region29: #{tpu_custom_call.1} parent=1 // pred_fallthru
      _
    // Predicated region
    $region30: #{tpu_custom_call.1} parent=1 // pred_check
      _
    $region31: #{tpu_custom_call.1} parent=1 // pred_check_branch
      %3893 = sbr.rel (0) target = $region33
    $region32: #{tpu_custom_call.1} parent=1 // pred_region
      %3894 = dma.done [#allocation4], 6144
    $region33: #{tpu_custom_call.1} parent=1 // pred_fallthru
      _
    %3895 = vsyncpa [#allocation3], 1
    %3896 = vsyncpa [#allocation6], 1
    %3897 = vsyncpa [#allocation4], 1

</llo_original>
